<compile_context>
chip_gen: v6e
topology: v6e:2x2x1
jax: 0.10.0
libtpu: 0.0.40
codegen_flags: <defaults>
</compile_context>

<pallas_src>
import functools

import jax
import jax.numpy as jnp
from jax import lax
from jax.experimental import pallas as pl
from jax.experimental.pallas import tpu as pltpu

# ---------------------------------------------------------------------------
# Token columns of the packed text input (as in the original codebase)
# ---------------------------------------------------------------------------
TXT_WORD, TXT_LEMMA, TXT_POS, TXT_NER = 0, 1, 2, 3

# ---------------------------------------------------------------------------
# Hyper-parameters (small, consistent with RootSentenceEncoder.__init__)
# ---------------------------------------------------------------------------
WORD_VOCAB, WORD_DIM = 50, 16     # embs['word_fix_lut']
LEMMA_VOCAB, LEMMA_DIM = 40, 8    # embs['lemma_lut']
POS_VOCAB, POS_DIM = 12, 4        # embs['pos_lut']
NER_VOCAB, NER_DIM = 8, 4         # embs['ner_lut']
INPUT_SIZE = WORD_DIM + LEMMA_DIM + POS_DIM + NER_DIM   # 32

BRNN = True                        # opt.brnn
NUM_DIR = 2 if BRNN else 1
REL_RNN_SIZE = 32                  # opt.rel_rnn_size (output feature size)
HIDDEN = REL_RNN_SIZE // NUM_DIR   # 16 per direction
LAYERS = 2                         # opt.root_enlayers

EMB_ROWS = 128                     # fused block-diagonal table rows (one lane tile)
VOCAB_OFFSETS = (0, WORD_VOCAB, WORD_VOCAB + LEMMA_VOCAB,
                 WORD_VOCAB + LEMMA_VOCAB + POS_VOCAB)

# Load-bearing for the fused/stacked weight layout: layer>0 input size
# (NUM_DIR*HIDDEN) must equal the layer-0 input size (INPUT_SIZE).
assert INPUT_SIZE == NUM_DIR * HIDDEN
assert HIDDEN & (HIDDEN - 1) == 0                      # power of two (bit-trick lane masks)
assert WORD_VOCAB + LEMMA_VOCAB + POS_VOCAB + NER_VOCAB <= EMB_ROWS


# ---------------------------------------------------------------------------
# Fused Pallas kernel: embeddings + multi-layer bidirectional LSTM, whole batch.
# ---------------------------------------------------------------------------
def _root_sent_enc_kernel(tok_ref, len_ref, emb_ref, wx_ref, wh_ref, b_ref,
                          out_ref, xbuf_ref, *, B, T):
    H = HIDDEN
    H2 = NUM_DIR * HIDDEN            # 32  (fused state width: [fwd | bwd])
    G = 4 * H2                       # 128 (fused gate lanes)
    TB = T * B

    ids = tok_ref[...]               # (T*B, 4) int32, vocab offsets already added

    # ---- fused embedding lookup: ONE one-hot (T*B,128) @ (128,32) matmul ----
    iota_v = lax.broadcasted_iota(jnp.int32, (TB, EMB_ROWS), 1)
    onehot = ((ids[:, 0:1] == iota_v).astype(jnp.float32) +
              (ids[:, 1:2] == iota_v).astype(jnp.float32) +
              (ids[:, 2:3] == iota_v).astype(jnp.float32) +
              (ids[:, 3:4] == iota_v).astype(jnp.float32))
    x = jnp.dot(onehot, emb_ref[...], preferred_element_type=jnp.float32)   # (T*B, 32)

    lens = len_ref[...]                                                # (B, 1) int32

    # constant lane masks (compile-time folded)
    gate_lane = lax.broadcasted_iota(jnp.int32, (B, G), 1)
    is_bwd_gate = (gate_lane & H) != 0          # 16-lane blocks alternate fwd/bwd (H pow2)
    is_fwd_state = lax.broadcasted_iota(jnp.int32, (B, H2), 1) < H     # (B, 32)

    for layer in range(LAYERS):
        last = layer == LAYERS - 1
        # input projection + bias for ALL timesteps and BOTH directions at once
        xp = jnp.dot(x, wx_ref[layer], preferred_element_type=jnp.float32) + b_ref[layer]
        wh = wh_ref[layer]                                             # (32, 128) block-diag
        h = jnp.zeros((B, H2), jnp.float32)
        c = jnp.zeros((B, H2), jnp.float32)
        for s in range(T):
            sb = T - 1 - s                        # timestep handled by the bwd direction
            # fwd gate columns take xp[time s], bwd gate columns take xp[time sb]
            xp_s = jnp.where(is_bwd_gate,
                             xp[sb * B:(sb + 1) * B, :],
                             xp[s * B:(s + 1) * B, :])
            g = xp_s + jnp.dot(h, wh, preferred_element_type=jnp.float32)   # (B, 128)
            # host-permuted gate layout: [i_f i_b f_f f_b o_f o_b | g_f g_b]
            sig = jax.nn.sigmoid(g[:, :3 * H2])                        # i,f,o (both dirs)
            gg = jnp.tanh(g[:, 3 * H2:])                               # cell gate (both dirs)
            c_new = sig[:, H2:2 * H2] * c + sig[:, :H2] * gg
            h_new = sig[:, 2 * H2:3 * H2] * jnp.tanh(c_new)
            # freeze state outside each sentence (PackedSequence semantics)
            m = jnp.where(is_fwd_state,
                          (lens > s).astype(jnp.float32),
                          (lens > sb).astype(jnp.float32))             # (B, 32) in {0,1}
            c = m * c_new + (1.0 - m) * c
            h = m * h_new + (1.0 - m) * h
            # direct stores: fwd half -> output time s, bwd half -> output time sb
            if last:
                out_ref[:, s * H2:s * H2 + H] = h[:, :H]
                out_ref[:, sb * H2 + H:(sb + 1) * H2] = h[:, H:]
            else:
                xbuf_ref[s * B:(s + 1) * B, :H] = h[:, :H]
                xbuf_ref[sb * B:(sb + 1) * B, H:] = h[:, H:]
        if not last:
            x = xbuf_ref[...]                 # (T*B, 2H) time-major input for next layer
            # TODO(synk): inter-layer nn.Dropout / data_dropout are training-only
            # (identity in eval mode).

    # packed-sequence padding: zero all lanes past each sentence length in ONE pass
    out_lane = lax.broadcasted_iota(jnp.int32, (B, T * H2), 1)
    out_ref[...] = jnp.where(out_lane < lens * H2, out_ref[...], 0.0)


# ---------------------------------------------------------------------------
# Host-side weight packing into the fused kernel layout (free at run time)
# ---------------------------------------------------------------------------
def pack_params(params):
    """Standard layout (gate order i,f,g,o per direction) -> fused kernel layout."""
    H = HIDDEN

    # block-diagonal fused embedding table (EMB_ROWS, INPUT_SIZE)
    tab = jnp.zeros((EMB_ROWS, INPUT_SIZE), jnp.float32)
    row = col = 0
    for t in (params["word_lut"], params["lemma_lut"],
              params["pos_lut"], params["ner_lut"]):
        v, d = t.shape
        tab = tab.at[row:row + v, col:col + d].set(t)
        row += v
        col += d

    gsl = lambda w, gate: w[..., gate * H:(gate + 1) * H]    # gate slice (order i,f,g,o)
    zero = jnp.zeros((H, H), jnp.float32)
    gate_order = (0, 1, 3, 2)                                # -> fused order i, f, o, g
    wxs, whs, bs = [], [], []
    for l in range(LAYERS):
        wxf, wxb = params["wx"][NUM_DIR * l], params["wx"][NUM_DIR * l + 1]
        whf_, whb_ = params["wh"][NUM_DIR * l], params["wh"][NUM_DIR * l + 1]
        bf_, bb_ = params["b"][NUM_DIR * l], params["b"][NUM_DIR * l + 1]
        # fused gate column blocks: [i_f i_b f_f f_b o_f o_b g_f g_b]
        wxs.append(jnp.concatenate(
            [gsl(w, g) for g in gate_order for w in (wxf, wxb)], axis=-1))   # (IN, 8H)
        bs.append(jnp.concatenate(
            [gsl(b_, g) for g in gate_order for b_ in (bf_, bb_)], axis=-1)) # (1, 8H)
        top = jnp.concatenate(
            [blk for g in gate_order for blk in (gsl(whf_, g), zero)], axis=-1)  # (H, 8H)
        bot = jnp.concatenate(
            [blk for g in gate_order for blk in (zero, gsl(whb_, g))], axis=-1)  # (H, 8H)
        whs.append(jnp.concatenate([top, bot], axis=0))                          # (2H, 8H)
    return dict(emb_tab=tab, wx=jnp.stack(wxs), wh=jnp.stack(whs), b=jnp.stack(bs))


def root_sentence_encoder(packed, tokens, lengths):
    """tokens: (B, T, 4) int32 padded token ids; lengths: (B,) int32.
    Returns padded LSTM outputs (B, T, NUM_DIR*HIDDEN); rows past each length are 0
    (== pad_packed_sequence of the PyTorch PackedSequence output).
    Re-packing into a PackedSequence container is plain host bookkeeping."""
    B, T, _ = tokens.shape
    H2 = NUM_DIR * HIDDEN
    tok_tm = jnp.transpose(tokens, (1, 0, 2)).reshape(T * B, 4).astype(jnp.int32)
    ids_off = tok_tm + jnp.asarray(VOCAB_OFFSETS, jnp.int32)[None, :]   # fused-table ids
    lens2 = lengths.reshape(B, 1).astype(jnp.int32)

    # NOTE: grid-less single call is best at this tiny batch on every generation;
    # for large B one would add a batch grid with dimension_semantics=("parallel",)
    # to use v7x's 2 TensorCores.
    out_flat = pl.pallas_call(
        functools.partial(_root_sent_enc_kernel, B=B, T=T),
        out_shape=jax.ShapeDtypeStruct((B, T * H2), jnp.float32),       # lane-dense (2,256)
        in_specs=[pl.BlockSpec(memory_space=pltpu.MemorySpace.VMEM)] * 6,
        out_specs=pl.BlockSpec(memory_space=pltpu.MemorySpace.VMEM),
        scratch_shapes=[pltpu.VMEM((T * B, H2), jnp.float32)],          # layer-0 out slab
    )(ids_off, lens2, packed["emb_tab"], packed["wx"], packed["wh"], packed["b"])
    return out_flat.reshape(B, T, H2)


# ---------------------------------------------------------------------------
# Pure-JAX reference (same packed-LSTM semantics, standard weight layout)
# ---------------------------------------------------------------------------
def ref_forward(params, tokens, lengths):
    B, T, _ = tokens.shape
    H = HIDDEN
    hp = jax.lax.Precision.HIGHEST
    emb = jnp.concatenate([
        params["word_lut"][tokens[..., TXT_WORD]],
        params["lemma_lut"][tokens[..., TXT_LEMMA]],
        params["pos_lut"][tokens[..., TXT_POS]],
        params["ner_lut"][tokens[..., TXT_NER]],
    ], axis=-1)                                                   # (B, T, INPUT_SIZE)
    mask = (jnp.arange(T)[None, :] < lengths[:, None]).astype(jnp.float32)

    x = emb
    for layer in range(LAYERS):
        outs = []
        for d in range(NUM_DIR):
            idx = layer * NUM_DIR + d
            Wx, Wh, b = params["wx"][idx], params["wh"][idx], params["b"][idx]
            h = jnp.zeros((B, H), jnp.float32)
            c = jnp.zeros((B, H), jnp.float32)
            hs = [None] * T
            order = range(T) if d == 0 else range(T - 1, -1, -1)
            for t in order:
                g = jnp.dot(x[:, t, :], Wx, precision=hp) + b + jnp.dot(h, Wh, precision=hp)
                i_g = jax.nn.sigmoid(g[:, :H])
                f_g = jax.nn.sigmoid(g[:, H:2 * H])
                g_g = jnp.tanh(g[:, 2 * H:3 * H])
                o_g = jax.nn.sigmoid(g[:, 3 * H:])
                c_n = f_g * c + i_g * g_g
                h_n = o_g * jnp.tanh(c_n)
                m = mask[:, t:t + 1]
                h = m * h_n + (1.0 - m) * h
                c = m * c_n + (1.0 - m) * c
                hs[t] = h * m
            outs.append(jnp.stack(hs, axis=1))
        x = jnp.concatenate(outs, axis=-1)
    return x                                                      # (B, T, NUM_DIR*H)


# ---------------------------------------------------------------------------
# Deterministic parameter init (PyTorch gate order i,f,g,o; weights pre-transposed
# for x @ W; b = b_ih + b_hh combined; stacked over (layer, direction))
# ---------------------------------------------------------------------------
def init_params(key):
    ks = jax.random.split(key, 7)
    n = lambda k, s, sc=0.1: (sc * jax.random.normal(k, s)).astype(jnp.float32)
    LD = LAYERS * NUM_DIR
    return dict(
        word_lut=n(ks[0], (WORD_VOCAB, WORD_DIM)),
        lemma_lut=n(ks[1], (LEMMA_VOCAB, LEMMA_DIM)),
        pos_lut=n(ks[2], (POS_VOCAB, POS_DIM)),
        ner_lut=n(ks[3], (NER_VOCAB, NER_DIM)),
        wx=n(ks[4], (LD, INPUT_SIZE, 4 * HIDDEN)),
        wh=n(ks[5], (LD, HIDDEN, 4 * HIDDEN)),
        b=n(ks[6], (LD, 1, 4 * HIDDEN)),
    )


# ---------------------------------------------------------------------------
if __name__ == "__main__":
    key = jax.random.PRNGKey(0)
    kp, kd = jax.random.split(key)
    params = init_params(kp)
    packed = pack_params(params)          # host-side repack into fused kernel layout

    # small padded batch of 2 "packed" sentences, lengths 8 and 6
    B, T = 2, 8
    lengths = jnp.array([8, 6], dtype=jnp.int32)
    kw, kl, kpn, kn = jax.random.split(kd, 4)
    tokens = jnp.stack([
        jax.random.randint(kw, (B, T), 0, WORD_VOCAB),
        jax.random.randint(kl, (B, T), 0, LEMMA_VOCAB),
        jax.random.randint(kpn, (B, T), 0, POS_VOCAB),
        jax.random.randint(kn, (B, T), 0, NER_VOCAB),
    ], axis=-1).astype(jnp.int32)                                 # (B, T, 4)

    out = jax.jit(root_sentence_encoder)(packed, tokens, lengths)
    jax.block_until_ready(out)
    assert out.shape == (B, T, NUM_DIR * HIDDEN)

    # numerical check against the pure-JAX reference (tolerance allows for TPU
    # default matmul precision inside the kernel vs Precision.HIGHEST reference)
    ref = ref_forward(params, tokens, lengths)
    assert jnp.allclose(out, ref, atol=1e-3, rtol=1e-3), "RootSentenceEncoder output mismatch"

    # padded positions must be exactly zero (pad_packed_sequence padding_value=0.0)
    pad = (jnp.arange(T)[None, :] >= lengths[:, None])[..., None]
    assert bool(jnp.all(jnp.where(pad, out, 0.0) == 0.0)), "padding not zeroed"

    print("KERNEL_OK")
</pallas_src>

<mosaic_0001>
module attributes {stable_mosaic.version = 11 : i64} {
  func.func @_root_sent_enc_kernel(%arg0: memref<16x4xi32, #tpu.memory_space<vmem>>, %arg1: memref<2x1xi32, #tpu.memory_space<vmem>>, %arg2: memref<128x32xf32, #tpu.memory_space<vmem>>, %arg3: memref<2x32x128xf32, #tpu.memory_space<vmem>>, %arg4: memref<2x32x128xf32, #tpu.memory_space<vmem>>, %arg5: memref<2x1x128xf32, #tpu.memory_space<vmem>>, %arg6: memref<2x256xf32, #tpu.memory_space<vmem>>, %arg7: memref<16x32xf32, #tpu.memory_space<vmem>>) attributes {dimension_semantics = [], scalar_prefetch = 0 : i64, scratch_operands = 1 : i64, tpu.core_type = #tpu.core_type<tc>} {
    %c0 = arith.constant 0 : index
    %c0_0 = arith.constant 0 : index
    %0 = vector.load %arg0[%c0, %c0_0] : memref<16x4xi32, #tpu.memory_space<vmem>>, vector<16x4xi32>
    %1 = tpu.iota {dimensions = array<i32: 1>} : vector<16x128xi32>
    %2 = vector.extract_strided_slice %0 {offsets = [0, 0], sizes = [16, 1], strides = [1, 1]} : vector<16x4xi32> to vector<16x1xi32>
    %3 = vector.broadcast %2 : vector<16x1xi32> to vector<16x128xi32>
    %4 = arith.cmpi eq, %3, %1 : vector<16x128xi32>
    %5 = arith.extui %4 : vector<16x128xi1> to vector<16x128xi32>
    %6 = arith.sitofp %5 : vector<16x128xi32> to vector<16x128xf32>
    %7 = vector.extract_strided_slice %0 {offsets = [0, 1], sizes = [16, 1], strides = [1, 1]} : vector<16x4xi32> to vector<16x1xi32>
    %8 = vector.broadcast %7 : vector<16x1xi32> to vector<16x128xi32>
    %9 = arith.cmpi eq, %8, %1 : vector<16x128xi32>
    %10 = arith.extui %9 : vector<16x128xi1> to vector<16x128xi32>
    %11 = arith.sitofp %10 : vector<16x128xi32> to vector<16x128xf32>
    %12 = arith.addf %6, %11 : vector<16x128xf32>
    %13 = vector.extract_strided_slice %0 {offsets = [0, 2], sizes = [16, 1], strides = [1, 1]} : vector<16x4xi32> to vector<16x1xi32>
    %14 = vector.broadcast %13 : vector<16x1xi32> to vector<16x128xi32>
    %15 = arith.cmpi eq, %14, %1 : vector<16x128xi32>
    %16 = arith.extui %15 : vector<16x128xi1> to vector<16x128xi32>
    %17 = arith.sitofp %16 : vector<16x128xi32> to vector<16x128xf32>
    %18 = arith.addf %12, %17 : vector<16x128xf32>
    %19 = vector.extract_strided_slice %0 {offsets = [0, 3], sizes = [16, 1], strides = [1, 1]} : vector<16x4xi32> to vector<16x1xi32>
    %20 = vector.broadcast %19 : vector<16x1xi32> to vector<16x128xi32>
    %21 = arith.cmpi eq, %20, %1 : vector<16x128xi32>
    %22 = arith.extui %21 : vector<16x128xi1> to vector<16x128xi32>
    %23 = arith.sitofp %22 : vector<16x128xi32> to vector<16x128xf32>
    %24 = arith.addf %18, %23 : vector<16x128xf32>
    %c0_1 = arith.constant 0 : index
    %c0_2 = arith.constant 0 : index
    %25 = vector.load %arg2[%c0_1, %c0_2] : memref<128x32xf32, #tpu.memory_space<vmem>>, vector<128x32xf32>
    %cst = arith.constant dense<0.000000e+00> : vector<16x32xf32>
    %26 = tpu.matmul %24, %25, %cst {dimension_numbers = #tpu.dot_dimension_numbers<[1], [0], [0], [1], [0, 0, 1, 1], [], []>} : vector<16x128xf32>, vector<128x32xf32>, vector<16x32xf32> -> vector<16x32xf32>
    %c0_3 = arith.constant 0 : index
    %c0_4 = arith.constant 0 : index
    %27 = vector.load %arg1[%c0_3, %c0_4] : memref<2x1xi32, #tpu.memory_space<vmem>>, vector<2x1xi32>
    %28 = tpu.iota {dimensions = array<i32: 1>} : vector<2x128xi32>
    %c16_i32 = arith.constant 16 : i32
    %29 = vector.broadcast %c16_i32 : i32 to vector<2x128xi32>
    %30 = arith.andi %28, %29 : vector<2x128xi32>
    %c0_i32 = arith.constant 0 : i32
    %31 = vector.broadcast %c0_i32 : i32 to vector<2x128xi32>
    %32 = arith.cmpi ne, %30, %31 : vector<2x128xi32>
    %33 = tpu.iota {dimensions = array<i32: 1>} : vector<2x32xi32>
    %c16_i32_5 = arith.constant 16 : i32
    %34 = vector.broadcast %c16_i32_5 : i32 to vector<2x32xi32>
    %35 = arith.cmpi slt, %33, %34 : vector<2x32xi32>
    %c0_6 = arith.constant 0 : index
    %c0_7 = arith.constant 0 : index
    %c0_8 = arith.constant 0 : index
    %36 = vector.load %arg3[%c0_6, %c0_7, %c0_8] : memref<2x32x128xf32, #tpu.memory_space<vmem>>, vector<1x32x128xf32>
    %37 = vector.shape_cast %36 : vector<1x32x128xf32> to vector<32x128xf32>
    %cst_9 = arith.constant dense<0.000000e+00> : vector<16x128xf32>
    %38 = tpu.matmul %26, %37, %cst_9 {dimension_numbers = #tpu.dot_dimension_numbers<[1], [0], [0], [1], [0, 0, 1, 1], [], []>} : vector<16x32xf32>, vector<32x128xf32>, vector<16x128xf32> -> vector<16x128xf32>
    %c0_10 = arith.constant 0 : index
    %c0_11 = arith.constant 0 : index
    %c0_12 = arith.constant 0 : index
    %39 = vector.load %arg5[%c0_10, %c0_11, %c0_12] : memref<2x1x128xf32, #tpu.memory_space<vmem>>, vector<1x1x128xf32>
    %40 = vector.shape_cast %39 : vector<1x1x128xf32> to vector<1x128xf32>
    %41 = vector.broadcast %40 : vector<1x128xf32> to vector<16x128xf32>
    %42 = arith.addf %38, %41 : vector<16x128xf32>
    %c0_13 = arith.constant 0 : index
    %c0_14 = arith.constant 0 : index
    %c0_15 = arith.constant 0 : index
    %43 = vector.load %arg4[%c0_13, %c0_14, %c0_15] : memref<2x32x128xf32, #tpu.memory_space<vmem>>, vector<1x32x128xf32>
    %44 = vector.shape_cast %43 : vector<1x32x128xf32> to vector<32x128xf32>
    %cst_16 = arith.constant 0.000000e+00 : f32
    %45 = vector.broadcast %cst_16 : f32 to vector<2x32xf32>
    %cst_17 = arith.constant 0.000000e+00 : f32
    %46 = vector.broadcast %cst_17 : f32 to vector<2x32xf32>
    %47 = vector.extract_strided_slice %42 {offsets = [14, 0], sizes = [2, 128], strides = [1, 1]} : vector<16x128xf32> to vector<2x128xf32>
    %48 = vector.extract_strided_slice %42 {offsets = [0, 0], sizes = [2, 128], strides = [1, 1]} : vector<16x128xf32> to vector<2x128xf32>
    %49 = arith.select %32, %47, %48 : vector<2x128xi1>, vector<2x128xf32>
    %cst_18 = arith.constant dense<0.000000e+00> : vector<2x128xf32>
    %50 = tpu.matmul %45, %44, %cst_18 {dimension_numbers = #tpu.dot_dimension_numbers<[1], [0], [0], [1], [0, 0, 1, 1], [], []>} : vector<2x32xf32>, vector<32x128xf32>, vector<2x128xf32> -> vector<2x128xf32>
    %51 = arith.addf %49, %50 : vector<2x128xf32>
    %52 = vector.extract_strided_slice %51 {offsets = [0, 0], sizes = [2, 96], strides = [1, 1]} : vector<2x128xf32> to vector<2x96xf32>
    %53 = arith.negf %52 : vector<2x96xf32>
    %54 = math.exp %53 : vector<2x96xf32>
    %cst_19 = arith.constant 1.000000e+00 : f32
    %55 = vector.broadcast %cst_19 : f32 to vector<2x96xf32>
    %56 = arith.addf %55, %54 : vector<2x96xf32>
    %57 = arith.divf %55, %56 : vector<2x96xf32>
    %58 = vector.extract_strided_slice %51 {offsets = [0, 96], sizes = [2, 32], strides = [1, 1]} : vector<2x128xf32> to vector<2x32xf32>
    %59 = math.tanh %58 : vector<2x32xf32>
    %60 = vector.extract_strided_slice %57 {offsets = [0, 32], sizes = [2, 32], strides = [1, 1]} : vector<2x96xf32> to vector<2x32xf32>
    %61 = arith.mulf %60, %46 : vector<2x32xf32>
    %62 = vector.extract_strided_slice %57 {offsets = [0, 0], sizes = [2, 32], strides = [1, 1]} : vector<2x96xf32> to vector<2x32xf32>
    %63 = arith.mulf %62, %59 : vector<2x32xf32>
    %64 = arith.addf %61, %63 : vector<2x32xf32>
    %65 = vector.extract_strided_slice %57 {offsets = [0, 64], sizes = [2, 32], strides = [1, 1]} : vector<2x96xf32> to vector<2x32xf32>
    %66 = math.tanh %64 : vector<2x32xf32>
    %67 = arith.mulf %65, %66 : vector<2x32xf32>
    %c0_i32_20 = arith.constant 0 : i32
    %68 = vector.broadcast %c0_i32_20 : i32 to vector<2x1xi32>
    %69 = arith.cmpi sgt, %27, %68 : vector<2x1xi32>
    %70 = arith.extui %69 : vector<2x1xi1> to vector<2x1xi32>
    %71 = arith.sitofp %70 : vector<2x1xi32> to vector<2x1xf32>
    %c7_i32 = arith.constant 7 : i32
    %72 = vector.broadcast %c7_i32 : i32 to vector<2x1xi32>
    %73 = arith.cmpi sgt, %27, %72 : vector<2x1xi32>
    %74 = arith.extui %73 : vector<2x1xi1> to vector<2x1xi32>
    %75 = arith.sitofp %74 : vector<2x1xi32> to vector<2x1xf32>
    %76 = vector.shape_cast %71 : vector<2x1xf32> to vector<2x1xf32>
    %77 = vector.broadcast %76 : vector<2x1xf32> to vector<2x32xf32>
    %78 = vector.shape_cast %75 : vector<2x1xf32> to vector<2x1xf32>
    %79 = vector.broadcast %78 : vector<2x1xf32> to vector<2x32xf32>
    %80 = arith.select %35, %77, %79 : vector<2x32xi1>, vector<2x32xf32>
    %81 = arith.mulf %80, %64 : vector<2x32xf32>
    %cst_21 = arith.constant 1.000000e+00 : f32
    %82 = vector.broadcast %cst_21 : f32 to vector<2x32xf32>
    %83 = arith.subf %82, %80 : vector<2x32xf32>
    %84 = arith.mulf %83, %46 : vector<2x32xf32>
    %85 = arith.addf %81, %84 : vector<2x32xf32>
    %86 = arith.mulf %80, %67 : vector<2x32xf32>
    %cst_22 = arith.constant 1.000000e+00 : f32
    %87 = vector.broadcast %cst_22 : f32 to vector<2x32xf32>
    %88 = arith.subf %87, %80 : vector<2x32xf32>
    %89 = arith.mulf %88, %45 : vector<2x32xf32>
    %90 = arith.addf %86, %89 : vector<2x32xf32>
    %91 = vector.extract_strided_slice %90 {offsets = [0, 0], sizes = [2, 16], strides = [1, 1]} : vector<2x32xf32> to vector<2x16xf32>
    %c0_23 = arith.constant 0 : index
    %c0_24 = arith.constant 0 : index
    %92 = vector.load %arg7[%c0_23, %c0_24] : memref<16x32xf32, #tpu.memory_space<vmem>>, vector<2x16xf32>
    tpu.vector_store %arg7[%c0_23, %c0_24], %91 {strides = array<i32>} : memref<16x32xf32, #tpu.memory_space<vmem>>, vector<2x16xf32>,
    %93 = vector.extract_strided_slice %90 {offsets = [0, 16], sizes = [2, 16], strides = [1, 1]} : vector<2x32xf32> to vector<2x16xf32>
    %c14 = arith.constant 14 : index
    %c16 = arith.constant 16 : index
    %94 = vector.load %arg7[%c14, %c16] : memref<16x32xf32, #tpu.memory_space<vmem>>, vector<2x16xf32>
    tpu.vector_store %arg7[%c14, %c16], %93 {strides = array<i32>} : memref<16x32xf32, #tpu.memory_space<vmem>>, vector<2x16xf32>,
    %95 = vector.extract_strided_slice %42 {offsets = [12, 0], sizes = [2, 128], strides = [1, 1]} : vector<16x128xf32> to vector<2x128xf32>
    %96 = vector.extract_strided_slice %42 {offsets = [2, 0], sizes = [2, 128], strides = [1, 1]} : vector<16x128xf32> to vector<2x128xf32>
    %97 = arith.select %32, %95, %96 : vector<2x128xi1>, vector<2x128xf32>
    %cst_25 = arith.constant dense<0.000000e+00> : vector<2x128xf32>
    %98 = tpu.matmul %90, %44, %cst_25 {dimension_numbers = #tpu.dot_dimension_numbers<[1], [0], [0], [1], [0, 0, 1, 1], [], []>} : vector<2x32xf32>, vector<32x128xf32>, vector<2x128xf32> -> vector<2x128xf32>
    %99 = arith.addf %97, %98 : vector<2x128xf32>
    %100 = vector.extract_strided_slice %99 {offsets = [0, 0], sizes = [2, 96], strides = [1, 1]} : vector<2x128xf32> to vector<2x96xf32>
    %101 = arith.negf %100 : vector<2x96xf32>
    %102 = math.exp %101 : vector<2x96xf32>
    %cst_26 = arith.constant 1.000000e+00 : f32
    %103 = vector.broadcast %cst_26 : f32 to vector<2x96xf32>
    %104 = arith.addf %103, %102 : vector<2x96xf32>
    %105 = arith.divf %103, %104 : vector<2x96xf32>
    %106 = vector.extract_strided_slice %99 {offsets = [0, 96], sizes = [2, 32], strides = [1, 1]} : vector<2x128xf32> to vector<2x32xf32>
    %107 = math.tanh %106 : vector<2x32xf32>
    %108 = vector.extract_strided_slice %105 {offsets = [0, 32], sizes = [2, 32], strides = [1, 1]} : vector<2x96xf32> to vector<2x32xf32>
    %109 = arith.mulf %108, %85 : vector<2x32xf32>
    %110 = vector.extract_strided_slice %105 {offsets = [0, 0], sizes = [2, 32], strides = [1, 1]} : vector<2x96xf32> to vector<2x32xf32>
    %111 = arith.mulf %110, %107 : vector<2x32xf32>
    %112 = arith.addf %109, %111 : vector<2x32xf32>
    %113 = vector.extract_strided_slice %105 {offsets = [0, 64], sizes = [2, 32], strides = [1, 1]} : vector<2x96xf32> to vector<2x32xf32>
    %114 = math.tanh %112 : vector<2x32xf32>
    %115 = arith.mulf %113, %114 : vector<2x32xf32>
    %c1_i32 = arith.constant 1 : i32
    %116 = vector.broadcast %c1_i32 : i32 to vector<2x1xi32>
    %117 = arith.cmpi sgt, %27, %116 : vector<2x1xi32>
    %118 = arith.extui %117 : vector<2x1xi1> to vector<2x1xi32>
    %119 = arith.sitofp %118 : vector<2x1xi32> to vector<2x1xf32>
    %c6_i32 = arith.constant 6 : i32
    %120 = vector.broadcast %c6_i32 : i32 to vector<2x1xi32>
    %121 = arith.cmpi sgt, %27, %120 : vector<2x1xi32>
    %122 = arith.extui %121 : vector<2x1xi1> to vector<2x1xi32>
    %123 = arith.sitofp %122 : vector<2x1xi32> to vector<2x1xf32>
    %124 = vector.shape_cast %119 : vector<2x1xf32> to vector<2x1xf32>
    %125 = vector.broadcast %124 : vector<2x1xf32> to vector<2x32xf32>
    %126 = vector.shape_cast %123 : vector<2x1xf32> to vector<2x1xf32>
    %127 = vector.broadcast %126 : vector<2x1xf32> to vector<2x32xf32>
    %128 = arith.select %35, %125, %127 : vector<2x32xi1>, vector<2x32xf32>
    %129 = arith.mulf %128, %112 : vector<2x32xf32>
    %cst_27 = arith.constant 1.000000e+00 : f32
    %130 = vector.broadcast %cst_27 : f32 to vector<2x32xf32>
    %131 = arith.subf %130, %128 : vector<2x32xf32>
    %132 = arith.mulf %131, %85 : vector<2x32xf32>
    %133 = arith.addf %129, %132 : vector<2x32xf32>
    %134 = arith.mulf %128, %115 : vector<2x32xf32>
    %cst_28 = arith.constant 1.000000e+00 : f32
    %135 = vector.broadcast %cst_28 : f32 to vector<2x32xf32>
    %136 = arith.subf %135, %128 : vector<2x32xf32>
    %137 = arith.mulf %136, %90 : vector<2x32xf32>
    %138 = arith.addf %134, %137 : vector<2x32xf32>
    %139 = vector.extract_strided_slice %138 {offsets = [0, 0], sizes = [2, 16], strides = [1, 1]} : vector<2x32xf32> to vector<2x16xf32>
    %c2 = arith.constant 2 : index
    %c0_29 = arith.constant 0 : index
    %140 = vector.load %arg7[%c2, %c0_29] : memref<16x32xf32, #tpu.memory_space<vmem>>, vector<2x16xf32>
    tpu.vector_store %arg7[%c2, %c0_29], %139 {strides = array<i32>} : memref<16x32xf32, #tpu.memory_space<vmem>>, vector<2x16xf32>,
    %141 = vector.extract_strided_slice %138 {offsets = [0, 16], sizes = [2, 16], strides = [1, 1]} : vector<2x32xf32> to vector<2x16xf32>
    %c12 = arith.constant 12 : index
    %c16_30 = arith.constant 16 : index
    %142 = vector.load %arg7[%c12, %c16_30] : memref<16x32xf32, #tpu.memory_space<vmem>>, vector<2x16xf32>
    tpu.vector_store %arg7[%c12, %c16_30], %141 {strides = array<i32>} : memref<16x32xf32, #tpu.memory_space<vmem>>, vector<2x16xf32>,
    %143 = vector.extract_strided_slice %42 {offsets = [10, 0], sizes = [2, 128], strides = [1, 1]} : vector<16x128xf32> to vector<2x128xf32>
    %144 = vector.extract_strided_slice %42 {offsets = [4, 0], sizes = [2, 128], strides = [1, 1]} : vector<16x128xf32> to vector<2x128xf32>
    %145 = arith.select %32, %143, %144 : vector<2x128xi1>, vector<2x128xf32>
    %cst_31 = arith.constant dense<0.000000e+00> : vector<2x128xf32>
    %146 = tpu.matmul %138, %44, %cst_31 {dimension_numbers = #tpu.dot_dimension_numbers<[1], [0], [0], [1], [0, 0, 1, 1], [], []>} : vector<2x32xf32>, vector<32x128xf32>, vector<2x128xf32> -> vector<2x128xf32>
    %147 = arith.addf %145, %146 : vector<2x128xf32>
    %148 = vector.extract_strided_slice %147 {offsets = [0, 0], sizes = [2, 96], strides = [1, 1]} : vector<2x128xf32> to vector<2x96xf32>
    %149 = arith.negf %148 : vector<2x96xf32>
    %150 = math.exp %149 : vector<2x96xf32>
    %cst_32 = arith.constant 1.000000e+00 : f32
    %151 = vector.broadcast %cst_32 : f32 to vector<2x96xf32>
    %152 = arith.addf %151, %150 : vector<2x96xf32>
    %153 = arith.divf %151, %152 : vector<2x96xf32>
    %154 = vector.extract_strided_slice %147 {offsets = [0, 96], sizes = [2, 32], strides = [1, 1]} : vector<2x128xf32> to vector<2x32xf32>
    %155 = math.tanh %154 : vector<2x32xf32>
    %156 = vector.extract_strided_slice %153 {offsets = [0, 32], sizes = [2, 32], strides = [1, 1]} : vector<2x96xf32> to vector<2x32xf32>
    %157 = arith.mulf %156, %133 : vector<2x32xf32>
    %158 = vector.extract_strided_slice %153 {offsets = [0, 0], sizes = [2, 32], strides = [1, 1]} : vector<2x96xf32> to vector<2x32xf32>
    %159 = arith.mulf %158, %155 : vector<2x32xf32>
    %160 = arith.addf %157, %159 : vector<2x32xf32>
    %161 = vector.extract_strided_slice %153 {offsets = [0, 64], sizes = [2, 32], strides = [1, 1]} : vector<2x96xf32> to vector<2x32xf32>
    %162 = math.tanh %160 : vector<2x32xf32>
    %163 = arith.mulf %161, %162 : vector<2x32xf32>
    %c2_i32 = arith.constant 2 : i32
    %164 = vector.broadcast %c2_i32 : i32 to vector<2x1xi32>
    %165 = arith.cmpi sgt, %27, %164 : vector<2x1xi32>
    %166 = arith.extui %165 : vector<2x1xi1> to vector<2x1xi32>
    %167 = arith.sitofp %166 : vector<2x1xi32> to vector<2x1xf32>
    %c5_i32 = arith.constant 5 : i32
    %168 = vector.broadcast %c5_i32 : i32 to vector<2x1xi32>
    %169 = arith.cmpi sgt, %27, %168 : vector<2x1xi32>
    %170 = arith.extui %169 : vector<2x1xi1> to vector<2x1xi32>
    %171 = arith.sitofp %170 : vector<2x1xi32> to vector<2x1xf32>
    %172 = vector.shape_cast %167 : vector<2x1xf32> to vector<2x1xf32>
    %173 = vector.broadcast %172 : vector<2x1xf32> to vector<2x32xf32>
    %174 = vector.shape_cast %171 : vector<2x1xf32> to vector<2x1xf32>
    %175 = vector.broadcast %174 : vector<2x1xf32> to vector<2x32xf32>
    %176 = arith.select %35, %173, %175 : vector<2x32xi1>, vector<2x32xf32>
    %177 = arith.mulf %176, %160 : vector<2x32xf32>
    %cst_33 = arith.constant 1.000000e+00 : f32
    %178 = vector.broadcast %cst_33 : f32 to vector<2x32xf32>
    %179 = arith.subf %178, %176 : vector<2x32xf32>
    %180 = arith.mulf %179, %133 : vector<2x32xf32>
    %181 = arith.addf %177, %180 : vector<2x32xf32>
    %182 = arith.mulf %176, %163 : vector<2x32xf32>
    %cst_34 = arith.constant 1.000000e+00 : f32
    %183 = vector.broadcast %cst_34 : f32 to vector<2x32xf32>
    %184 = arith.subf %183, %176 : vector<2x32xf32>
    %185 = arith.mulf %184, %138 : vector<2x32xf32>
    %186 = arith.addf %182, %185 : vector<2x32xf32>
    %187 = vector.extract_strided_slice %186 {offsets = [0, 0], sizes = [2, 16], strides = [1, 1]} : vector<2x32xf32> to vector<2x16xf32>
    %c4 = arith.constant 4 : index
    %c0_35 = arith.constant 0 : index
    %188 = vector.load %arg7[%c4, %c0_35] : memref<16x32xf32, #tpu.memory_space<vmem>>, vector<2x16xf32>
    tpu.vector_store %arg7[%c4, %c0_35], %187 {strides = array<i32>} : memref<16x32xf32, #tpu.memory_space<vmem>>, vector<2x16xf32>,
    %189 = vector.extract_strided_slice %186 {offsets = [0, 16], sizes = [2, 16], strides = [1, 1]} : vector<2x32xf32> to vector<2x16xf32>
    %c10 = arith.constant 10 : index
    %c16_36 = arith.constant 16 : index
    %190 = vector.load %arg7[%c10, %c16_36] : memref<16x32xf32, #tpu.memory_space<vmem>>, vector<2x16xf32>
    tpu.vector_store %arg7[%c10, %c16_36], %189 {strides = array<i32>} : memref<16x32xf32, #tpu.memory_space<vmem>>, vector<2x16xf32>,
    %191 = vector.extract_strided_slice %42 {offsets = [8, 0], sizes = [2, 128], strides = [1, 1]} : vector<16x128xf32> to vector<2x128xf32>
    %192 = vector.extract_strided_slice %42 {offsets = [6, 0], sizes = [2, 128], strides = [1, 1]} : vector<16x128xf32> to vector<2x128xf32>
    %193 = arith.select %32, %191, %192 : vector<2x128xi1>, vector<2x128xf32>
    %cst_37 = arith.constant dense<0.000000e+00> : vector<2x128xf32>
    %194 = tpu.matmul %186, %44, %cst_37 {dimension_numbers = #tpu.dot_dimension_numbers<[1], [0], [0], [1], [0, 0, 1, 1], [], []>} : vector<2x32xf32>, vector<32x128xf32>, vector<2x128xf32> -> vector<2x128xf32>
    %195 = arith.addf %193, %194 : vector<2x128xf32>
    %196 = vector.extract_strided_slice %195 {offsets = [0, 0], sizes = [2, 96], strides = [1, 1]} : vector<2x128xf32> to vector<2x96xf32>
    %197 = arith.negf %196 : vector<2x96xf32>
    %198 = math.exp %197 : vector<2x96xf32>
    %cst_38 = arith.constant 1.000000e+00 : f32
    %199 = vector.broadcast %cst_38 : f32 to vector<2x96xf32>
    %200 = arith.addf %199, %198 : vector<2x96xf32>
    %201 = arith.divf %199, %200 : vector<2x96xf32>
    %202 = vector.extract_strided_slice %195 {offsets = [0, 96], sizes = [2, 32], strides = [1, 1]} : vector<2x128xf32> to vector<2x32xf32>
    %203 = math.tanh %202 : vector<2x32xf32>
    %204 = vector.extract_strided_slice %201 {offsets = [0, 32], sizes = [2, 32], strides = [1, 1]} : vector<2x96xf32> to vector<2x32xf32>
    %205 = arith.mulf %204, %181 : vector<2x32xf32>
    %206 = vector.extract_strided_slice %201 {offsets = [0, 0], sizes = [2, 32], strides = [1, 1]} : vector<2x96xf32> to vector<2x32xf32>
    %207 = arith.mulf %206, %203 : vector<2x32xf32>
    %208 = arith.addf %205, %207 : vector<2x32xf32>
    %209 = vector.extract_strided_slice %201 {offsets = [0, 64], sizes = [2, 32], strides = [1, 1]} : vector<2x96xf32> to vector<2x32xf32>
    %210 = math.tanh %208 : vector<2x32xf32>
    %211 = arith.mulf %209, %210 : vector<2x32xf32>
    %c3_i32 = arith.constant 3 : i32
    %212 = vector.broadcast %c3_i32 : i32 to vector<2x1xi32>
    %213 = arith.cmpi sgt, %27, %212 : vector<2x1xi32>
    %214 = arith.extui %213 : vector<2x1xi1> to vector<2x1xi32>
    %215 = arith.sitofp %214 : vector<2x1xi32> to vector<2x1xf32>
    %c4_i32 = arith.constant 4 : i32
    %216 = vector.broadcast %c4_i32 : i32 to vector<2x1xi32>
    %217 = arith.cmpi sgt, %27, %216 : vector<2x1xi32>
    %218 = arith.extui %217 : vector<2x1xi1> to vector<2x1xi32>
    %219 = arith.sitofp %218 : vector<2x1xi32> to vector<2x1xf32>
    %220 = vector.shape_cast %215 : vector<2x1xf32> to vector<2x1xf32>
    %221 = vector.broadcast %220 : vector<2x1xf32> to vector<2x32xf32>
    %222 = vector.shape_cast %219 : vector<2x1xf32> to vector<2x1xf32>
    %223 = vector.broadcast %222 : vector<2x1xf32> to vector<2x32xf32>
    %224 = arith.select %35, %221, %223 : vector<2x32xi1>, vector<2x32xf32>
    %225 = arith.mulf %224, %208 : vector<2x32xf32>
    %cst_39 = arith.constant 1.000000e+00 : f32
    %226 = vector.broadcast %cst_39 : f32 to vector<2x32xf32>
    %227 = arith.subf %226, %224 : vector<2x32xf32>
    %228 = arith.mulf %227, %181 : vector<2x32xf32>
    %229 = arith.addf %225, %228 : vector<2x32xf32>
    %230 = arith.mulf %224, %211 : vector<2x32xf32>
    %cst_40 = arith.constant 1.000000e+00 : f32
    %231 = vector.broadcast %cst_40 : f32 to vector<2x32xf32>
    %232 = arith.subf %231, %224 : vector<2x32xf32>
    %233 = arith.mulf %232, %186 : vector<2x32xf32>
    %234 = arith.addf %230, %233 : vector<2x32xf32>
    %235 = vector.extract_strided_slice %234 {offsets = [0, 0], sizes = [2, 16], strides = [1, 1]} : vector<2x32xf32> to vector<2x16xf32>
    %c6 = arith.constant 6 : index
    %c0_41 = arith.constant 0 : index
    %236 = vector.load %arg7[%c6, %c0_41] : memref<16x32xf32, #tpu.memory_space<vmem>>, vector<2x16xf32>
    tpu.vector_store %arg7[%c6, %c0_41], %235 {strides = array<i32>} : memref<16x32xf32, #tpu.memory_space<vmem>>, vector<2x16xf32>,
    %237 = vector.extract_strided_slice %234 {offsets = [0, 16], sizes = [2, 16], strides = [1, 1]} : vector<2x32xf32> to vector<2x16xf32>
    %c8 = arith.constant 8 : index
    %c16_42 = arith.constant 16 : index
    %238 = vector.load %arg7[%c8, %c16_42] : memref<16x32xf32, #tpu.memory_space<vmem>>, vector<2x16xf32>
    tpu.vector_store %arg7[%c8, %c16_42], %237 {strides = array<i32>} : memref<16x32xf32, #tpu.memory_space<vmem>>, vector<2x16xf32>,
    %239 = vector.extract_strided_slice %42 {offsets = [6, 0], sizes = [2, 128], strides = [1, 1]} : vector<16x128xf32> to vector<2x128xf32>
    %240 = vector.extract_strided_slice %42 {offsets = [8, 0], sizes = [2, 128], strides = [1, 1]} : vector<16x128xf32> to vector<2x128xf32>
    %241 = arith.select %32, %239, %240 : vector<2x128xi1>, vector<2x128xf32>
    %cst_43 = arith.constant dense<0.000000e+00> : vector<2x128xf32>
    %242 = tpu.matmul %234, %44, %cst_43 {dimension_numbers = #tpu.dot_dimension_numbers<[1], [0], [0], [1], [0, 0, 1, 1], [], []>} : vector<2x32xf32>, vector<32x128xf32>, vector<2x128xf32> -> vector<2x128xf32>
    %243 = arith.addf %241, %242 : vector<2x128xf32>
    %244 = vector.extract_strided_slice %243 {offsets = [0, 0], sizes = [2, 96], strides = [1, 1]} : vector<2x128xf32> to vector<2x96xf32>
    %245 = arith.negf %244 : vector<2x96xf32>
    %246 = math.exp %245 : vector<2x96xf32>
    %cst_44 = arith.constant 1.000000e+00 : f32
    %247 = vector.broadcast %cst_44 : f32 to vector<2x96xf32>
    %248 = arith.addf %247, %246 : vector<2x96xf32>
    %249 = arith.divf %247, %248 : vector<2x96xf32>
    %250 = vector.extract_strided_slice %243 {offsets = [0, 96], sizes = [2, 32], strides = [1, 1]} : vector<2x128xf32> to vector<2x32xf32>
    %251 = math.tanh %250 : vector<2x32xf32>
    %252 = vector.extract_strided_slice %249 {offsets = [0, 32], sizes = [2, 32], strides = [1, 1]} : vector<2x96xf32> to vector<2x32xf32>
    %253 = arith.mulf %252, %229 : vector<2x32xf32>
    %254 = vector.extract_strided_slice %249 {offsets = [0, 0], sizes = [2, 32], strides = [1, 1]} : vector<2x96xf32> to vector<2x32xf32>
    %255 = arith.mulf %254, %251 : vector<2x32xf32>
    %256 = arith.addf %253, %255 : vector<2x32xf32>
    %257 = vector.extract_strided_slice %249 {offsets = [0, 64], sizes = [2, 32], strides = [1, 1]} : vector<2x96xf32> to vector<2x32xf32>
    %258 = math.tanh %256 : vector<2x32xf32>
    %259 = arith.mulf %257, %258 : vector<2x32xf32>
    %c4_i32_45 = arith.constant 4 : i32
    %260 = vector.broadcast %c4_i32_45 : i32 to vector<2x1xi32>
    %261 = arith.cmpi sgt, %27, %260 : vector<2x1xi32>
    %262 = arith.extui %261 : vector<2x1xi1> to vector<2x1xi32>
    %263 = arith.sitofp %262 : vector<2x1xi32> to vector<2x1xf32>
    %c3_i32_46 = arith.constant 3 : i32
    %264 = vector.broadcast %c3_i32_46 : i32 to vector<2x1xi32>
    %265 = arith.cmpi sgt, %27, %264 : vector<2x1xi32>
    %266 = arith.extui %265 : vector<2x1xi1> to vector<2x1xi32>
    %267 = arith.sitofp %266 : vector<2x1xi32> to vector<2x1xf32>
    %268 = vector.shape_cast %263 : vector<2x1xf32> to vector<2x1xf32>
    %269 = vector.broadcast %268 : vector<2x1xf32> to vector<2x32xf32>
    %270 = vector.shape_cast %267 : vector<2x1xf32> to vector<2x1xf32>
    %271 = vector.broadcast %270 : vector<2x1xf32> to vector<2x32xf32>
    %272 = arith.select %35, %269, %271 : vector<2x32xi1>, vector<2x32xf32>
    %273 = arith.mulf %272, %256 : vector<2x32xf32>
    %cst_47 = arith.constant 1.000000e+00 : f32
    %274 = vector.broadcast %cst_47 : f32 to vector<2x32xf32>
    %275 = arith.subf %274, %272 : vector<2x32xf32>
    %276 = arith.mulf %275, %229 : vector<2x32xf32>
    %277 = arith.addf %273, %276 : vector<2x32xf32>
    %278 = arith.mulf %272, %259 : vector<2x32xf32>
    %cst_48 = arith.constant 1.000000e+00 : f32
    %279 = vector.broadcast %cst_48 : f32 to vector<2x32xf32>
    %280 = arith.subf %279, %272 : vector<2x32xf32>
    %281 = arith.mulf %280, %234 : vector<2x32xf32>
    %282 = arith.addf %278, %281 : vector<2x32xf32>
    %283 = vector.extract_strided_slice %282 {offsets = [0, 0], sizes = [2, 16], strides = [1, 1]} : vector<2x32xf32> to vector<2x16xf32>
    %c8_49 = arith.constant 8 : index
    %c0_50 = arith.constant 0 : index
    %284 = vector.load %arg7[%c8_49, %c0_50] : memref<16x32xf32, #tpu.memory_space<vmem>>, vector<2x16xf32>
    tpu.vector_store %arg7[%c8_49, %c0_50], %283 {strides = array<i32>} : memref<16x32xf32, #tpu.memory_space<vmem>>, vector<2x16xf32>,
    %285 = vector.extract_strided_slice %282 {offsets = [0, 16], sizes = [2, 16], strides = [1, 1]} : vector<2x32xf32> to vector<2x16xf32>
    %c6_51 = arith.constant 6 : index
    %c16_52 = arith.constant 16 : index
    %286 = vector.load %arg7[%c6_51, %c16_52] : memref<16x32xf32, #tpu.memory_space<vmem>>, vector<2x16xf32>
    tpu.vector_store %arg7[%c6_51, %c16_52], %285 {strides = array<i32>} : memref<16x32xf32, #tpu.memory_space<vmem>>, vector<2x16xf32>,
    %287 = vector.extract_strided_slice %42 {offsets = [4, 0], sizes = [2, 128], strides = [1, 1]} : vector<16x128xf32> to vector<2x128xf32>
    %288 = vector.extract_strided_slice %42 {offsets = [10, 0], sizes = [2, 128], strides = [1, 1]} : vector<16x128xf32> to vector<2x128xf32>
    %289 = arith.select %32, %287, %288 : vector<2x128xi1>, vector<2x128xf32>
    %cst_53 = arith.constant dense<0.000000e+00> : vector<2x128xf32>
    %290 = tpu.matmul %282, %44, %cst_53 {dimension_numbers = #tpu.dot_dimension_numbers<[1], [0], [0], [1], [0, 0, 1, 1], [], []>} : vector<2x32xf32>, vector<32x128xf32>, vector<2x128xf32> -> vector<2x128xf32>
    %291 = arith.addf %289, %290 : vector<2x128xf32>
    %292 = vector.extract_strided_slice %291 {offsets = [0, 0], sizes = [2, 96], strides = [1, 1]} : vector<2x128xf32> to vector<2x96xf32>
    %293 = arith.negf %292 : vector<2x96xf32>
    %294 = math.exp %293 : vector<2x96xf32>
    %cst_54 = arith.constant 1.000000e+00 : f32
    %295 = vector.broadcast %cst_54 : f32 to vector<2x96xf32>
    %296 = arith.addf %295, %294 : vector<2x96xf32>
    %297 = arith.divf %295, %296 : vector<2x96xf32>
    %298 = vector.extract_strided_slice %291 {offsets = [0, 96], sizes = [2, 32], strides = [1, 1]} : vector<2x128xf32> to vector<2x32xf32>
    %299 = math.tanh %298 : vector<2x32xf32>
    %300 = vector.extract_strided_slice %297 {offsets = [0, 32], sizes = [2, 32], strides = [1, 1]} : vector<2x96xf32> to vector<2x32xf32>
    %301 = arith.mulf %300, %277 : vector<2x32xf32>
    %302 = vector.extract_strided_slice %297 {offsets = [0, 0], sizes = [2, 32], strides = [1, 1]} : vector<2x96xf32> to vector<2x32xf32>
    %303 = arith.mulf %302, %299 : vector<2x32xf32>
    %304 = arith.addf %301, %303 : vector<2x32xf32>
    %305 = vector.extract_strided_slice %297 {offsets = [0, 64], sizes = [2, 32], strides = [1, 1]} : vector<2x96xf32> to vector<2x32xf32>
    %306 = math.tanh %304 : vector<2x32xf32>
    %307 = arith.mulf %305, %306 : vector<2x32xf32>
    %c5_i32_55 = arith.constant 5 : i32
    %308 = vector.broadcast %c5_i32_55 : i32 to vector<2x1xi32>
    %309 = arith.cmpi sgt, %27, %308 : vector<2x1xi32>
    %310 = arith.extui %309 : vector<2x1xi1> to vector<2x1xi32>
    %311 = arith.sitofp %310 : vector<2x1xi32> to vector<2x1xf32>
    %c2_i32_56 = arith.constant 2 : i32
    %312 = vector.broadcast %c2_i32_56 : i32 to vector<2x1xi32>
    %313 = arith.cmpi sgt, %27, %312 : vector<2x1xi32>
    %314 = arith.extui %313 : vector<2x1xi1> to vector<2x1xi32>
    %315 = arith.sitofp %314 : vector<2x1xi32> to vector<2x1xf32>
    %316 = vector.shape_cast %311 : vector<2x1xf32> to vector<2x1xf32>
    %317 = vector.broadcast %316 : vector<2x1xf32> to vector<2x32xf32>
    %318 = vector.shape_cast %315 : vector<2x1xf32> to vector<2x1xf32>
    %319 = vector.broadcast %318 : vector<2x1xf32> to vector<2x32xf32>
    %320 = arith.select %35, %317, %319 : vector<2x32xi1>, vector<2x32xf32>
    %321 = arith.mulf %320, %304 : vector<2x32xf32>
    %cst_57 = arith.constant 1.000000e+00 : f32
    %322 = vector.broadcast %cst_57 : f32 to vector<2x32xf32>
    %323 = arith.subf %322, %320 : vector<2x32xf32>
    %324 = arith.mulf %323, %277 : vector<2x32xf32>
    %325 = arith.addf %321, %324 : vector<2x32xf32>
    %326 = arith.mulf %320, %307 : vector<2x32xf32>
    %cst_58 = arith.constant 1.000000e+00 : f32
    %327 = vector.broadcast %cst_58 : f32 to vector<2x32xf32>
    %328 = arith.subf %327, %320 : vector<2x32xf32>
    %329 = arith.mulf %328, %282 : vector<2x32xf32>
    %330 = arith.addf %326, %329 : vector<2x32xf32>
    %331 = vector.extract_strided_slice %330 {offsets = [0, 0], sizes = [2, 16], strides = [1, 1]} : vector<2x32xf32> to vector<2x16xf32>
    %c10_59 = arith.constant 10 : index
    %c0_60 = arith.constant 0 : index
    %332 = vector.load %arg7[%c10_59, %c0_60] : memref<16x32xf32, #tpu.memory_space<vmem>>, vector<2x16xf32>
    tpu.vector_store %arg7[%c10_59, %c0_60], %331 {strides = array<i32>} : memref<16x32xf32, #tpu.memory_space<vmem>>, vector<2x16xf32>,
    %333 = vector.extract_strided_slice %330 {offsets = [0, 16], sizes = [2, 16], strides = [1, 1]} : vector<2x32xf32> to vector<2x16xf32>
    %c4_61 = arith.constant 4 : index
    %c16_62 = arith.constant 16 : index
    %334 = vector.load %arg7[%c4_61, %c16_62] : memref<16x32xf32, #tpu.memory_space<vmem>>, vector<2x16xf32>
    tpu.vector_store %arg7[%c4_61, %c16_62], %333 {strides = array<i32>} : memref<16x32xf32, #tpu.memory_space<vmem>>, vector<2x16xf32>,
    %335 = vector.extract_strided_slice %42 {offsets = [2, 0], sizes = [2, 128], strides = [1, 1]} : vector<16x128xf32> to vector<2x128xf32>
    %336 = vector.extract_strided_slice %42 {offsets = [12, 0], sizes = [2, 128], strides = [1, 1]} : vector<16x128xf32> to vector<2x128xf32>
    %337 = arith.select %32, %335, %336 : vector<2x128xi1>, vector<2x128xf32>
    %cst_63 = arith.constant dense<0.000000e+00> : vector<2x128xf32>
    %338 = tpu.matmul %330, %44, %cst_63 {dimension_numbers = #tpu.dot_dimension_numbers<[1], [0], [0], [1], [0, 0, 1, 1], [], []>} : vector<2x32xf32>, vector<32x128xf32>, vector<2x128xf32> -> vector<2x128xf32>
    %339 = arith.addf %337, %338 : vector<2x128xf32>
    %340 = vector.extract_strided_slice %339 {offsets = [0, 0], sizes = [2, 96], strides = [1, 1]} : vector<2x128xf32> to vector<2x96xf32>
    %341 = arith.negf %340 : vector<2x96xf32>
    %342 = math.exp %341 : vector<2x96xf32>
    %cst_64 = arith.constant 1.000000e+00 : f32
    %343 = vector.broadcast %cst_64 : f32 to vector<2x96xf32>
    %344 = arith.addf %343, %342 : vector<2x96xf32>
    %345 = arith.divf %343, %344 : vector<2x96xf32>
    %346 = vector.extract_strided_slice %339 {offsets = [0, 96], sizes = [2, 32], strides = [1, 1]} : vector<2x128xf32> to vector<2x32xf32>
    %347 = math.tanh %346 : vector<2x32xf32>
    %348 = vector.extract_strided_slice %345 {offsets = [0, 32], sizes = [2, 32], strides = [1, 1]} : vector<2x96xf32> to vector<2x32xf32>
    %349 = arith.mulf %348, %325 : vector<2x32xf32>
    %350 = vector.extract_strided_slice %345 {offsets = [0, 0], sizes = [2, 32], strides = [1, 1]} : vector<2x96xf32> to vector<2x32xf32>
    %351 = arith.mulf %350, %347 : vector<2x32xf32>
    %352 = arith.addf %349, %351 : vector<2x32xf32>
    %353 = vector.extract_strided_slice %345 {offsets = [0, 64], sizes = [2, 32], strides = [1, 1]} : vector<2x96xf32> to vector<2x32xf32>
    %354 = math.tanh %352 : vector<2x32xf32>
    %355 = arith.mulf %353, %354 : vector<2x32xf32>
    %c6_i32_65 = arith.constant 6 : i32
    %356 = vector.broadcast %c6_i32_65 : i32 to vector<2x1xi32>
    %357 = arith.cmpi sgt, %27, %356 : vector<2x1xi32>
    %358 = arith.extui %357 : vector<2x1xi1> to vector<2x1xi32>
    %359 = arith.sitofp %358 : vector<2x1xi32> to vector<2x1xf32>
    %c1_i32_66 = arith.constant 1 : i32
    %360 = vector.broadcast %c1_i32_66 : i32 to vector<2x1xi32>
    %361 = arith.cmpi sgt, %27, %360 : vector<2x1xi32>
    %362 = arith.extui %361 : vector<2x1xi1> to vector<2x1xi32>
    %363 = arith.sitofp %362 : vector<2x1xi32> to vector<2x1xf32>
    %364 = vector.shape_cast %359 : vector<2x1xf32> to vector<2x1xf32>
    %365 = vector.broadcast %364 : vector<2x1xf32> to vector<2x32xf32>
    %366 = vector.shape_cast %363 : vector<2x1xf32> to vector<2x1xf32>
    %367 = vector.broadcast %366 : vector<2x1xf32> to vector<2x32xf32>
    %368 = arith.select %35, %365, %367 : vector<2x32xi1>, vector<2x32xf32>
    %369 = arith.mulf %368, %352 : vector<2x32xf32>
    %cst_67 = arith.constant 1.000000e+00 : f32
    %370 = vector.broadcast %cst_67 : f32 to vector<2x32xf32>
    %371 = arith.subf %370, %368 : vector<2x32xf32>
    %372 = arith.mulf %371, %325 : vector<2x32xf32>
    %373 = arith.addf %369, %372 : vector<2x32xf32>
    %374 = arith.mulf %368, %355 : vector<2x32xf32>
    %cst_68 = arith.constant 1.000000e+00 : f32
    %375 = vector.broadcast %cst_68 : f32 to vector<2x32xf32>
    %376 = arith.subf %375, %368 : vector<2x32xf32>
    %377 = arith.mulf %376, %330 : vector<2x32xf32>
    %378 = arith.addf %374, %377 : vector<2x32xf32>
    %379 = vector.extract_strided_slice %378 {offsets = [0, 0], sizes = [2, 16], strides = [1, 1]} : vector<2x32xf32> to vector<2x16xf32>
    %c12_69 = arith.constant 12 : index
    %c0_70 = arith.constant 0 : index
    %380 = vector.load %arg7[%c12_69, %c0_70] : memref<16x32xf32, #tpu.memory_space<vmem>>, vector<2x16xf32>
    tpu.vector_store %arg7[%c12_69, %c0_70], %379 {strides = array<i32>} : memref<16x32xf32, #tpu.memory_space<vmem>>, vector<2x16xf32>,
    %381 = vector.extract_strided_slice %378 {offsets = [0, 16], sizes = [2, 16], strides = [1, 1]} : vector<2x32xf32> to vector<2x16xf32>
    %c2_71 = arith.constant 2 : index
    %c16_72 = arith.constant 16 : index
    %382 = vector.load %arg7[%c2_71, %c16_72] : memref<16x32xf32, #tpu.memory_space<vmem>>, vector<2x16xf32>
    tpu.vector_store %arg7[%c2_71, %c16_72], %381 {strides = array<i32>} : memref<16x32xf32, #tpu.memory_space<vmem>>, vector<2x16xf32>,
    %383 = vector.extract_strided_slice %42 {offsets = [0, 0], sizes = [2, 128], strides = [1, 1]} : vector<16x128xf32> to vector<2x128xf32>
    %384 = vector.extract_strided_slice %42 {offsets = [14, 0], sizes = [2, 128], strides = [1, 1]} : vector<16x128xf32> to vector<2x128xf32>
    %385 = arith.select %32, %383, %384 : vector<2x128xi1>, vector<2x128xf32>
    %cst_73 = arith.constant dense<0.000000e+00> : vector<2x128xf32>
    %386 = tpu.matmul %378, %44, %cst_73 {dimension_numbers = #tpu.dot_dimension_numbers<[1], [0], [0], [1], [0, 0, 1, 1], [], []>} : vector<2x32xf32>, vector<32x128xf32>, vector<2x128xf32> -> vector<2x128xf32>
    %387 = arith.addf %385, %386 : vector<2x128xf32>
    %388 = vector.extract_strided_slice %387 {offsets = [0, 0], sizes = [2, 96], strides = [1, 1]} : vector<2x128xf32> to vector<2x96xf32>
    %389 = arith.negf %388 : vector<2x96xf32>
    %390 = math.exp %389 : vector<2x96xf32>
    %cst_74 = arith.constant 1.000000e+00 : f32
    %391 = vector.broadcast %cst_74 : f32 to vector<2x96xf32>
    %392 = arith.addf %391, %390 : vector<2x96xf32>
    %393 = arith.divf %391, %392 : vector<2x96xf32>
    %394 = vector.extract_strided_slice %387 {offsets = [0, 96], sizes = [2, 32], strides = [1, 1]} : vector<2x128xf32> to vector<2x32xf32>
    %395 = math.tanh %394 : vector<2x32xf32>
    %396 = vector.extract_strided_slice %393 {offsets = [0, 32], sizes = [2, 32], strides = [1, 1]} : vector<2x96xf32> to vector<2x32xf32>
    %397 = arith.mulf %396, %373 : vector<2x32xf32>
    %398 = vector.extract_strided_slice %393 {offsets = [0, 0], sizes = [2, 32], strides = [1, 1]} : vector<2x96xf32> to vector<2x32xf32>
    %399 = arith.mulf %398, %395 : vector<2x32xf32>
    %400 = arith.addf %397, %399 : vector<2x32xf32>
    %401 = vector.extract_strided_slice %393 {offsets = [0, 64], sizes = [2, 32], strides = [1, 1]} : vector<2x96xf32> to vector<2x32xf32>
    %402 = math.tanh %400 : vector<2x32xf32>
    %403 = arith.mulf %401, %402 : vector<2x32xf32>
    %c7_i32_75 = arith.constant 7 : i32
    %404 = vector.broadcast %c7_i32_75 : i32 to vector<2x1xi32>
    %405 = arith.cmpi sgt, %27, %404 : vector<2x1xi32>
    %406 = arith.extui %405 : vector<2x1xi1> to vector<2x1xi32>
    %407 = arith.sitofp %406 : vector<2x1xi32> to vector<2x1xf32>
    %c0_i32_76 = arith.constant 0 : i32
    %408 = vector.broadcast %c0_i32_76 : i32 to vector<2x1xi32>
    %409 = arith.cmpi sgt, %27, %408 : vector<2x1xi32>
    %410 = arith.extui %409 : vector<2x1xi1> to vector<2x1xi32>
    %411 = arith.sitofp %410 : vector<2x1xi32> to vector<2x1xf32>
    %412 = vector.shape_cast %407 : vector<2x1xf32> to vector<2x1xf32>
    %413 = vector.broadcast %412 : vector<2x1xf32> to vector<2x32xf32>
    %414 = vector.shape_cast %411 : vector<2x1xf32> to vector<2x1xf32>
    %415 = vector.broadcast %414 : vector<2x1xf32> to vector<2x32xf32>
    %416 = arith.select %35, %413, %415 : vector<2x32xi1>, vector<2x32xf32>
    %417 = arith.mulf %416, %403 : vector<2x32xf32>
    %cst_77 = arith.constant 1.000000e+00 : f32
    %418 = vector.broadcast %cst_77 : f32 to vector<2x32xf32>
    %419 = arith.subf %418, %416 : vector<2x32xf32>
    %420 = arith.mulf %419, %378 : vector<2x32xf32>
    %421 = arith.addf %417, %420 : vector<2x32xf32>
    %422 = vector.extract_strided_slice %421 {offsets = [0, 0], sizes = [2, 16], strides = [1, 1]} : vector<2x32xf32> to vector<2x16xf32>
    %c14_78 = arith.constant 14 : index
    %c0_79 = arith.constant 0 : index
    %423 = vector.load %arg7[%c14_78, %c0_79] : memref<16x32xf32, #tpu.memory_space<vmem>>, vector<2x16xf32>
    tpu.vector_store %arg7[%c14_78, %c0_79], %422 {strides = array<i32>} : memref<16x32xf32, #tpu.memory_space<vmem>>, vector<2x16xf32>,
    %424 = vector.extract_strided_slice %421 {offsets = [0, 16], sizes = [2, 16], strides = [1, 1]} : vector<2x32xf32> to vector<2x16xf32>
    %c0_80 = arith.constant 0 : index
    %c16_81 = arith.constant 16 : index
    %425 = vector.load %arg7[%c0_80, %c16_81] : memref<16x32xf32, #tpu.memory_space<vmem>>, vector<2x16xf32>
    tpu.vector_store %arg7[%c0_80, %c16_81], %424 {strides = array<i32>} : memref<16x32xf32, #tpu.memory_space<vmem>>, vector<2x16xf32>,
    %c0_82 = arith.constant 0 : index
    %c0_83 = arith.constant 0 : index
    %426 = vector.load %arg7[%c0_82, %c0_83] : memref<16x32xf32, #tpu.memory_space<vmem>>, vector<16x32xf32>
    %c1 = arith.constant 1 : index
    %c0_84 = arith.constant 0 : index
    %c0_85 = arith.constant 0 : index
    %427 = vector.load %arg3[%c1, %c0_84, %c0_85] : memref<2x32x128xf32, #tpu.memory_space<vmem>>, vector<1x32x128xf32>
    %428 = vector.shape_cast %427 : vector<1x32x128xf32> to vector<32x128xf32>
    %cst_86 = arith.constant dense<0.000000e+00> : vector<16x128xf32>
    %429 = tpu.matmul %426, %428, %cst_86 {dimension_numbers = #tpu.dot_dimension_numbers<[1], [0], [0], [1], [0, 0, 1, 1], [], []>} : vector<16x32xf32>, vector<32x128xf32>, vector<16x128xf32> -> vector<16x128xf32>
    %c1_87 = arith.constant 1 : index
    %c0_88 = arith.constant 0 : index
    %c0_89 = arith.constant 0 : index
    %430 = vector.load %arg5[%c1_87, %c0_88, %c0_89] : memref<2x1x128xf32, #tpu.memory_space<vmem>>, vector<1x1x128xf32>
    %431 = vector.shape_cast %430 : vector<1x1x128xf32> to vector<1x128xf32>
    %432 = vector.broadcast %431 : vector<1x128xf32> to vector<16x128xf32>
    %433 = arith.addf %429, %432 : vector<16x128xf32>
    %c1_90 = arith.constant 1 : index
    %c0_91 = arith.constant 0 : index
    %c0_92 = arith.constant 0 : index
    %434 = vector.load %arg4[%c1_90, %c0_91, %c0_92] : memref<2x32x128xf32, #tpu.memory_space<vmem>>, vector<1x32x128xf32>
    %435 = vector.shape_cast %434 : vector<1x32x128xf32> to vector<32x128xf32>
    %cst_93 = arith.constant 0.000000e+00 : f32
    %436 = vector.broadcast %cst_93 : f32 to vector<2x32xf32>
    %cst_94 = arith.constant 0.000000e+00 : f32
    %437 = vector.broadcast %cst_94 : f32 to vector<2x32xf32>
    %438 = vector.extract_strided_slice %433 {offsets = [14, 0], sizes = [2, 128], strides = [1, 1]} : vector<16x128xf32> to vector<2x128xf32>
    %439 = vector.extract_strided_slice %433 {offsets = [0, 0], sizes = [2, 128], strides = [1, 1]} : vector<16x128xf32> to vector<2x128xf32>
    %440 = arith.select %32, %438, %439 : vector<2x128xi1>, vector<2x128xf32>
    %cst_95 = arith.constant dense<0.000000e+00> : vector<2x128xf32>
    %441 = tpu.matmul %436, %435, %cst_95 {dimension_numbers = #tpu.dot_dimension_numbers<[1], [0], [0], [1], [0, 0, 1, 1], [], []>} : vector<2x32xf32>, vector<32x128xf32>, vector<2x128xf32> -> vector<2x128xf32>
    %442 = arith.addf %440, %441 : vector<2x128xf32>
    %443 = vector.extract_strided_slice %442 {offsets = [0, 0], sizes = [2, 96], strides = [1, 1]} : vector<2x128xf32> to vector<2x96xf32>
    %444 = arith.negf %443 : vector<2x96xf32>
    %445 = math.exp %444 : vector<2x96xf32>
    %cst_96 = arith.constant 1.000000e+00 : f32
    %446 = vector.broadcast %cst_96 : f32 to vector<2x96xf32>
    %447 = arith.addf %446, %445 : vector<2x96xf32>
    %448 = arith.divf %446, %447 : vector<2x96xf32>
    %449 = vector.extract_strided_slice %442 {offsets = [0, 96], sizes = [2, 32], strides = [1, 1]} : vector<2x128xf32> to vector<2x32xf32>
    %450 = math.tanh %449 : vector<2x32xf32>
    %451 = vector.extract_strided_slice %448 {offsets = [0, 32], sizes = [2, 32], strides = [1, 1]} : vector<2x96xf32> to vector<2x32xf32>
    %452 = arith.mulf %451, %437 : vector<2x32xf32>
    %453 = vector.extract_strided_slice %448 {offsets = [0, 0], sizes = [2, 32], strides = [1, 1]} : vector<2x96xf32> to vector<2x32xf32>
    %454 = arith.mulf %453, %450 : vector<2x32xf32>
    %455 = arith.addf %452, %454 : vector<2x32xf32>
    %456 = vector.extract_strided_slice %448 {offsets = [0, 64], sizes = [2, 32], strides = [1, 1]} : vector<2x96xf32> to vector<2x32xf32>
    %457 = math.tanh %455 : vector<2x32xf32>
    %458 = arith.mulf %456, %457 : vector<2x32xf32>
    %c0_i32_97 = arith.constant 0 : i32
    %459 = vector.broadcast %c0_i32_97 : i32 to vector<2x1xi32>
    %460 = arith.cmpi sgt, %27, %459 : vector<2x1xi32>
    %461 = arith.extui %460 : vector<2x1xi1> to vector<2x1xi32>
    %462 = arith.sitofp %461 : vector<2x1xi32> to vector<2x1xf32>
    %c7_i32_98 = arith.constant 7 : i32
    %463 = vector.broadcast %c7_i32_98 : i32 to vector<2x1xi32>
    %464 = arith.cmpi sgt, %27, %463 : vector<2x1xi32>
    %465 = arith.extui %464 : vector<2x1xi1> to vector<2x1xi32>
    %466 = arith.sitofp %465 : vector<2x1xi32> to vector<2x1xf32>
    %467 = vector.shape_cast %462 : vector<2x1xf32> to vector<2x1xf32>
    %468 = vector.broadcast %467 : vector<2x1xf32> to vector<2x32xf32>
    %469 = vector.shape_cast %466 : vector<2x1xf32> to vector<2x1xf32>
    %470 = vector.broadcast %469 : vector<2x1xf32> to vector<2x32xf32>
    %471 = arith.select %35, %468, %470 : vector<2x32xi1>, vector<2x32xf32>
    %472 = arith.mulf %471, %455 : vector<2x32xf32>
    %cst_99 = arith.constant 1.000000e+00 : f32
    %473 = vector.broadcast %cst_99 : f32 to vector<2x32xf32>
    %474 = arith.subf %473, %471 : vector<2x32xf32>
    %475 = arith.mulf %474, %437 : vector<2x32xf32>
    %476 = arith.addf %472, %475 : vector<2x32xf32>
    %477 = arith.mulf %471, %458 : vector<2x32xf32>
    %cst_100 = arith.constant 1.000000e+00 : f32
    %478 = vector.broadcast %cst_100 : f32 to vector<2x32xf32>
    %479 = arith.subf %478, %471 : vector<2x32xf32>
    %480 = arith.mulf %479, %436 : vector<2x32xf32>
    %481 = arith.addf %477, %480 : vector<2x32xf32>
    %482 = vector.extract_strided_slice %481 {offsets = [0, 0], sizes = [2, 16], strides = [1, 1]} : vector<2x32xf32> to vector<2x16xf32>
    %c0_101 = arith.constant 0 : index
    %c0_102 = arith.constant 0 : index
    %483 = vector.load %arg6[%c0_101, %c0_102] : memref<2x256xf32, #tpu.memory_space<vmem>>, vector<2x16xf32>
    tpu.vector_store %arg6[%c0_101, %c0_102], %482 {strides = array<i32>} : memref<2x256xf32, #tpu.memory_space<vmem>>, vector<2x16xf32>,
    %484 = vector.extract_strided_slice %481 {offsets = [0, 16], sizes = [2, 16], strides = [1, 1]} : vector<2x32xf32> to vector<2x16xf32>
    %c0_103 = arith.constant 0 : index
    %c240 = arith.constant 240 : index
    %485 = vector.load %arg6[%c0_103, %c240] : memref<2x256xf32, #tpu.memory_space<vmem>>, vector<2x16xf32>
    tpu.vector_store %arg6[%c0_103, %c240], %484 {strides = array<i32>} : memref<2x256xf32, #tpu.memory_space<vmem>>, vector<2x16xf32>,
    %486 = vector.extract_strided_slice %433 {offsets = [12, 0], sizes = [2, 128], strides = [1, 1]} : vector<16x128xf32> to vector<2x128xf32>
    %487 = vector.extract_strided_slice %433 {offsets = [2, 0], sizes = [2, 128], strides = [1, 1]} : vector<16x128xf32> to vector<2x128xf32>
    %488 = arith.select %32, %486, %487 : vector<2x128xi1>, vector<2x128xf32>
    %cst_104 = arith.constant dense<0.000000e+00> : vector<2x128xf32>
    %489 = tpu.matmul %481, %435, %cst_104 {dimension_numbers = #tpu.dot_dimension_numbers<[1], [0], [0], [1], [0, 0, 1, 1], [], []>} : vector<2x32xf32>, vector<32x128xf32>, vector<2x128xf32> -> vector<2x128xf32>
    %490 = arith.addf %488, %489 : vector<2x128xf32>
    %491 = vector.extract_strided_slice %490 {offsets = [0, 0], sizes = [2, 96], strides = [1, 1]} : vector<2x128xf32> to vector<2x96xf32>
    %492 = arith.negf %491 : vector<2x96xf32>
    %493 = math.exp %492 : vector<2x96xf32>
    %cst_105 = arith.constant 1.000000e+00 : f32
    %494 = vector.broadcast %cst_105 : f32 to vector<2x96xf32>
    %495 = arith.addf %494, %493 : vector<2x96xf32>
    %496 = arith.divf %494, %495 : vector<2x96xf32>
    %497 = vector.extract_strided_slice %490 {offsets = [0, 96], sizes = [2, 32], strides = [1, 1]} : vector<2x128xf32> to vector<2x32xf32>
    %498 = math.tanh %497 : vector<2x32xf32>
    %499 = vector.extract_strided_slice %496 {offsets = [0, 32], sizes = [2, 32], strides = [1, 1]} : vector<2x96xf32> to vector<2x32xf32>
    %500 = arith.mulf %499, %476 : vector<2x32xf32>
    %501 = vector.extract_strided_slice %496 {offsets = [0, 0], sizes = [2, 32], strides = [1, 1]} : vector<2x96xf32> to vector<2x32xf32>
    %502 = arith.mulf %501, %498 : vector<2x32xf32>
    %503 = arith.addf %500, %502 : vector<2x32xf32>
    %504 = vector.extract_strided_slice %496 {offsets = [0, 64], sizes = [2, 32], strides = [1, 1]} : vector<2x96xf32> to vector<2x32xf32>
    %505 = math.tanh %503 : vector<2x32xf32>
    %506 = arith.mulf %504, %505 : vector<2x32xf32>
    %c1_i32_106 = arith.constant 1 : i32
    %507 = vector.broadcast %c1_i32_106 : i32 to vector<2x1xi32>
    %508 = arith.cmpi sgt, %27, %507 : vector<2x1xi32>
    %509 = arith.extui %508 : vector<2x1xi1> to vector<2x1xi32>
    %510 = arith.sitofp %509 : vector<2x1xi32> to vector<2x1xf32>
    %c6_i32_107 = arith.constant 6 : i32
    %511 = vector.broadcast %c6_i32_107 : i32 to vector<2x1xi32>
    %512 = arith.cmpi sgt, %27, %511 : vector<2x1xi32>
    %513 = arith.extui %512 : vector<2x1xi1> to vector<2x1xi32>
    %514 = arith.sitofp %513 : vector<2x1xi32> to vector<2x1xf32>
    %515 = vector.shape_cast %510 : vector<2x1xf32> to vector<2x1xf32>
    %516 = vector.broadcast %515 : vector<2x1xf32> to vector<2x32xf32>
    %517 = vector.shape_cast %514 : vector<2x1xf32> to vector<2x1xf32>
    %518 = vector.broadcast %517 : vector<2x1xf32> to vector<2x32xf32>
    %519 = arith.select %35, %516, %518 : vector<2x32xi1>, vector<2x32xf32>
    %520 = arith.mulf %519, %503 : vector<2x32xf32>
    %cst_108 = arith.constant 1.000000e+00 : f32
    %521 = vector.broadcast %cst_108 : f32 to vector<2x32xf32>
    %522 = arith.subf %521, %519 : vector<2x32xf32>
    %523 = arith.mulf %522, %476 : vector<2x32xf32>
    %524 = arith.addf %520, %523 : vector<2x32xf32>
    %525 = arith.mulf %519, %506 : vector<2x32xf32>
    %cst_109 = arith.constant 1.000000e+00 : f32
    %526 = vector.broadcast %cst_109 : f32 to vector<2x32xf32>
    %527 = arith.subf %526, %519 : vector<2x32xf32>
    %528 = arith.mulf %527, %481 : vector<2x32xf32>
    %529 = arith.addf %525, %528 : vector<2x32xf32>
    %530 = vector.extract_strided_slice %529 {offsets = [0, 0], sizes = [2, 16], strides = [1, 1]} : vector<2x32xf32> to vector<2x16xf32>
    %c0_110 = arith.constant 0 : index
    %c32 = arith.constant 32 : index
    %531 = vector.load %arg6[%c0_110, %c32] : memref<2x256xf32, #tpu.memory_space<vmem>>, vector<2x16xf32>
    tpu.vector_store %arg6[%c0_110, %c32], %530 {strides = array<i32>} : memref<2x256xf32, #tpu.memory_space<vmem>>, vector<2x16xf32>,
    %532 = vector.extract_strided_slice %529 {offsets = [0, 16], sizes = [2, 16], strides = [1, 1]} : vector<2x32xf32> to vector<2x16xf32>
    %c0_111 = arith.constant 0 : index
    %c208 = arith.constant 208 : index
    %533 = vector.load %arg6[%c0_111, %c208] : memref<2x256xf32, #tpu.memory_space<vmem>>, vector<2x16xf32>
    tpu.vector_store %arg6[%c0_111, %c208], %532 {strides = array<i32>} : memref<2x256xf32, #tpu.memory_space<vmem>>, vector<2x16xf32>,
    %534 = vector.extract_strided_slice %433 {offsets = [10, 0], sizes = [2, 128], strides = [1, 1]} : vector<16x128xf32> to vector<2x128xf32>
    %535 = vector.extract_strided_slice %433 {offsets = [4, 0], sizes = [2, 128], strides = [1, 1]} : vector<16x128xf32> to vector<2x128xf32>
    %536 = arith.select %32, %534, %535 : vector<2x128xi1>, vector<2x128xf32>
    %cst_112 = arith.constant dense<0.000000e+00> : vector<2x128xf32>
    %537 = tpu.matmul %529, %435, %cst_112 {dimension_numbers = #tpu.dot_dimension_numbers<[1], [0], [0], [1], [0, 0, 1, 1], [], []>} : vector<2x32xf32>, vector<32x128xf32>, vector<2x128xf32> -> vector<2x128xf32>
    %538 = arith.addf %536, %537 : vector<2x128xf32>
    %539 = vector.extract_strided_slice %538 {offsets = [0, 0], sizes = [2, 96], strides = [1, 1]} : vector<2x128xf32> to vector<2x96xf32>
    %540 = arith.negf %539 : vector<2x96xf32>
    %541 = math.exp %540 : vector<2x96xf32>
    %cst_113 = arith.constant 1.000000e+00 : f32
    %542 = vector.broadcast %cst_113 : f32 to vector<2x96xf32>
    %543 = arith.addf %542, %541 : vector<2x96xf32>
    %544 = arith.divf %542, %543 : vector<2x96xf32>
    %545 = vector.extract_strided_slice %538 {offsets = [0, 96], sizes = [2, 32], strides = [1, 1]} : vector<2x128xf32> to vector<2x32xf32>
    %546 = math.tanh %545 : vector<2x32xf32>
    %547 = vector.extract_strided_slice %544 {offsets = [0, 32], sizes = [2, 32], strides = [1, 1]} : vector<2x96xf32> to vector<2x32xf32>
    %548 = arith.mulf %547, %524 : vector<2x32xf32>
    %549 = vector.extract_strided_slice %544 {offsets = [0, 0], sizes = [2, 32], strides = [1, 1]} : vector<2x96xf32> to vector<2x32xf32>
    %550 = arith.mulf %549, %546 : vector<2x32xf32>
    %551 = arith.addf %548, %550 : vector<2x32xf32>
    %552 = vector.extract_strided_slice %544 {offsets = [0, 64], sizes = [2, 32], strides = [1, 1]} : vector<2x96xf32> to vector<2x32xf32>
    %553 = math.tanh %551 : vector<2x32xf32>
    %554 = arith.mulf %552, %553 : vector<2x32xf32>
    %c2_i32_114 = arith.constant 2 : i32
    %555 = vector.broadcast %c2_i32_114 : i32 to vector<2x1xi32>
    %556 = arith.cmpi sgt, %27, %555 : vector<2x1xi32>
    %557 = arith.extui %556 : vector<2x1xi1> to vector<2x1xi32>
    %558 = arith.sitofp %557 : vector<2x1xi32> to vector<2x1xf32>
    %c5_i32_115 = arith.constant 5 : i32
    %559 = vector.broadcast %c5_i32_115 : i32 to vector<2x1xi32>
    %560 = arith.cmpi sgt, %27, %559 : vector<2x1xi32>
    %561 = arith.extui %560 : vector<2x1xi1> to vector<2x1xi32>
    %562 = arith.sitofp %561 : vector<2x1xi32> to vector<2x1xf32>
    %563 = vector.shape_cast %558 : vector<2x1xf32> to vector<2x1xf32>
    %564 = vector.broadcast %563 : vector<2x1xf32> to vector<2x32xf32>
    %565 = vector.shape_cast %562 : vector<2x1xf32> to vector<2x1xf32>
    %566 = vector.broadcast %565 : vector<2x1xf32> to vector<2x32xf32>
    %567 = arith.select %35, %564, %566 : vector<2x32xi1>, vector<2x32xf32>
    %568 = arith.mulf %567, %551 : vector<2x32xf32>
    %cst_116 = arith.constant 1.000000e+00 : f32
    %569 = vector.broadcast %cst_116 : f32 to vector<2x32xf32>
    %570 = arith.subf %569, %567 : vector<2x32xf32>
    %571 = arith.mulf %570, %524 : vector<2x32xf32>
    %572 = arith.addf %568, %571 : vector<2x32xf32>
    %573 = arith.mulf %567, %554 : vector<2x32xf32>
    %cst_117 = arith.constant 1.000000e+00 : f32
    %574 = vector.broadcast %cst_117 : f32 to vector<2x32xf32>
    %575 = arith.subf %574, %567 : vector<2x32xf32>
    %576 = arith.mulf %575, %529 : vector<2x32xf32>
    %577 = arith.addf %573, %576 : vector<2x32xf32>
    %578 = vector.extract_strided_slice %577 {offsets = [0, 0], sizes = [2, 16], strides = [1, 1]} : vector<2x32xf32> to vector<2x16xf32>
    %c0_118 = arith.constant 0 : index
    %c64 = arith.constant 64 : index
    %579 = vector.load %arg6[%c0_118, %c64] : memref<2x256xf32, #tpu.memory_space<vmem>>, vector<2x16xf32>
    tpu.vector_store %arg6[%c0_118, %c64], %578 {strides = array<i32>} : memref<2x256xf32, #tpu.memory_space<vmem>>, vector<2x16xf32>,
    %580 = vector.extract_strided_slice %577 {offsets = [0, 16], sizes = [2, 16], strides = [1, 1]} : vector<2x32xf32> to vector<2x16xf32>
    %c0_119 = arith.constant 0 : index
    %c176 = arith.constant 176 : index
    %581 = vector.load %arg6[%c0_119, %c176] : memref<2x256xf32, #tpu.memory_space<vmem>>, vector<2x16xf32>
    tpu.vector_store %arg6[%c0_119, %c176], %580 {strides = array<i32>} : memref<2x256xf32, #tpu.memory_space<vmem>>, vector<2x16xf32>,
    %582 = vector.extract_strided_slice %433 {offsets = [8, 0], sizes = [2, 128], strides = [1, 1]} : vector<16x128xf32> to vector<2x128xf32>
    %583 = vector.extract_strided_slice %433 {offsets = [6, 0], sizes = [2, 128], strides = [1, 1]} : vector<16x128xf32> to vector<2x128xf32>
    %584 = arith.select %32, %582, %583 : vector<2x128xi1>, vector<2x128xf32>
    %cst_120 = arith.constant dense<0.000000e+00> : vector<2x128xf32>
    %585 = tpu.matmul %577, %435, %cst_120 {dimension_numbers = #tpu.dot_dimension_numbers<[1], [0], [0], [1], [0, 0, 1, 1], [], []>} : vector<2x32xf32>, vector<32x128xf32>, vector<2x128xf32> -> vector<2x128xf32>
    %586 = arith.addf %584, %585 : vector<2x128xf32>
    %587 = vector.extract_strided_slice %586 {offsets = [0, 0], sizes = [2, 96], strides = [1, 1]} : vector<2x128xf32> to vector<2x96xf32>
    %588 = arith.negf %587 : vector<2x96xf32>
    %589 = math.exp %588 : vector<2x96xf32>
    %cst_121 = arith.constant 1.000000e+00 : f32
    %590 = vector.broadcast %cst_121 : f32 to vector<2x96xf32>
    %591 = arith.addf %590, %589 : vector<2x96xf32>
    %592 = arith.divf %590, %591 : vector<2x96xf32>
    %593 = vector.extract_strided_slice %586 {offsets = [0, 96], sizes = [2, 32], strides = [1, 1]} : vector<2x128xf32> to vector<2x32xf32>
    %594 = math.tanh %593 : vector<2x32xf32>
    %595 = vector.extract_strided_slice %592 {offsets = [0, 32], sizes = [2, 32], strides = [1, 1]} : vector<2x96xf32> to vector<2x32xf32>
    %596 = arith.mulf %595, %572 : vector<2x32xf32>
    %597 = vector.extract_strided_slice %592 {offsets = [0, 0], sizes = [2, 32], strides = [1, 1]} : vector<2x96xf32> to vector<2x32xf32>
    %598 = arith.mulf %597, %594 : vector<2x32xf32>
    %599 = arith.addf %596, %598 : vector<2x32xf32>
    %600 = vector.extract_strided_slice %592 {offsets = [0, 64], sizes = [2, 32], strides = [1, 1]} : vector<2x96xf32> to vector<2x32xf32>
    %601 = math.tanh %599 : vector<2x32xf32>
    %602 = arith.mulf %600, %601 : vector<2x32xf32>
    %c3_i32_122 = arith.constant 3 : i32
    %603 = vector.broadcast %c3_i32_122 : i32 to vector<2x1xi32>
    %604 = arith.cmpi sgt, %27, %603 : vector<2x1xi32>
    %605 = arith.extui %604 : vector<2x1xi1> to vector<2x1xi32>
    %606 = arith.sitofp %605 : vector<2x1xi32> to vector<2x1xf32>
    %c4_i32_123 = arith.constant 4 : i32
    %607 = vector.broadcast %c4_i32_123 : i32 to vector<2x1xi32>
    %608 = arith.cmpi sgt, %27, %607 : vector<2x1xi32>
    %609 = arith.extui %608 : vector<2x1xi1> to vector<2x1xi32>
    %610 = arith.sitofp %609 : vector<2x1xi32> to vector<2x1xf32>
    %611 = vector.shape_cast %606 : vector<2x1xf32> to vector<2x1xf32>
    %612 = vector.broadcast %611 : vector<2x1xf32> to vector<2x32xf32>
    %613 = vector.shape_cast %610 : vector<2x1xf32> to vector<2x1xf32>
    %614 = vector.broadcast %613 : vector<2x1xf32> to vector<2x32xf32>
    %615 = arith.select %35, %612, %614 : vector<2x32xi1>, vector<2x32xf32>
    %616 = arith.mulf %615, %599 : vector<2x32xf32>
    %cst_124 = arith.constant 1.000000e+00 : f32
    %617 = vector.broadcast %cst_124 : f32 to vector<2x32xf32>
    %618 = arith.subf %617, %615 : vector<2x32xf32>
    %619 = arith.mulf %618, %572 : vector<2x32xf32>
    %620 = arith.addf %616, %619 : vector<2x32xf32>
    %621 = arith.mulf %615, %602 : vector<2x32xf32>
    %cst_125 = arith.constant 1.000000e+00 : f32
    %622 = vector.broadcast %cst_125 : f32 to vector<2x32xf32>
    %623 = arith.subf %622, %615 : vector<2x32xf32>
    %624 = arith.mulf %623, %577 : vector<2x32xf32>
    %625 = arith.addf %621, %624 : vector<2x32xf32>
    %626 = vector.extract_strided_slice %625 {offsets = [0, 0], sizes = [2, 16], strides = [1, 1]} : vector<2x32xf32> to vector<2x16xf32>
    %c0_126 = arith.constant 0 : index
    %c96 = arith.constant 96 : index
    %627 = vector.load %arg6[%c0_126, %c96] : memref<2x256xf32, #tpu.memory_space<vmem>>, vector<2x16xf32>
    tpu.vector_store %arg6[%c0_126, %c96], %626 {strides = array<i32>} : memref<2x256xf32, #tpu.memory_space<vmem>>, vector<2x16xf32>,
    %628 = vector.extract_strided_slice %625 {offsets = [0, 16], sizes = [2, 16], strides = [1, 1]} : vector<2x32xf32> to vector<2x16xf32>
    %c0_127 = arith.constant 0 : index
    %c144 = arith.constant 144 : index
    %629 = vector.load %arg6[%c0_127, %c144] : memref<2x256xf32, #tpu.memory_space<vmem>>, vector<2x16xf32>
    tpu.vector_store %arg6[%c0_127, %c144], %628 {strides = array<i32>} : memref<2x256xf32, #tpu.memory_space<vmem>>, vector<2x16xf32>,
    %630 = vector.extract_strided_slice %433 {offsets = [6, 0], sizes = [2, 128], strides = [1, 1]} : vector<16x128xf32> to vector<2x128xf32>
    %631 = vector.extract_strided_slice %433 {offsets = [8, 0], sizes = [2, 128], strides = [1, 1]} : vector<16x128xf32> to vector<2x128xf32>
    %632 = arith.select %32, %630, %631 : vector<2x128xi1>, vector<2x128xf32>
    %cst_128 = arith.constant dense<0.000000e+00> : vector<2x128xf32>
    %633 = tpu.matmul %625, %435, %cst_128 {dimension_numbers = #tpu.dot_dimension_numbers<[1], [0], [0], [1], [0, 0, 1, 1], [], []>} : vector<2x32xf32>, vector<32x128xf32>, vector<2x128xf32> -> vector<2x128xf32>
    %634 = arith.addf %632, %633 : vector<2x128xf32>
    %635 = vector.extract_strided_slice %634 {offsets = [0, 0], sizes = [2, 96], strides = [1, 1]} : vector<2x128xf32> to vector<2x96xf32>
    %636 = arith.negf %635 : vector<2x96xf32>
    %637 = math.exp %636 : vector<2x96xf32>
    %cst_129 = arith.constant 1.000000e+00 : f32
    %638 = vector.broadcast %cst_129 : f32 to vector<2x96xf32>
    %639 = arith.addf %638, %637 : vector<2x96xf32>
    %640 = arith.divf %638, %639 : vector<2x96xf32>
    %641 = vector.extract_strided_slice %634 {offsets = [0, 96], sizes = [2, 32], strides = [1, 1]} : vector<2x128xf32> to vector<2x32xf32>
    %642 = math.tanh %641 : vector<2x32xf32>
    %643 = vector.extract_strided_slice %640 {offsets = [0, 32], sizes = [2, 32], strides = [1, 1]} : vector<2x96xf32> to vector<2x32xf32>
    %644 = arith.mulf %643, %620 : vector<2x32xf32>
    %645 = vector.extract_strided_slice %640 {offsets = [0, 0], sizes = [2, 32], strides = [1, 1]} : vector<2x96xf32> to vector<2x32xf32>
    %646 = arith.mulf %645, %642 : vector<2x32xf32>
    %647 = arith.addf %644, %646 : vector<2x32xf32>
    %648 = vector.extract_strided_slice %640 {offsets = [0, 64], sizes = [2, 32], strides = [1, 1]} : vector<2x96xf32> to vector<2x32xf32>
    %649 = math.tanh %647 : vector<2x32xf32>
    %650 = arith.mulf %648, %649 : vector<2x32xf32>
    %c4_i32_130 = arith.constant 4 : i32
    %651 = vector.broadcast %c4_i32_130 : i32 to vector<2x1xi32>
    %652 = arith.cmpi sgt, %27, %651 : vector<2x1xi32>
    %653 = arith.extui %652 : vector<2x1xi1> to vector<2x1xi32>
    %654 = arith.sitofp %653 : vector<2x1xi32> to vector<2x1xf32>
    %c3_i32_131 = arith.constant 3 : i32
    %655 = vector.broadcast %c3_i32_131 : i32 to vector<2x1xi32>
    %656 = arith.cmpi sgt, %27, %655 : vector<2x1xi32>
    %657 = arith.extui %656 : vector<2x1xi1> to vector<2x1xi32>
    %658 = arith.sitofp %657 : vector<2x1xi32> to vector<2x1xf32>
    %659 = vector.shape_cast %654 : vector<2x1xf32> to vector<2x1xf32>
    %660 = vector.broadcast %659 : vector<2x1xf32> to vector<2x32xf32>
    %661 = vector.shape_cast %658 : vector<2x1xf32> to vector<2x1xf32>
    %662 = vector.broadcast %661 : vector<2x1xf32> to vector<2x32xf32>
    %663 = arith.select %35, %660, %662 : vector<2x32xi1>, vector<2x32xf32>
    %664 = arith.mulf %663, %647 : vector<2x32xf32>
    %cst_132 = arith.constant 1.000000e+00 : f32
    %665 = vector.broadcast %cst_132 : f32 to vector<2x32xf32>
    %666 = arith.subf %665, %663 : vector<2x32xf32>
    %667 = arith.mulf %666, %620 : vector<2x32xf32>
    %668 = arith.addf %664, %667 : vector<2x32xf32>
    %669 = arith.mulf %663, %650 : vector<2x32xf32>
    %cst_133 = arith.constant 1.000000e+00 : f32
    %670 = vector.broadcast %cst_133 : f32 to vector<2x32xf32>
    %671 = arith.subf %670, %663 : vector<2x32xf32>
    %672 = arith.mulf %671, %625 : vector<2x32xf32>
    %673 = arith.addf %669, %672 : vector<2x32xf32>
    %674 = vector.extract_strided_slice %673 {offsets = [0, 0], sizes = [2, 16], strides = [1, 1]} : vector<2x32xf32> to vector<2x16xf32>
    %c0_134 = arith.constant 0 : index
    %c128 = arith.constant 128 : index
    %675 = vector.load %arg6[%c0_134, %c128] : memref<2x256xf32, #tpu.memory_space<vmem>>, vector<2x16xf32>
    tpu.vector_store %arg6[%c0_134, %c128], %674 {strides = array<i32>} : memref<2x256xf32, #tpu.memory_space<vmem>>, vector<2x16xf32>,
    %676 = vector.extract_strided_slice %673 {offsets = [0, 16], sizes = [2, 16], strides = [1, 1]} : vector<2x32xf32> to vector<2x16xf32>
    %c0_135 = arith.constant 0 : index
    %c112 = arith.constant 112 : index
    %677 = vector.load %arg6[%c0_135, %c112] : memref<2x256xf32, #tpu.memory_space<vmem>>, vector<2x16xf32>
    tpu.vector_store %arg6[%c0_135, %c112], %676 {strides = array<i32>} : memref<2x256xf32, #tpu.memory_space<vmem>>, vector<2x16xf32>,
    %678 = vector.extract_strided_slice %433 {offsets = [4, 0], sizes = [2, 128], strides = [1, 1]} : vector<16x128xf32> to vector<2x128xf32>
    %679 = vector.extract_strided_slice %433 {offsets = [10, 0], sizes = [2, 128], strides = [1, 1]} : vector<16x128xf32> to vector<2x128xf32>
    %680 = arith.select %32, %678, %679 : vector<2x128xi1>, vector<2x128xf32>
    %cst_136 = arith.constant dense<0.000000e+00> : vector<2x128xf32>
    %681 = tpu.matmul %673, %435, %cst_136 {dimension_numbers = #tpu.dot_dimension_numbers<[1], [0], [0], [1], [0, 0, 1, 1], [], []>} : vector<2x32xf32>, vector<32x128xf32>, vector<2x128xf32> -> vector<2x128xf32>
    %682 = arith.addf %680, %681 : vector<2x128xf32>
    %683 = vector.extract_strided_slice %682 {offsets = [0, 0], sizes = [2, 96], strides = [1, 1]} : vector<2x128xf32> to vector<2x96xf32>
    %684 = arith.negf %683 : vector<2x96xf32>
    %685 = math.exp %684 : vector<2x96xf32>
    %cst_137 = arith.constant 1.000000e+00 : f32
    %686 = vector.broadcast %cst_137 : f32 to vector<2x96xf32>
    %687 = arith.addf %686, %685 : vector<2x96xf32>
    %688 = arith.divf %686, %687 : vector<2x96xf32>
    %689 = vector.extract_strided_slice %682 {offsets = [0, 96], sizes = [2, 32], strides = [1, 1]} : vector<2x128xf32> to vector<2x32xf32>
    %690 = math.tanh %689 : vector<2x32xf32>
    %691 = vector.extract_strided_slice %688 {offsets = [0, 32], sizes = [2, 32], strides = [1, 1]} : vector<2x96xf32> to vector<2x32xf32>
    %692 = arith.mulf %691, %668 : vector<2x32xf32>
    %693 = vector.extract_strided_slice %688 {offsets = [0, 0], sizes = [2, 32], strides = [1, 1]} : vector<2x96xf32> to vector<2x32xf32>
    %694 = arith.mulf %693, %690 : vector<2x32xf32>
    %695 = arith.addf %692, %694 : vector<2x32xf32>
    %696 = vector.extract_strided_slice %688 {offsets = [0, 64], sizes = [2, 32], strides = [1, 1]} : vector<2x96xf32> to vector<2x32xf32>
    %697 = math.tanh %695 : vector<2x32xf32>
    %698 = arith.mulf %696, %697 : vector<2x32xf32>
    %c5_i32_138 = arith.constant 5 : i32
    %699 = vector.broadcast %c5_i32_138 : i32 to vector<2x1xi32>
    %700 = arith.cmpi sgt, %27, %699 : vector<2x1xi32>
    %701 = arith.extui %700 : vector<2x1xi1> to vector<2x1xi32>
    %702 = arith.sitofp %701 : vector<2x1xi32> to vector<2x1xf32>
    %c2_i32_139 = arith.constant 2 : i32
    %703 = vector.broadcast %c2_i32_139 : i32 to vector<2x1xi32>
    %704 = arith.cmpi sgt, %27, %703 : vector<2x1xi32>
    %705 = arith.extui %704 : vector<2x1xi1> to vector<2x1xi32>
    %706 = arith.sitofp %705 : vector<2x1xi32> to vector<2x1xf32>
    %707 = vector.shape_cast %702 : vector<2x1xf32> to vector<2x1xf32>
    %708 = vector.broadcast %707 : vector<2x1xf32> to vector<2x32xf32>
    %709 = vector.shape_cast %706 : vector<2x1xf32> to vector<2x1xf32>
    %710 = vector.broadcast %709 : vector<2x1xf32> to vector<2x32xf32>
    %711 = arith.select %35, %708, %710 : vector<2x32xi1>, vector<2x32xf32>
    %712 = arith.mulf %711, %695 : vector<2x32xf32>
    %cst_140 = arith.constant 1.000000e+00 : f32
    %713 = vector.broadcast %cst_140 : f32 to vector<2x32xf32>
    %714 = arith.subf %713, %711 : vector<2x32xf32>
    %715 = arith.mulf %714, %668 : vector<2x32xf32>
    %716 = arith.addf %712, %715 : vector<2x32xf32>
    %717 = arith.mulf %711, %698 : vector<2x32xf32>
    %cst_141 = arith.constant 1.000000e+00 : f32
    %718 = vector.broadcast %cst_141 : f32 to vector<2x32xf32>
    %719 = arith.subf %718, %711 : vector<2x32xf32>
    %720 = arith.mulf %719, %673 : vector<2x32xf32>
    %721 = arith.addf %717, %720 : vector<2x32xf32>
    %722 = vector.extract_strided_slice %721 {offsets = [0, 0], sizes = [2, 16], strides = [1, 1]} : vector<2x32xf32> to vector<2x16xf32>
    %c0_142 = arith.constant 0 : index
    %c160 = arith.constant 160 : index
    %723 = vector.load %arg6[%c0_142, %c160] : memref<2x256xf32, #tpu.memory_space<vmem>>, vector<2x16xf32>
    tpu.vector_store %arg6[%c0_142, %c160], %722 {strides = array<i32>} : memref<2x256xf32, #tpu.memory_space<vmem>>, vector<2x16xf32>,
    %724 = vector.extract_strided_slice %721 {offsets = [0, 16], sizes = [2, 16], strides = [1, 1]} : vector<2x32xf32> to vector<2x16xf32>
    %c0_143 = arith.constant 0 : index
    %c80 = arith.constant 80 : index
    %725 = vector.load %arg6[%c0_143, %c80] : memref<2x256xf32, #tpu.memory_space<vmem>>, vector<2x16xf32>
    tpu.vector_store %arg6[%c0_143, %c80], %724 {strides = array<i32>} : memref<2x256xf32, #tpu.memory_space<vmem>>, vector<2x16xf32>,
    %726 = vector.extract_strided_slice %433 {offsets = [2, 0], sizes = [2, 128], strides = [1, 1]} : vector<16x128xf32> to vector<2x128xf32>
    %727 = vector.extract_strided_slice %433 {offsets = [12, 0], sizes = [2, 128], strides = [1, 1]} : vector<16x128xf32> to vector<2x128xf32>
    %728 = arith.select %32, %726, %727 : vector<2x128xi1>, vector<2x128xf32>
    %cst_144 = arith.constant dense<0.000000e+00> : vector<2x128xf32>
    %729 = tpu.matmul %721, %435, %cst_144 {dimension_numbers = #tpu.dot_dimension_numbers<[1], [0], [0], [1], [0, 0, 1, 1], [], []>} : vector<2x32xf32>, vector<32x128xf32>, vector<2x128xf32> -> vector<2x128xf32>
    %730 = arith.addf %728, %729 : vector<2x128xf32>
    %731 = vector.extract_strided_slice %730 {offsets = [0, 0], sizes = [2, 96], strides = [1, 1]} : vector<2x128xf32> to vector<2x96xf32>
    %732 = arith.negf %731 : vector<2x96xf32>
    %733 = math.exp %732 : vector<2x96xf32>
    %cst_145 = arith.constant 1.000000e+00 : f32
    %734 = vector.broadcast %cst_145 : f32 to vector<2x96xf32>
    %735 = arith.addf %734, %733 : vector<2x96xf32>
    %736 = arith.divf %734, %735 : vector<2x96xf32>
    %737 = vector.extract_strided_slice %730 {offsets = [0, 96], sizes = [2, 32], strides = [1, 1]} : vector<2x128xf32> to vector<2x32xf32>
    %738 = math.tanh %737 : vector<2x32xf32>
    %739 = vector.extract_strided_slice %736 {offsets = [0, 32], sizes = [2, 32], strides = [1, 1]} : vector<2x96xf32> to vector<2x32xf32>
    %740 = arith.mulf %739, %716 : vector<2x32xf32>
    %741 = vector.extract_strided_slice %736 {offsets = [0, 0], sizes = [2, 32], strides = [1, 1]} : vector<2x96xf32> to vector<2x32xf32>
    %742 = arith.mulf %741, %738 : vector<2x32xf32>
    %743 = arith.addf %740, %742 : vector<2x32xf32>
    %744 = vector.extract_strided_slice %736 {offsets = [0, 64], sizes = [2, 32], strides = [1, 1]} : vector<2x96xf32> to vector<2x32xf32>
    %745 = math.tanh %743 : vector<2x32xf32>
    %746 = arith.mulf %744, %745 : vector<2x32xf32>
    %c6_i32_146 = arith.constant 6 : i32
    %747 = vector.broadcast %c6_i32_146 : i32 to vector<2x1xi32>
    %748 = arith.cmpi sgt, %27, %747 : vector<2x1xi32>
    %749 = arith.extui %748 : vector<2x1xi1> to vector<2x1xi32>
    %750 = arith.sitofp %749 : vector<2x1xi32> to vector<2x1xf32>
    %c1_i32_147 = arith.constant 1 : i32
    %751 = vector.broadcast %c1_i32_147 : i32 to vector<2x1xi32>
    %752 = arith.cmpi sgt, %27, %751 : vector<2x1xi32>
    %753 = arith.extui %752 : vector<2x1xi1> to vector<2x1xi32>
    %754 = arith.sitofp %753 : vector<2x1xi32> to vector<2x1xf32>
    %755 = vector.shape_cast %750 : vector<2x1xf32> to vector<2x1xf32>
    %756 = vector.broadcast %755 : vector<2x1xf32> to vector<2x32xf32>
    %757 = vector.shape_cast %754 : vector<2x1xf32> to vector<2x1xf32>
    %758 = vector.broadcast %757 : vector<2x1xf32> to vector<2x32xf32>
    %759 = arith.select %35, %756, %758 : vector<2x32xi1>, vector<2x32xf32>
    %760 = arith.mulf %759, %743 : vector<2x32xf32>
    %cst_148 = arith.constant 1.000000e+00 : f32
    %761 = vector.broadcast %cst_148 : f32 to vector<2x32xf32>
    %762 = arith.subf %761, %759 : vector<2x32xf32>
    %763 = arith.mulf %762, %716 : vector<2x32xf32>
    %764 = arith.addf %760, %763 : vector<2x32xf32>
    %765 = arith.mulf %759, %746 : vector<2x32xf32>
    %cst_149 = arith.constant 1.000000e+00 : f32
    %766 = vector.broadcast %cst_149 : f32 to vector<2x32xf32>
    %767 = arith.subf %766, %759 : vector<2x32xf32>
    %768 = arith.mulf %767, %721 : vector<2x32xf32>
    %769 = arith.addf %765, %768 : vector<2x32xf32>
    %770 = vector.extract_strided_slice %769 {offsets = [0, 0], sizes = [2, 16], strides = [1, 1]} : vector<2x32xf32> to vector<2x16xf32>
    %c0_150 = arith.constant 0 : index
    %c192 = arith.constant 192 : index
    %771 = vector.load %arg6[%c0_150, %c192] : memref<2x256xf32, #tpu.memory_space<vmem>>, vector<2x16xf32>
    tpu.vector_store %arg6[%c0_150, %c192], %770 {strides = array<i32>} : memref<2x256xf32, #tpu.memory_space<vmem>>, vector<2x16xf32>,
    %772 = vector.extract_strided_slice %769 {offsets = [0, 16], sizes = [2, 16], strides = [1, 1]} : vector<2x32xf32> to vector<2x16xf32>
    %c0_151 = arith.constant 0 : index
    %c48 = arith.constant 48 : index
    %773 = vector.load %arg6[%c0_151, %c48] : memref<2x256xf32, #tpu.memory_space<vmem>>, vector<2x16xf32>
    tpu.vector_store %arg6[%c0_151, %c48], %772 {strides = array<i32>} : memref<2x256xf32, #tpu.memory_space<vmem>>, vector<2x16xf32>,
    %774 = vector.extract_strided_slice %433 {offsets = [0, 0], sizes = [2, 128], strides = [1, 1]} : vector<16x128xf32> to vector<2x128xf32>
    %775 = vector.extract_strided_slice %433 {offsets = [14, 0], sizes = [2, 128], strides = [1, 1]} : vector<16x128xf32> to vector<2x128xf32>
    %776 = arith.select %32, %774, %775 : vector<2x128xi1>, vector<2x128xf32>
    %cst_152 = arith.constant dense<0.000000e+00> : vector<2x128xf32>
    %777 = tpu.matmul %769, %435, %cst_152 {dimension_numbers = #tpu.dot_dimension_numbers<[1], [0], [0], [1], [0, 0, 1, 1], [], []>} : vector<2x32xf32>, vector<32x128xf32>, vector<2x128xf32> -> vector<2x128xf32>
    %778 = arith.addf %776, %777 : vector<2x128xf32>
    %779 = vector.extract_strided_slice %778 {offsets = [0, 0], sizes = [2, 96], strides = [1, 1]} : vector<2x128xf32> to vector<2x96xf32>
    %780 = arith.negf %779 : vector<2x96xf32>
    %781 = math.exp %780 : vector<2x96xf32>
    %cst_153 = arith.constant 1.000000e+00 : f32
    %782 = vector.broadcast %cst_153 : f32 to vector<2x96xf32>
    %783 = arith.addf %782, %781 : vector<2x96xf32>
    %784 = arith.divf %782, %783 : vector<2x96xf32>
    %785 = vector.extract_strided_slice %778 {offsets = [0, 96], sizes = [2, 32], strides = [1, 1]} : vector<2x128xf32> to vector<2x32xf32>
    %786 = math.tanh %785 : vector<2x32xf32>
    %787 = vector.extract_strided_slice %784 {offsets = [0, 32], sizes = [2, 32], strides = [1, 1]} : vector<2x96xf32> to vector<2x32xf32>
    %788 = arith.mulf %787, %764 : vector<2x32xf32>
    %789 = vector.extract_strided_slice %784 {offsets = [0, 0], sizes = [2, 32], strides = [1, 1]} : vector<2x96xf32> to vector<2x32xf32>
    %790 = arith.mulf %789, %786 : vector<2x32xf32>
    %791 = arith.addf %788, %790 : vector<2x32xf32>
    %792 = vector.extract_strided_slice %784 {offsets = [0, 64], sizes = [2, 32], strides = [1, 1]} : vector<2x96xf32> to vector<2x32xf32>
    %793 = math.tanh %791 : vector<2x32xf32>
    %794 = arith.mulf %792, %793 : vector<2x32xf32>
    %c7_i32_154 = arith.constant 7 : i32
    %795 = vector.broadcast %c7_i32_154 : i32 to vector<2x1xi32>
    %796 = arith.cmpi sgt, %27, %795 : vector<2x1xi32>
    %797 = arith.extui %796 : vector<2x1xi1> to vector<2x1xi32>
    %798 = arith.sitofp %797 : vector<2x1xi32> to vector<2x1xf32>
    %c0_i32_155 = arith.constant 0 : i32
    %799 = vector.broadcast %c0_i32_155 : i32 to vector<2x1xi32>
    %800 = arith.cmpi sgt, %27, %799 : vector<2x1xi32>
    %801 = arith.extui %800 : vector<2x1xi1> to vector<2x1xi32>
    %802 = arith.sitofp %801 : vector<2x1xi32> to vector<2x1xf32>
    %803 = vector.shape_cast %798 : vector<2x1xf32> to vector<2x1xf32>
    %804 = vector.broadcast %803 : vector<2x1xf32> to vector<2x32xf32>
    %805 = vector.shape_cast %802 : vector<2x1xf32> to vector<2x1xf32>
    %806 = vector.broadcast %805 : vector<2x1xf32> to vector<2x32xf32>
    %807 = arith.select %35, %804, %806 : vector<2x32xi1>, vector<2x32xf32>
    %808 = arith.mulf %807, %794 : vector<2x32xf32>
    %cst_156 = arith.constant 1.000000e+00 : f32
    %809 = vector.broadcast %cst_156 : f32 to vector<2x32xf32>
    %810 = arith.subf %809, %807 : vector<2x32xf32>
    %811 = arith.mulf %810, %769 : vector<2x32xf32>
    %812 = arith.addf %808, %811 : vector<2x32xf32>
    %813 = vector.extract_strided_slice %812 {offsets = [0, 0], sizes = [2, 16], strides = [1, 1]} : vector<2x32xf32> to vector<2x16xf32>
    %c0_157 = arith.constant 0 : index
    %c224 = arith.constant 224 : index
    %814 = vector.load %arg6[%c0_157, %c224] : memref<2x256xf32, #tpu.memory_space<vmem>>, vector<2x16xf32>
    tpu.vector_store %arg6[%c0_157, %c224], %813 {strides = array<i32>} : memref<2x256xf32, #tpu.memory_space<vmem>>, vector<2x16xf32>,
    %815 = vector.extract_strided_slice %812 {offsets = [0, 16], sizes = [2, 16], strides = [1, 1]} : vector<2x32xf32> to vector<2x16xf32>
    %c0_158 = arith.constant 0 : index
    %c16_159 = arith.constant 16 : index
    %816 = vector.load %arg6[%c0_158, %c16_159] : memref<2x256xf32, #tpu.memory_space<vmem>>, vector<2x16xf32>
    tpu.vector_store %arg6[%c0_158, %c16_159], %815 {strides = array<i32>} : memref<2x256xf32, #tpu.memory_space<vmem>>, vector<2x16xf32>,
    %817 = tpu.iota {dimensions = array<i32: 1>} : vector<2x256xi32>
    %c32_i32 = arith.constant 32 : i32
    %818 = vector.broadcast %c32_i32 : i32 to vector<2x1xi32>
    %819 = arith.muli %27, %818 : vector<2x1xi32>
    %820 = vector.broadcast %819 : vector<2x1xi32> to vector<2x256xi32>
    %821 = arith.cmpi slt, %817, %820 : vector<2x256xi32>
    %c0_160 = arith.constant 0 : index
    %c0_161 = arith.constant 0 : index
    %822 = vector.load %arg6[%c0_160, %c0_161] : memref<2x256xf32, #tpu.memory_space<vmem>>, vector<2x256xf32>
    %cst_162 = arith.constant 0.000000e+00 : f32
    %823 = vector.broadcast %cst_162 : f32 to vector<2x256xf32>
    %824 = arith.select %821, %822, %823 : vector<2x256xi1>, vector<2x256xf32>
    %c0_163 = arith.constant 0 : index
    %c0_164 = arith.constant 0 : index
    %825 = vector.load %arg6[%c0_163, %c0_164] : memref<2x256xf32, #tpu.memory_space<vmem>>, vector<2x256xf32>
    tpu.vector_store %arg6[%c0_163, %c0_164], %824 {strides = array<i32>} : memref<2x256xf32, #tpu.memory_space<vmem>>, vector<2x256xf32>,
    return
  }
}

</mosaic_0001>

<llo_original>
// kernel: root_sentence_encoder.1
$region0: #{root_sentence_encoder.1}
  #allocation0 [shape = 'u32[]', space=smem, size = 0x4, offset = 0x4, fixed_abs, tag = 'smem constant byte address 0x4 - core index']
  #allocation1 [shape = 'u32[144,128]{1,0:T(1,128)}', space=vmem, size = 0x12000, scoped, tag = 'internal scratch']
  #allocation2 [shape = 'f32[16,32]{1,0:T(8,128)}', space=vmem, size = 0x2000, scoped, tag = 'scratch operand']
  %s0 = inlined_call_operand.vmem [shape: s32[16,4], index: 0, kind: input, shape index: {}]
  %s1 = inlined_call_operand.vmem [shape: s32[2,1], index: 1, kind: input, shape index: {}]
  %s2 = inlined_call_operand.vmem [shape: f32[128,32], index: 2, kind: input, shape index: {}]
  %s3 = inlined_call_operand.vmem [shape: f32[2,32,128], index: 3, kind: input, shape index: {}]
  %s4 = inlined_call_operand.vmem [shape: f32[2,32,128], index: 4, kind: input, shape index: {}]
  %s5 = inlined_call_operand.vmem [shape: f32[2,1,128], index: 5, kind: input, shape index: {}]
  %s6 = inlined_call_operand.vmem [shape: f32[2,256], index: 6, kind: output, shape index: {}]
  %s7 = sld [smem:[#allocation0]]
  $region34: #{root_sentence_encoder.1} parent=0
    _
  %s9 = ssub.s32 1, %s7
  %s10 = scalar_select 0, %s9, %s7
  // Predicated region
  $region2: #{root_sentence_encoder.1} parent=0 // pred_check
    _
  $region3: #{root_sentence_encoder.1} parent=0 // pred_check_branch
    %12 = sbr.rel (0) target = $region5
  $region4: #{root_sentence_encoder.1} parent=0 // pred_region
    _
  $region5: #{root_sentence_encoder.1} parent=0 // pred_fallthru
    _
  // Predicated region
  $region6: #{root_sentence_encoder.1} parent=0 // pred_check
    _
  $region7: #{root_sentence_encoder.1} parent=0 // pred_check_branch
    %14 = sbr.rel (0) target = $region9
  $region8: #{root_sentence_encoder.1} parent=0 // pred_region
    _
  $region9: #{root_sentence_encoder.1} parent=0 // pred_fallthru
    _
  // Predicated region
  $region10: #{root_sentence_encoder.1} parent=0 // pred_check
    _
  $region11: #{root_sentence_encoder.1} parent=0 // pred_check_branch
    %16 = sbr.rel (0) target = $region13
  $region12: #{root_sentence_encoder.1} parent=0 // pred_region
    _
  $region13: #{root_sentence_encoder.1} parent=0 // pred_fallthru
    _
  // Predicated region
  $region14: #{root_sentence_encoder.1} parent=0 // pred_check
    _
  $region15: #{root_sentence_encoder.1} parent=0 // pred_check_branch
    %18 = sbr.rel (0) target = $region17
  $region16: #{root_sentence_encoder.1} parent=0 // pred_region
    _
  $region17: #{root_sentence_encoder.1} parent=0 // pred_fallthru
    _
  // Predicated region
  $region18: #{root_sentence_encoder.1} parent=0 // pred_check
    _
  $region19: #{root_sentence_encoder.1} parent=0 // pred_check_branch
    %20 = sbr.rel (0) target = $region21
  $region20: #{root_sentence_encoder.1} parent=0 // pred_region
    _
  $region21: #{root_sentence_encoder.1} parent=0 // pred_fallthru
    _
  // Predicated region
  $region22: #{root_sentence_encoder.1} parent=0 // pred_check
    _
  $region23: #{root_sentence_encoder.1} parent=0 // pred_check_branch
    %22 = sbr.rel (0) target = $region25
  $region24: #{root_sentence_encoder.1} parent=0 // pred_region
    _
  $region25: #{root_sentence_encoder.1} parent=0 // pred_fallthru
    _
  %v23 = vld [vmem:[%s0] sm:$0xff]
  %v24 = vld [vmem:[%s0 + $0x8] sm:$0xff]
  %v25 = vlaneseq
  %v26 = vand.u32 %v25, 127
  %27 = vset.pattern.permute.xlu0 0
  %28 = vperm.xlu0 %27, %v23
  %v29 = vpop.permute.xlu0 %28
  %30 = vset.pattern.permute.xlu0 0
  %31 = vperm.xlu0 %30, %v24
  %v32 = vpop.permute.xlu0 %31
  %vm33 = vcmp.eq.s32.totalorder %v29, %v26
  %vm34 = vcmp.eq.s32.totalorder %v32, %v26
  %v35 = vsel %vm33, 1, 0
  %v36 = vsel %vm34, 1, 0
  %v37 = vcvt.s32.f32 %v35
  %v38 = vcvt.s32.f32 %v36
  %39 = vset.pattern.permute.xlu0 1
  %40 = vperm.xlu0 %39, %v23
  %v41 = vpop.permute.xlu0 %40
  %42 = vset.pattern.permute.xlu0 1
  %43 = vperm.xlu0 %42, %v24
  %v44 = vpop.permute.xlu0 %43
  %vm45 = vcmp.eq.s32.totalorder %v41, %v26
  %vm46 = vcmp.eq.s32.totalorder %v44, %v26
  %v47 = vsel %vm45, 1, 0
  %v48 = vsel %vm46, 1, 0
  %v49 = vcvt.s32.f32 %v47
  %v50 = vcvt.s32.f32 %v48
  %v51 = vadd.f32 %v37, %v49
  %v52 = vadd.f32 %v38, %v50
  %53 = vset.pattern.permute.xlu0 2
  %54 = vperm.xlu0 %53, %v23
  %v55 = vpop.permute.xlu0 %54
  %56 = vset.pattern.permute.xlu0 2
  %57 = vperm.xlu0 %56, %v24
  %v58 = vpop.permute.xlu0 %57
  %vm59 = vcmp.eq.s32.totalorder %v55, %v26
  %vm60 = vcmp.eq.s32.totalorder %v58, %v26
  %v61 = vsel %vm59, 1, 0
  %v62 = vsel %vm60, 1, 0
  %v63 = vcvt.s32.f32 %v61
  %v64 = vcvt.s32.f32 %v62
  %v65 = vadd.f32 %v51, %v63
  %v66 = vadd.f32 %v52, %v64
  %67 = vset.pattern.permute.xlu0 3
  %68 = vperm.xlu0 %67, %v23
  %v69 = vpop.permute.xlu0 %68
  %70 = vset.pattern.permute.xlu0 3
  %71 = vperm.xlu0 %70, %v24
  %v72 = vpop.permute.xlu0 %71
  %vm73 = vcmp.eq.s32.totalorder %v69, %v26
  %vm74 = vcmp.eq.s32.totalorder %v72, %v26
  %v75 = vsel %vm73, 1, 0
  %v76 = vsel %vm74, 1, 0
  %v77 = vcvt.s32.f32 %v75
  %v78 = vcvt.s32.f32 %v76
  %v79 = vadd.f32 %v65, %v77
  %v80 = vadd.f32 %v66, %v78
  %v81 = vld [vmem:[%s2] sm:$0xff]
  %v82 = vld [vmem:[%s2 + $0x8] sm:$0xff]
  %v83 = vld [vmem:[%s2 + $0x10] sm:$0xff]
  %v84 = vld [vmem:[%s2 + $0x18] sm:$0xff]
  %v85 = vld [vmem:[%s2 + $0x20] sm:$0xff]
  %v86 = vld [vmem:[%s2 + $0x28] sm:$0xff]
  %v87 = vld [vmem:[%s2 + $0x30] sm:$0xff]
  %v88 = vld [vmem:[%s2 + $0x38] sm:$0xff]
  %v89 = vld [vmem:[%s2 + $0x40] sm:$0xff]
  %v90 = vld [vmem:[%s2 + $0x48] sm:$0xff]
  %v91 = vld [vmem:[%s2 + $0x50] sm:$0xff]
  %v92 = vld [vmem:[%s2 + $0x58] sm:$0xff]
  %v93 = vld [vmem:[%s2 + $0x60] sm:$0xff]
  %v94 = vld [vmem:[%s2 + $0x68] sm:$0xff]
  %v95 = vld [vmem:[%s2 + $0x70] sm:$0xff]
  %v96 = vld [vmem:[%s2 + $0x78] sm:$0xff]
  %97 = vmatprep.subr.mxu0 0.0
  %98 = vmatpush1.msra.mxu0 %v96
  %99 = vmatprep.subr.mxu0 0.0
  %100 = vmatpush1.msra.mxu0 %v95
  %101 = vmatprep.subr.mxu0 0.0
  %102 = vmatpush1.msra.mxu0 %v94
  %103 = vmatprep.subr.mxu0 0.0
  %104 = vmatpush1.msra.mxu0 %v93
  %105 = vmatprep.subr.mxu0 0.0
  %106 = vmatpush1.msra.mxu0 %v92
  %107 = vmatprep.subr.mxu0 0.0
  %108 = vmatpush1.msra.mxu0 %v91
  %109 = vmatprep.subr.mxu0 0.0
  %110 = vmatpush1.msra.mxu0 %v90
  %111 = vmatprep.subr.mxu0 0.0
  %112 = vmatpush1.msra.mxu0 %v89
  %113 = vmatprep.subr.mxu0 0.0
  %114 = vmatpush1.msra.mxu0 %v88
  %115 = vmatprep.subr.mxu0 0.0
  %116 = vmatpush1.msra.mxu0 %v87
  %117 = vmatprep.subr.mxu0 0.0
  %118 = vmatpush1.msra.mxu0 %v86
  %119 = vmatprep.subr.mxu0 0.0
  %120 = vmatpush1.msra.mxu0 %v85
  %121 = vmatprep.subr.mxu0 0.0
  %122 = vmatpush1.msra.mxu0 %v84
  %123 = vmatprep.subr.mxu0 0.0
  %124 = vmatpush1.msra.mxu0 %v83
  %125 = vmatprep.subr.mxu0 0.0
  %126 = vmatpush1.msra.mxu0 %v82
  %127 = vmatprep.subr.mxu0 0.0
  %128 = vmatpush1.msra.mxu0 %v81
  %129 = vmatprep.subr.mxu0 0.0
  %130 = vmatpush2.msra.mxu0 0.0
  %131 = vmatprep.subr.mxu0 0.0
  %132 = vmatpush2.msra.mxu0 0.0
  %133 = vmatprep.subr.mxu0 0.0
  %134 = vmatpush2.msra.mxu0 0.0
  %135 = vmatprep.subr.mxu0 0.0
  %136 = vmatpush2.msra.mxu0 0.0
  %137 = vmatprep.subr.mxu0 0.0
  %138 = vmatpush2.msra.mxu0 0.0
  %139 = vmatprep.subr.mxu0 0.0
  %140 = vmatpush2.msra.mxu0 0.0
  %141 = vmatprep.subr.mxu0 0.0
  %142 = vmatpush2.msra.mxu0 0.0
  %143 = vmatprep.subr.mxu0 0.0
  %144 = vmatpush2.msra.mxu0 0.0
  %145 = vmatprep.subr.mxu0 0.0
  %146 = vmatpush2.msra.mxu0 0.0
  %147 = vmatprep.subr.mxu0 0.0
  %148 = vmatpush2.msra.mxu0 0.0
  %149 = vmatprep.subr.mxu0 0.0
  %150 = vmatpush2.msra.mxu0 0.0
  %151 = vmatprep.subr.mxu0 0.0
  %152 = vmatpush2.msra.mxu0 0.0
  %153 = vmatprep.subr.mxu0 0.0
  %154 = vmatpush2.msra.mxu0 0.0
  %155 = vmatprep.subr.mxu0 0.0
  %156 = vmatpush2.msra.mxu0 0.0
  %157 = vmatprep.subr.mxu0 0.0
  %158 = vmatpush2.msra.mxu0 0.0
  %159 = vmatprep.subr.mxu0 0.0
  %160 = vmatpush2.msra.mxu0 0.0
  %161 = vmatprep.mubr.f32.mxu0 0.0
  %162 = vmatmul.mubr.f32.gmra.mxu0 %v79
  %v163 = vpop.f32.mrf.mxu0
  %v164 = vadd.f32 0.0, %v163
  %v165 = vpop.f32.mrf.mxu0
  %166 = vmatprep.mubr.f32.mxu0 0.0
  %167 = vmatmul.mubr.f32.gmra.mxu0 %v80
  %v168 = vpop.f32.mrf.mxu0
  %v169 = vadd.f32 0.0, %v168
  %v170 = vpop.f32.mrf.mxu0
  %171 = vdwg.mxu0
  %v172 = vld [vmem:[%s1] sm:$0x3]
  %v173 = vand.u32 %v26, 16
  %vm174 = vcmp.ne.s32.totalorder %v173, 0
  %vm175 = vcmp.lt.s32.totalorder %v26, 16
  %v176 = vld [vmem:[%s3] sm:$0xff]
  %v177 = vld [vmem:[%s3 + $0x8] sm:$0xff]
  %v178 = vld [vmem:[%s3 + $0x10] sm:$0xff]
  %v179 = vld [vmem:[%s3 + $0x18] sm:$0xff]
  %v180 = vld [vmem:[%s5] sm:$0x1]
  %v182 = vlaneseq
  %v183 = vshrl.u32 %v182, 7
  %v184 = vsub.s32 0, %v183
  %v185 = vrot.slane %v180, %v184
  %vm187 = vcmask 261120
  %v189 = vsel %vm187, %v164, 0
  %v192 = vsel %vm187, %v169, 0
  %194 = vmatprep.subr.mxu0 0.0
  %195 = vmatpush1.msra.mxu0 0.0
  %196 = vmatprep.subr.mxu0 0.0
  %197 = vmatpush1.msra.mxu0 0.0
  %198 = vmatprep.subr.mxu0 0.0
  %199 = vmatpush1.msra.mxu0 0.0
  %200 = vmatprep.subr.mxu0 0.0
  %201 = vmatpush1.msra.mxu0 0.0
  %202 = vmatprep.subr.mxu0 0.0
  %203 = vmatpush1.msra.mxu0 0.0
  %204 = vmatprep.subr.mxu0 0.0
  %205 = vmatpush1.msra.mxu0 0.0
  %206 = vmatprep.subr.mxu0 0.0
  %207 = vmatpush1.msra.mxu0 0.0
  %208 = vmatprep.subr.mxu0 0.0
  %209 = vmatpush1.msra.mxu0 0.0
  %210 = vmatprep.subr.mxu0 0.0
  %211 = vmatpush1.msra.mxu0 0.0
  %212 = vmatprep.subr.mxu0 0.0
  %213 = vmatpush1.msra.mxu0 0.0
  %214 = vmatprep.subr.mxu0 0.0
  %215 = vmatpush1.msra.mxu0 0.0
  %216 = vmatprep.subr.mxu0 0.0
  %217 = vmatpush1.msra.mxu0 0.0
  %218 = vmatprep.subr.mxu0 0.0
  %219 = vmatpush1.msra.mxu0 %v179
  %220 = vmatprep.subr.mxu0 0.0
  %221 = vmatpush1.msra.mxu0 %v178
  %222 = vmatprep.subr.mxu0 0.0
  %223 = vmatpush1.msra.mxu0 %v177
  %224 = vmatprep.subr.mxu0 0.0
  %225 = vmatpush1.msra.mxu0 %v176
  %226 = vmatprep.subr.mxu0 0.0
  %227 = vmatpush2.msra.mxu0 0.0
  %228 = vmatprep.subr.mxu0 0.0
  %229 = vmatpush2.msra.mxu0 0.0
  %230 = vmatprep.subr.mxu0 0.0
  %231 = vmatpush2.msra.mxu0 0.0
  %232 = vmatprep.subr.mxu0 0.0
  %233 = vmatpush2.msra.mxu0 0.0
  %234 = vmatprep.subr.mxu0 0.0
  %235 = vmatpush2.msra.mxu0 0.0
  %236 = vmatprep.subr.mxu0 0.0
  %237 = vmatpush2.msra.mxu0 0.0
  %238 = vmatprep.subr.mxu0 0.0
  %239 = vmatpush2.msra.mxu0 0.0
  %240 = vmatprep.subr.mxu0 0.0
  %241 = vmatpush2.msra.mxu0 0.0
  %242 = vmatprep.subr.mxu0 0.0
  %243 = vmatpush2.msra.mxu0 0.0
  %244 = vmatprep.subr.mxu0 0.0
  %245 = vmatpush2.msra.mxu0 0.0
  %246 = vmatprep.subr.mxu0 0.0
  %247 = vmatpush2.msra.mxu0 0.0
  %248 = vmatprep.subr.mxu0 0.0
  %249 = vmatpush2.msra.mxu0 0.0
  %250 = vmatprep.subr.mxu0 0.0
  %251 = vmatpush2.msra.mxu0 0.0
  %252 = vmatprep.subr.mxu0 0.0
  %253 = vmatpush2.msra.mxu0 0.0
  %254 = vmatprep.subr.mxu0 0.0
  %255 = vmatpush2.msra.mxu0 0.0
  %256 = vmatprep.subr.mxu0 0.0
  %257 = vmatpush2.msra.mxu0 0.0
  %258 = vmatprep.mubr.f32.mxu0 0.0
  %259 = vmatmul.mubr.f32.gmra.mxu0 %v189
  %v260 = vpop.f32.mrf.mxu0
  %v261 = vadd.f32 %v185, %v260
  %v262 = vpop.f32.mrf.mxu0
  %263 = vmatprep.mubr.f32.mxu0 0.0
  %264 = vmatmul.mubr.f32.gmra.mxu0 %v192
  %v265 = vpop.f32.mrf.mxu0
  %v266 = vadd.f32 %v185, %v265
  %v267 = vpop.f32.mrf.mxu0
  %268 = vdwg.mxu0
  %v269 = vld [vmem:[%s4] sm:$0xff]
  %v270 = vld [vmem:[%s4 + $0x8] sm:$0xff]
  %v271 = vld [vmem:[%s4 + $0x10] sm:$0xff]
  %v272 = vld [vmem:[%s4 + $0x18] sm:$0xff]
  %v274 = vrot.slane %v261, 2
  %v276 = vsel %vm174, %v266, %v274
  %v278 = vsel %vm187, 0.0, 0
  %280 = vmatprep.subr.mxu0 0.0
  %281 = vmatpush1.msra.mxu0 0.0
  %282 = vmatprep.subr.mxu0 0.0
  %283 = vmatpush1.msra.mxu0 0.0
  %284 = vmatprep.subr.mxu0 0.0
  %285 = vmatpush1.msra.mxu0 0.0
  %286 = vmatprep.subr.mxu0 0.0
  %287 = vmatpush1.msra.mxu0 0.0
  %288 = vmatprep.subr.mxu0 0.0
  %289 = vmatpush1.msra.mxu0 0.0
  %290 = vmatprep.subr.mxu0 0.0
  %291 = vmatpush1.msra.mxu0 0.0
  %292 = vmatprep.subr.mxu0 0.0
  %293 = vmatpush1.msra.mxu0 0.0
  %294 = vmatprep.subr.mxu0 0.0
  %295 = vmatpush1.msra.mxu0 0.0
  %296 = vmatprep.subr.mxu0 0.0
  %297 = vmatpush1.msra.mxu0 0.0
  %298 = vmatprep.subr.mxu0 0.0
  %299 = vmatpush1.msra.mxu0 0.0
  %300 = vmatprep.subr.mxu0 0.0
  %301 = vmatpush1.msra.mxu0 0.0
  %302 = vmatprep.subr.mxu0 0.0
  %303 = vmatpush1.msra.mxu0 0.0
  %304 = vmatprep.subr.mxu0 0.0
  %305 = vmatpush1.msra.mxu0 %v272
  %306 = vmatprep.subr.mxu0 0.0
  %307 = vmatpush1.msra.mxu0 %v271
  %308 = vmatprep.subr.mxu0 0.0
  %309 = vmatpush1.msra.mxu0 %v270
  %310 = vmatprep.subr.mxu0 0.0
  %311 = vmatpush1.msra.mxu0 %v269
  %312 = vmatprep.subr.mxu0 0.0
  %313 = vmatpush2.msra.mxu0 0.0
  %314 = vmatprep.subr.mxu0 0.0
  %315 = vmatpush2.msra.mxu0 0.0
  %316 = vmatprep.subr.mxu0 0.0
  %317 = vmatpush2.msra.mxu0 0.0
  %318 = vmatprep.subr.mxu0 0.0
  %319 = vmatpush2.msra.mxu0 0.0
  %320 = vmatprep.subr.mxu0 0.0
  %321 = vmatpush2.msra.mxu0 0.0
  %322 = vmatprep.subr.mxu0 0.0
  %323 = vmatpush2.msra.mxu0 0.0
  %324 = vmatprep.subr.mxu0 0.0
  %325 = vmatpush2.msra.mxu0 0.0
  %326 = vmatprep.subr.mxu0 0.0
  %327 = vmatpush2.msra.mxu0 0.0
  %328 = vmatprep.subr.mxu0 0.0
  %329 = vmatpush2.msra.mxu0 0.0
  %330 = vmatprep.subr.mxu0 0.0
  %331 = vmatpush2.msra.mxu0 0.0
  %332 = vmatprep.subr.mxu0 0.0
  %333 = vmatpush2.msra.mxu0 0.0
  %334 = vmatprep.subr.mxu0 0.0
  %335 = vmatpush2.msra.mxu0 0.0
  %336 = vmatprep.subr.mxu0 0.0
  %337 = vmatpush2.msra.mxu0 0.0
  %338 = vmatprep.subr.mxu0 0.0
  %339 = vmatpush2.msra.mxu0 0.0
  %340 = vmatprep.subr.mxu0 0.0
  %341 = vmatpush2.msra.mxu0 0.0
  %342 = vmatprep.subr.mxu0 0.0
  %343 = vmatpush2.msra.mxu0 0.0
  %344 = vmatprep.mubr.f32.mxu0 0.0
  %345 = vmatmul.mubr.f32.gmra.mxu0 %v278
  %v346 = vpop.f32.mrf.mxu0
  %v347 = vadd.f32 0.0, %v346
  %v348 = vpop.f32.mrf.mxu0
  %349 = vdwg.mxu0
  %v351 = vrot.slane %v347, 2
  %v353 = vadd.f32 %v276, %v351
  %v354 = vxor.u32 %v353, 2147483648
  %v355 = vmul.f32 %v354, 1.442695
  %v356 = vpow.pop %v355
  %v357 = vadd.f32 %v356, 1.0
  %v358 = vrcp.pop %v357
  %v359 = vmul.f32 1.0, %v358
  %v360 = vtanh.pop %v353
  %v361 = vmul.f32 %v359, 0.0
  %363 = vrot.lane.b32.xlu0 %v360, 32
  %v364 = vpop.permute.xlu0 %363
  %v366 = vmul.f32 %v359, %v364
  %368 = vrot.lane.b32.xlu0 %v366, 32
  %v369 = vpop.permute.xlu0 %368
  %v371 = vadd.f32 %v361, %v369
  %v372 = vtanh.pop %v371
  %374 = vrot.lane.b32.xlu0 %v372, 32
  %v375 = vpop.permute.xlu0 %374
  %v377 = vmul.f32 %v359, %v375
  %vm378 = vcmp.gt.s32.totalorder %v172, 0
  %v379 = vsel %vm378, 1, 0
  %v380 = vcvt.s32.f32 %v379
  %vm381 = vcmp.gt.s32.totalorder %v172, 7
  %v382 = vsel %vm381, 1, 0
  %v383 = vcvt.s32.f32 %v382
  %385 = vset.pattern.permute.xlu0 0
  %386 = vperm.xlu0 %385, %v380
  %v387 = vpop.permute.xlu0 %386
  %390 = vset.pattern.permute.xlu0 0
  %391 = vperm.xlu0 %390, %v383
  %v392 = vpop.permute.xlu0 %391
  %v394 = vsel %vm175, %v387, %v392
  %v396 = vrot.slane %v371, 6
  %397 = vrot.lane.b32.xlu0 %v396, 96
  %v398 = vpop.permute.xlu0 %397
  %v400 = vmul.f32 %v394, %v398
  %v401 = vsub.f32 1.0, %v394
  %v402 = vmul.f32 %v401, 0.0
  %v403 = vadd.f32 %v400, %v402
  %v405 = vrot.slane %v377, 6
  %406 = vrot.lane.b32.xlu0 %v405, 64
  %v407 = vpop.permute.xlu0 %406
  %v409 = vmul.f32 %v394, %v407
  %v410 = vadd.f32 %v409, %v402
  %vm411 = vcmask 123904
  %412 = vst.msk [vmem:[#allocation2] sm:$0x3] %vm411, %v410
  %vm413 = vcmask 255104
  %414 = vst.msk [vmem:[#allocation2 + $0xe] sm:$0x3] %vm413, %v410
  %v415 = vrot.slane %v261, 6
  %v417 = vsel %vm174, %v266, %v415
  %v419 = vsel %vm187, %v410, 0
  %421 = vmatprep.subr.mxu0 0.0
  %422 = vmatpush1.msra.mxu0 0.0
  %423 = vmatprep.subr.mxu0 0.0
  %424 = vmatpush1.msra.mxu0 0.0
  %425 = vmatprep.subr.mxu0 0.0
  %426 = vmatpush1.msra.mxu0 0.0
  %427 = vmatprep.subr.mxu0 0.0
  %428 = vmatpush1.msra.mxu0 0.0
  %429 = vmatprep.subr.mxu0 0.0
  %430 = vmatpush1.msra.mxu0 0.0
  %431 = vmatprep.subr.mxu0 0.0
  %432 = vmatpush1.msra.mxu0 0.0
  %433 = vmatprep.subr.mxu0 0.0
  %434 = vmatpush1.msra.mxu0 0.0
  %435 = vmatprep.subr.mxu0 0.0
  %436 = vmatpush1.msra.mxu0 0.0
  %437 = vmatprep.subr.mxu0 0.0
  %438 = vmatpush1.msra.mxu0 0.0
  %439 = vmatprep.subr.mxu0 0.0
  %440 = vmatpush1.msra.mxu0 0.0
  %441 = vmatprep.subr.mxu0 0.0
  %442 = vmatpush1.msra.mxu0 0.0
  %443 = vmatprep.subr.mxu0 0.0
  %444 = vmatpush1.msra.mxu0 0.0
  %445 = vmatprep.subr.mxu0 0.0
  %446 = vmatpush1.msra.mxu0 %v272
  %447 = vmatprep.subr.mxu0 0.0
  %448 = vmatpush1.msra.mxu0 %v271
  %449 = vmatprep.subr.mxu0 0.0
  %450 = vmatpush1.msra.mxu0 %v270
  %451 = vmatprep.subr.mxu0 0.0
  %452 = vmatpush1.msra.mxu0 %v269
  %453 = vmatprep.subr.mxu0 0.0
  %454 = vmatpush2.msra.mxu0 0.0
  %455 = vmatprep.subr.mxu0 0.0
  %456 = vmatpush2.msra.mxu0 0.0
  %457 = vmatprep.subr.mxu0 0.0
  %458 = vmatpush2.msra.mxu0 0.0
  %459 = vmatprep.subr.mxu0 0.0
  %460 = vmatpush2.msra.mxu0 0.0
  %461 = vmatprep.subr.mxu0 0.0
  %462 = vmatpush2.msra.mxu0 0.0
  %463 = vmatprep.subr.mxu0 0.0
  %464 = vmatpush2.msra.mxu0 0.0
  %465 = vmatprep.subr.mxu0 0.0
  %466 = vmatpush2.msra.mxu0 0.0
  %467 = vmatprep.subr.mxu0 0.0
  %468 = vmatpush2.msra.mxu0 0.0
  %469 = vmatprep.subr.mxu0 0.0
  %470 = vmatpush2.msra.mxu0 0.0
  %471 = vmatprep.subr.mxu0 0.0
  %472 = vmatpush2.msra.mxu0 0.0
  %473 = vmatprep.subr.mxu0 0.0
  %474 = vmatpush2.msra.mxu0 0.0
  %475 = vmatprep.subr.mxu0 0.0
  %476 = vmatpush2.msra.mxu0 0.0
  %477 = vmatprep.subr.mxu0 0.0
  %478 = vmatpush2.msra.mxu0 0.0
  %479 = vmatprep.subr.mxu0 0.0
  %480 = vmatpush2.msra.mxu0 0.0
  %481 = vmatprep.subr.mxu0 0.0
  %482 = vmatpush2.msra.mxu0 0.0
  %483 = vmatprep.subr.mxu0 0.0
  %484 = vmatpush2.msra.mxu0 0.0
  %485 = vmatprep.mubr.f32.mxu0 0.0
  %486 = vmatmul.mubr.f32.gmra.mxu0 %v419
  %v487 = vpop.f32.mrf.mxu0
  %v488 = vadd.f32 0.0, %v487
  %v489 = vpop.f32.mrf.mxu0
  %490 = vdwg.mxu0
  %v492 = vrot.slane %v488, 4
  %v494 = vadd.f32 %v417, %v492
  %v495 = vxor.u32 %v494, 2147483648
  %v496 = vmul.f32 %v495, 1.442695
  %v497 = vpow.pop %v496
  %v498 = vadd.f32 %v497, 1.0
  %v499 = vrcp.pop %v498
  %v500 = vmul.f32 1.0, %v499
  %v501 = vtanh.pop %v494
  %v503 = vrot.slane %v403, 4
  %504 = vrot.lane.b32.xlu0 %v503, 32
  %v505 = vpop.permute.xlu0 %504
  %v507 = vmul.f32 %v500, %v505
  %509 = vrot.lane.b32.xlu0 %v501, 32
  %v510 = vpop.permute.xlu0 %509
  %v512 = vmul.f32 %v500, %v510
  %514 = vrot.lane.b32.xlu0 %v512, 32
  %v515 = vpop.permute.xlu0 %514
  %v517 = vadd.f32 %v507, %v515
  %v518 = vtanh.pop %v517
  %520 = vrot.lane.b32.xlu0 %v518, 32
  %v521 = vpop.permute.xlu0 %520
  %v523 = vmul.f32 %v500, %v521
  %vm524 = vcmp.gt.s32.totalorder %v172, 1
  %v525 = vsel %vm524, 1, 0
  %v526 = vcvt.s32.f32 %v525
  %vm527 = vcmp.gt.s32.totalorder %v172, 6
  %v528 = vsel %vm527, 1, 0
  %v529 = vcvt.s32.f32 %v528
  %531 = vset.pattern.permute.xlu0 0
  %532 = vperm.xlu0 %531, %v526
  %v533 = vpop.permute.xlu0 %532
  %536 = vset.pattern.permute.xlu0 0
  %537 = vperm.xlu0 %536, %v529
  %v538 = vpop.permute.xlu0 %537
  %v540 = vsel %vm175, %v533, %v538
  %v542 = vrot.slane %v517, 4
  %543 = vrot.lane.b32.xlu0 %v542, 96
  %v544 = vpop.permute.xlu0 %543
  %v546 = vmul.f32 %v540, %v544
  %v547 = vsub.f32 1.0, %v540
  %v548 = vmul.f32 %v547, %v403
  %v549 = vadd.f32 %v546, %v548
  %v551 = vrot.slane %v523, 4
  %552 = vrot.lane.b32.xlu0 %v551, 64
  %v553 = vpop.permute.xlu0 %552
  %v555 = vmul.f32 %v540, %v553
  %v556 = vmul.f32 %v547, %v410
  %v557 = vadd.f32 %v555, %v556
  %558 = vst.msk [vmem:[#allocation2 + $0x2] sm:$0x3] %vm411, %v557
  %559 = vst.msk [vmem:[#allocation2 + $0xc] sm:$0x3] %vm413, %v557
  %v561 = vsel %vm187, %v557, 0
  %563 = vmatprep.subr.mxu0 0.0
  %564 = vmatpush1.msra.mxu0 0.0
  %565 = vmatprep.subr.mxu0 0.0
  %566 = vmatpush1.msra.mxu0 0.0
  %567 = vmatprep.subr.mxu0 0.0
  %568 = vmatpush1.msra.mxu0 0.0
  %569 = vmatprep.subr.mxu0 0.0
  %570 = vmatpush1.msra.mxu0 0.0
  %571 = vmatprep.subr.mxu0 0.0
  %572 = vmatpush1.msra.mxu0 0.0
  %573 = vmatprep.subr.mxu0 0.0
  %574 = vmatpush1.msra.mxu0 0.0
  %575 = vmatprep.subr.mxu0 0.0
  %576 = vmatpush1.msra.mxu0 0.0
  %577 = vmatprep.subr.mxu0 0.0
  %578 = vmatpush1.msra.mxu0 0.0
  %579 = vmatprep.subr.mxu0 0.0
  %580 = vmatpush1.msra.mxu0 0.0
  %581 = vmatprep.subr.mxu0 0.0
  %582 = vmatpush1.msra.mxu0 0.0
  %583 = vmatprep.subr.mxu0 0.0
  %584 = vmatpush1.msra.mxu0 0.0
  %585 = vmatprep.subr.mxu0 0.0
  %586 = vmatpush1.msra.mxu0 0.0
  %587 = vmatprep.subr.mxu0 0.0
  %588 = vmatpush1.msra.mxu0 %v272
  %589 = vmatprep.subr.mxu0 0.0
  %590 = vmatpush1.msra.mxu0 %v271
  %591 = vmatprep.subr.mxu0 0.0
  %592 = vmatpush1.msra.mxu0 %v270
  %593 = vmatprep.subr.mxu0 0.0
  %594 = vmatpush1.msra.mxu0 %v269
  %595 = vmatprep.subr.mxu0 0.0
  %596 = vmatpush2.msra.mxu0 0.0
  %597 = vmatprep.subr.mxu0 0.0
  %598 = vmatpush2.msra.mxu0 0.0
  %599 = vmatprep.subr.mxu0 0.0
  %600 = vmatpush2.msra.mxu0 0.0
  %601 = vmatprep.subr.mxu0 0.0
  %602 = vmatpush2.msra.mxu0 0.0
  %603 = vmatprep.subr.mxu0 0.0
  %604 = vmatpush2.msra.mxu0 0.0
  %605 = vmatprep.subr.mxu0 0.0
  %606 = vmatpush2.msra.mxu0 0.0
  %607 = vmatprep.subr.mxu0 0.0
  %608 = vmatpush2.msra.mxu0 0.0
  %609 = vmatprep.subr.mxu0 0.0
  %610 = vmatpush2.msra.mxu0 0.0
  %611 = vmatprep.subr.mxu0 0.0
  %612 = vmatpush2.msra.mxu0 0.0
  %613 = vmatprep.subr.mxu0 0.0
  %614 = vmatpush2.msra.mxu0 0.0
  %615 = vmatprep.subr.mxu0 0.0
  %616 = vmatpush2.msra.mxu0 0.0
  %617 = vmatprep.subr.mxu0 0.0
  %618 = vmatpush2.msra.mxu0 0.0
  %619 = vmatprep.subr.mxu0 0.0
  %620 = vmatpush2.msra.mxu0 0.0
  %621 = vmatprep.subr.mxu0 0.0
  %622 = vmatpush2.msra.mxu0 0.0
  %623 = vmatprep.subr.mxu0 0.0
  %624 = vmatpush2.msra.mxu0 0.0
  %625 = vmatprep.subr.mxu0 0.0
  %626 = vmatpush2.msra.mxu0 0.0
  %627 = vmatprep.mubr.f32.mxu0 0.0
  %628 = vmatmul.mubr.f32.gmra.mxu0 %v561
  %v629 = vpop.f32.mrf.mxu0
  %v630 = vadd.f32 0.0, %v629
  %v631 = vpop.f32.mrf.mxu0
  %632 = vdwg.mxu0
  %v634 = vrot.slane %v630, 6
  %v636 = vadd.f32 %v276, %v634
  %v637 = vxor.u32 %v636, 2147483648
  %v638 = vmul.f32 %v637, 1.442695
  %v639 = vpow.pop %v638
  %v640 = vadd.f32 %v639, 1.0
  %v641 = vrcp.pop %v640
  %v642 = vmul.f32 1.0, %v641
  %v643 = vtanh.pop %v636
  %v645 = vrot.slane %v549, 6
  %646 = vrot.lane.b32.xlu0 %v645, 32
  %v647 = vpop.permute.xlu0 %646
  %v649 = vmul.f32 %v642, %v647
  %651 = vrot.lane.b32.xlu0 %v643, 32
  %v652 = vpop.permute.xlu0 %651
  %v654 = vmul.f32 %v642, %v652
  %656 = vrot.lane.b32.xlu0 %v654, 32
  %v657 = vpop.permute.xlu0 %656
  %v659 = vadd.f32 %v649, %v657
  %v660 = vtanh.pop %v659
  %662 = vrot.lane.b32.xlu0 %v660, 32
  %v663 = vpop.permute.xlu0 %662
  %v665 = vmul.f32 %v642, %v663
  %vm666 = vcmp.gt.s32.totalorder %v172, 2
  %v667 = vsel %vm666, 1, 0
  %v668 = vcvt.s32.f32 %v667
  %vm669 = vcmp.gt.s32.totalorder %v172, 5
  %v670 = vsel %vm669, 1, 0
  %v671 = vcvt.s32.f32 %v670
  %673 = vset.pattern.permute.xlu0 0
  %674 = vperm.xlu0 %673, %v668
  %v675 = vpop.permute.xlu0 %674
  %678 = vset.pattern.permute.xlu0 0
  %679 = vperm.xlu0 %678, %v671
  %v680 = vpop.permute.xlu0 %679
  %v682 = vsel %vm175, %v675, %v680
  %v684 = vrot.slane %v659, 2
  %685 = vrot.lane.b32.xlu0 %v684, 96
  %v686 = vpop.permute.xlu0 %685
  %v688 = vmul.f32 %v682, %v686
  %v689 = vsub.f32 1.0, %v682
  %v690 = vmul.f32 %v689, %v549
  %v691 = vadd.f32 %v688, %v690
  %v693 = vrot.slane %v665, 2
  %694 = vrot.lane.b32.xlu0 %v693, 64
  %v695 = vpop.permute.xlu0 %694
  %v697 = vmul.f32 %v682, %v695
  %v698 = vmul.f32 %v689, %v557
  %v699 = vadd.f32 %v697, %v698
  %700 = vst.msk [vmem:[#allocation2 + $0x4] sm:$0x3] %vm411, %v699
  %701 = vst.msk [vmem:[#allocation2 + $0xa] sm:$0x3] %vm413, %v699
  %v703 = vsel %vm187, %v699, 0
  %705 = vmatprep.subr.mxu0 0.0
  %706 = vmatpush1.msra.mxu0 0.0
  %707 = vmatprep.subr.mxu0 0.0
  %708 = vmatpush1.msra.mxu0 0.0
  %709 = vmatprep.subr.mxu0 0.0
  %710 = vmatpush1.msra.mxu0 0.0
  %711 = vmatprep.subr.mxu0 0.0
  %712 = vmatpush1.msra.mxu0 0.0
  %713 = vmatprep.subr.mxu0 0.0
  %714 = vmatpush1.msra.mxu0 0.0
  %715 = vmatprep.subr.mxu0 0.0
  %716 = vmatpush1.msra.mxu0 0.0
  %717 = vmatprep.subr.mxu0 0.0
  %718 = vmatpush1.msra.mxu0 0.0
  %719 = vmatprep.subr.mxu0 0.0
  %720 = vmatpush1.msra.mxu0 0.0
  %721 = vmatprep.subr.mxu0 0.0
  %722 = vmatpush1.msra.mxu0 0.0
  %723 = vmatprep.subr.mxu0 0.0
  %724 = vmatpush1.msra.mxu0 0.0
  %725 = vmatprep.subr.mxu0 0.0
  %726 = vmatpush1.msra.mxu0 0.0
  %727 = vmatprep.subr.mxu0 0.0
  %728 = vmatpush1.msra.mxu0 0.0
  %729 = vmatprep.subr.mxu0 0.0
  %730 = vmatpush1.msra.mxu0 %v272
  %731 = vmatprep.subr.mxu0 0.0
  %732 = vmatpush1.msra.mxu0 %v271
  %733 = vmatprep.subr.mxu0 0.0
  %734 = vmatpush1.msra.mxu0 %v270
  %735 = vmatprep.subr.mxu0 0.0
  %736 = vmatpush1.msra.mxu0 %v269
  %737 = vmatprep.subr.mxu0 0.0
  %738 = vmatpush2.msra.mxu0 0.0
  %739 = vmatprep.subr.mxu0 0.0
  %740 = vmatpush2.msra.mxu0 0.0
  %741 = vmatprep.subr.mxu0 0.0
  %742 = vmatpush2.msra.mxu0 0.0
  %743 = vmatprep.subr.mxu0 0.0
  %744 = vmatpush2.msra.mxu0 0.0
  %745 = vmatprep.subr.mxu0 0.0
  %746 = vmatpush2.msra.mxu0 0.0
  %747 = vmatprep.subr.mxu0 0.0
  %748 = vmatpush2.msra.mxu0 0.0
  %749 = vmatprep.subr.mxu0 0.0
  %750 = vmatpush2.msra.mxu0 0.0
  %751 = vmatprep.subr.mxu0 0.0
  %752 = vmatpush2.msra.mxu0 0.0
  %753 = vmatprep.subr.mxu0 0.0
  %754 = vmatpush2.msra.mxu0 0.0
  %755 = vmatprep.subr.mxu0 0.0
  %756 = vmatpush2.msra.mxu0 0.0
  %757 = vmatprep.subr.mxu0 0.0
  %758 = vmatpush2.msra.mxu0 0.0
  %759 = vmatprep.subr.mxu0 0.0
  %760 = vmatpush2.msra.mxu0 0.0
  %761 = vmatprep.subr.mxu0 0.0
  %762 = vmatpush2.msra.mxu0 0.0
  %763 = vmatprep.subr.mxu0 0.0
  %764 = vmatpush2.msra.mxu0 0.0
  %765 = vmatprep.subr.mxu0 0.0
  %766 = vmatpush2.msra.mxu0 0.0
  %767 = vmatprep.subr.mxu0 0.0
  %768 = vmatpush2.msra.mxu0 0.0
  %769 = vmatprep.mubr.f32.mxu0 0.0
  %770 = vmatmul.mubr.f32.gmra.mxu0 %v703
  %v771 = vpop.f32.mrf.mxu0
  %v772 = vadd.f32 0.0, %v771
  %v773 = vpop.f32.mrf.mxu0
  %774 = vdwg.mxu0
  %v775 = vadd.f32 %v417, %v772
  %v776 = vxor.u32 %v775, 2147483648
  %v777 = vmul.f32 %v776, 1.442695
  %v778 = vpow.pop %v777
  %v779 = vadd.f32 %v778, 1.0
  %v780 = vrcp.pop %v779
  %v781 = vmul.f32 1.0, %v780
  %v782 = vtanh.pop %v775
  %784 = vrot.lane.b32.xlu0 %v691, 32
  %v785 = vpop.permute.xlu0 %784
  %v787 = vmul.f32 %v781, %v785
  %789 = vrot.lane.b32.xlu0 %v782, 32
  %v790 = vpop.permute.xlu0 %789
  %v792 = vmul.f32 %v781, %v790
  %794 = vrot.lane.b32.xlu0 %v792, 32
  %v795 = vpop.permute.xlu0 %794
  %v797 = vadd.f32 %v787, %v795
  %v798 = vtanh.pop %v797
  %800 = vrot.lane.b32.xlu0 %v798, 32
  %v801 = vpop.permute.xlu0 %800
  %v803 = vmul.f32 %v781, %v801
  %vm804 = vcmp.gt.s32.totalorder %v172, 3
  %v805 = vsel %vm804, 1, 0
  %v806 = vcvt.s32.f32 %v805
  %vm807 = vcmp.gt.s32.totalorder %v172, 4
  %v808 = vsel %vm807, 1, 0
  %v809 = vcvt.s32.f32 %v808
  %811 = vset.pattern.permute.xlu0 0
  %812 = vperm.xlu0 %811, %v806
  %v813 = vpop.permute.xlu0 %812
  %816 = vset.pattern.permute.xlu0 0
  %817 = vperm.xlu0 %816, %v809
  %v818 = vpop.permute.xlu0 %817
  %v820 = vsel %vm175, %v813, %v818
  %822 = vrot.lane.b32.xlu0 %v797, 96
  %v823 = vpop.permute.xlu0 %822
  %v825 = vmul.f32 %v820, %v823
  %v826 = vsub.f32 1.0, %v820
  %v827 = vmul.f32 %v826, %v691
  %v828 = vadd.f32 %v825, %v827
  %830 = vrot.lane.b32.xlu0 %v803, 64
  %v831 = vpop.permute.xlu0 %830
  %v833 = vmul.f32 %v820, %v831
  %v834 = vmul.f32 %v826, %v699
  %v835 = vadd.f32 %v833, %v834
  %836 = vst.msk [vmem:[#allocation2 + $0x6] sm:$0x3] %vm411, %v835
  %837 = vst.msk [vmem:[#allocation2 + $0x8] sm:$0x3] %vm413, %v835
  %v839 = vrot.slane %v266, 2
  %v841 = vsel %vm174, %v261, %v839
  %v843 = vsel %vm187, %v835, 0
  %845 = vmatprep.subr.mxu0 0.0
  %846 = vmatpush1.msra.mxu0 0.0
  %847 = vmatprep.subr.mxu0 0.0
  %848 = vmatpush1.msra.mxu0 0.0
  %849 = vmatprep.subr.mxu0 0.0
  %850 = vmatpush1.msra.mxu0 0.0
  %851 = vmatprep.subr.mxu0 0.0
  %852 = vmatpush1.msra.mxu0 0.0
  %853 = vmatprep.subr.mxu0 0.0
  %854 = vmatpush1.msra.mxu0 0.0
  %855 = vmatprep.subr.mxu0 0.0
  %856 = vmatpush1.msra.mxu0 0.0
  %857 = vmatprep.subr.mxu0 0.0
  %858 = vmatpush1.msra.mxu0 0.0
  %859 = vmatprep.subr.mxu0 0.0
  %860 = vmatpush1.msra.mxu0 0.0
  %861 = vmatprep.subr.mxu0 0.0
  %862 = vmatpush1.msra.mxu0 0.0
  %863 = vmatprep.subr.mxu0 0.0
  %864 = vmatpush1.msra.mxu0 0.0
  %865 = vmatprep.subr.mxu0 0.0
  %866 = vmatpush1.msra.mxu0 0.0
  %867 = vmatprep.subr.mxu0 0.0
  %868 = vmatpush1.msra.mxu0 0.0
  %869 = vmatprep.subr.mxu0 0.0
  %870 = vmatpush1.msra.mxu0 %v272
  %871 = vmatprep.subr.mxu0 0.0
  %872 = vmatpush1.msra.mxu0 %v271
  %873 = vmatprep.subr.mxu0 0.0
  %874 = vmatpush1.msra.mxu0 %v270
  %875 = vmatprep.subr.mxu0 0.0
  %876 = vmatpush1.msra.mxu0 %v269
  %877 = vmatprep.subr.mxu0 0.0
  %878 = vmatpush2.msra.mxu0 0.0
  %879 = vmatprep.subr.mxu0 0.0
  %880 = vmatpush2.msra.mxu0 0.0
  %881 = vmatprep.subr.mxu0 0.0
  %882 = vmatpush2.msra.mxu0 0.0
  %883 = vmatprep.subr.mxu0 0.0
  %884 = vmatpush2.msra.mxu0 0.0
  %885 = vmatprep.subr.mxu0 0.0
  %886 = vmatpush2.msra.mxu0 0.0
  %887 = vmatprep.subr.mxu0 0.0
  %888 = vmatpush2.msra.mxu0 0.0
  %889 = vmatprep.subr.mxu0 0.0
  %890 = vmatpush2.msra.mxu0 0.0
  %891 = vmatprep.subr.mxu0 0.0
  %892 = vmatpush2.msra.mxu0 0.0
  %893 = vmatprep.subr.mxu0 0.0
  %894 = vmatpush2.msra.mxu0 0.0
  %895 = vmatprep.subr.mxu0 0.0
  %896 = vmatpush2.msra.mxu0 0.0
  %897 = vmatprep.subr.mxu0 0.0
  %898 = vmatpush2.msra.mxu0 0.0
  %899 = vmatprep.subr.mxu0 0.0
  %900 = vmatpush2.msra.mxu0 0.0
  %901 = vmatprep.subr.mxu0 0.0
  %902 = vmatpush2.msra.mxu0 0.0
  %903 = vmatprep.subr.mxu0 0.0
  %904 = vmatpush2.msra.mxu0 0.0
  %905 = vmatprep.subr.mxu0 0.0
  %906 = vmatpush2.msra.mxu0 0.0
  %907 = vmatprep.subr.mxu0 0.0
  %908 = vmatpush2.msra.mxu0 0.0
  %909 = vmatprep.mubr.f32.mxu0 0.0
  %910 = vmatmul.mubr.f32.gmra.mxu0 %v843
  %v911 = vpop.f32.mrf.mxu0
  %v912 = vadd.f32 0.0, %v911
  %v913 = vpop.f32.mrf.mxu0
  %914 = vdwg.mxu0
  %v916 = vrot.slane %v912, 2
  %v918 = vadd.f32 %v841, %v916
  %v919 = vxor.u32 %v918, 2147483648
  %v920 = vmul.f32 %v919, 1.442695
  %v921 = vpow.pop %v920
  %v922 = vadd.f32 %v921, 1.0
  %v923 = vrcp.pop %v922
  %v924 = vmul.f32 1.0, %v923
  %v925 = vtanh.pop %v918
  %v927 = vrot.slane %v828, 2
  %928 = vrot.lane.b32.xlu0 %v927, 32
  %v929 = vpop.permute.xlu0 %928
  %v931 = vmul.f32 %v924, %v929
  %933 = vrot.lane.b32.xlu0 %v925, 32
  %v934 = vpop.permute.xlu0 %933
  %v936 = vmul.f32 %v924, %v934
  %938 = vrot.lane.b32.xlu0 %v936, 32
  %v939 = vpop.permute.xlu0 %938
  %v941 = vadd.f32 %v931, %v939
  %v942 = vtanh.pop %v941
  %944 = vrot.lane.b32.xlu0 %v942, 32
  %v945 = vpop.permute.xlu0 %944
  %v947 = vmul.f32 %v924, %v945
  %v948 = vsel %vm175, %v818, %v813
  %v950 = vrot.slane %v941, 6
  %951 = vrot.lane.b32.xlu0 %v950, 96
  %v952 = vpop.permute.xlu0 %951
  %v954 = vmul.f32 %v948, %v952
  %v955 = vsub.f32 1.0, %v948
  %v956 = vmul.f32 %v955, %v828
  %v957 = vadd.f32 %v954, %v956
  %v959 = vrot.slane %v947, 6
  %960 = vrot.lane.b32.xlu0 %v959, 64
  %v961 = vpop.permute.xlu0 %960
  %v963 = vmul.f32 %v948, %v961
  %v964 = vmul.f32 %v955, %v835
  %v965 = vadd.f32 %v963, %v964
  %966 = vst.msk [vmem:[#allocation2 + $0x8] sm:$0x3] %vm411, %v965
  %967 = vst.msk [vmem:[#allocation2 + $0x6] sm:$0x3] %vm413, %v965
  %v968 = vrot.slane %v266, 6
  %v970 = vsel %vm174, %v261, %v968
  %v972 = vsel %vm187, %v965, 0
  %974 = vmatprep.subr.mxu0 0.0
  %975 = vmatpush1.msra.mxu0 0.0
  %976 = vmatprep.subr.mxu0 0.0
  %977 = vmatpush1.msra.mxu0 0.0
  %978 = vmatprep.subr.mxu0 0.0
  %979 = vmatpush1.msra.mxu0 0.0
  %980 = vmatprep.subr.mxu0 0.0
  %981 = vmatpush1.msra.mxu0 0.0
  %982 = vmatprep.subr.mxu0 0.0
  %983 = vmatpush1.msra.mxu0 0.0
  %984 = vmatprep.subr.mxu0 0.0
  %985 = vmatpush1.msra.mxu0 0.0
  %986 = vmatprep.subr.mxu0 0.0
  %987 = vmatpush1.msra.mxu0 0.0
  %988 = vmatprep.subr.mxu0 0.0
  %989 = vmatpush1.msra.mxu0 0.0
  %990 = vmatprep.subr.mxu0 0.0
  %991 = vmatpush1.msra.mxu0 0.0
  %992 = vmatprep.subr.mxu0 0.0
  %993 = vmatpush1.msra.mxu0 0.0
  %994 = vmatprep.subr.mxu0 0.0
  %995 = vmatpush1.msra.mxu0 0.0
  %996 = vmatprep.subr.mxu0 0.0
  %997 = vmatpush1.msra.mxu0 0.0
  %998 = vmatprep.subr.mxu0 0.0
  %999 = vmatpush1.msra.mxu0 %v272
  %1000 = vmatprep.subr.mxu0 0.0
  %1001 = vmatpush1.msra.mxu0 %v271
  %1002 = vmatprep.subr.mxu0 0.0
  %1003 = vmatpush1.msra.mxu0 %v270
  %1004 = vmatprep.subr.mxu0 0.0
  %1005 = vmatpush1.msra.mxu0 %v269
  %1006 = vmatprep.subr.mxu0 0.0
  %1007 = vmatpush2.msra.mxu0 0.0
  %1008 = vmatprep.subr.mxu0 0.0
  %1009 = vmatpush2.msra.mxu0 0.0
  %1010 = vmatprep.subr.mxu0 0.0
  %1011 = vmatpush2.msra.mxu0 0.0
  %1012 = vmatprep.subr.mxu0 0.0
  %1013 = vmatpush2.msra.mxu0 0.0
  %1014 = vmatprep.subr.mxu0 0.0
  %1015 = vmatpush2.msra.mxu0 0.0
  %1016 = vmatprep.subr.mxu0 0.0
  %1017 = vmatpush2.msra.mxu0 0.0
  %1018 = vmatprep.subr.mxu0 0.0
  %1019 = vmatpush2.msra.mxu0 0.0
  %1020 = vmatprep.subr.mxu0 0.0
  %1021 = vmatpush2.msra.mxu0 0.0
  %1022 = vmatprep.subr.mxu0 0.0
  %1023 = vmatpush2.msra.mxu0 0.0
  %1024 = vmatprep.subr.mxu0 0.0
  %1025 = vmatpush2.msra.mxu0 0.0
  %1026 = vmatprep.subr.mxu0 0.0
  %1027 = vmatpush2.msra.mxu0 0.0
  %1028 = vmatprep.subr.mxu0 0.0
  %1029 = vmatpush2.msra.mxu0 0.0
  %1030 = vmatprep.subr.mxu0 0.0
  %1031 = vmatpush2.msra.mxu0 0.0
  %1032 = vmatprep.subr.mxu0 0.0
  %1033 = vmatpush2.msra.mxu0 0.0
  %1034 = vmatprep.subr.mxu0 0.0
  %1035 = vmatpush2.msra.mxu0 0.0
  %1036 = vmatprep.subr.mxu0 0.0
  %1037 = vmatpush2.msra.mxu0 0.0
  %1038 = vmatprep.mubr.f32.mxu0 0.0
  %1039 = vmatmul.mubr.f32.gmra.mxu0 %v972
  %v1040 = vpop.f32.mrf.mxu0
  %v1041 = vadd.f32 0.0, %v1040
  %v1042 = vpop.f32.mrf.mxu0
  %1043 = vdwg.mxu0
  %v1045 = vrot.slane %v1041, 4
  %v1047 = vadd.f32 %v970, %v1045
  %v1048 = vxor.u32 %v1047, 2147483648
  %v1049 = vmul.f32 %v1048, 1.442695
  %v1050 = vpow.pop %v1049
  %v1051 = vadd.f32 %v1050, 1.0
  %v1052 = vrcp.pop %v1051
  %v1053 = vmul.f32 1.0, %v1052
  %v1054 = vtanh.pop %v1047
  %v1056 = vrot.slane %v957, 4
  %1057 = vrot.lane.b32.xlu0 %v1056, 32
  %v1058 = vpop.permute.xlu0 %1057
  %v1060 = vmul.f32 %v1053, %v1058
  %1062 = vrot.lane.b32.xlu0 %v1054, 32
  %v1063 = vpop.permute.xlu0 %1062
  %v1065 = vmul.f32 %v1053, %v1063
  %1067 = vrot.lane.b32.xlu0 %v1065, 32
  %v1068 = vpop.permute.xlu0 %1067
  %v1070 = vadd.f32 %v1060, %v1068
  %v1071 = vtanh.pop %v1070
  %1073 = vrot.lane.b32.xlu0 %v1071, 32
  %v1074 = vpop.permute.xlu0 %1073
  %v1076 = vmul.f32 %v1053, %v1074
  %v1077 = vsel %vm175, %v680, %v675
  %v1079 = vrot.slane %v1070, 4
  %1080 = vrot.lane.b32.xlu0 %v1079, 96
  %v1081 = vpop.permute.xlu0 %1080
  %v1083 = vmul.f32 %v1077, %v1081
  %v1084 = vsub.f32 1.0, %v1077
  %v1085 = vmul.f32 %v1084, %v957
  %v1086 = vadd.f32 %v1083, %v1085
  %v1088 = vrot.slane %v1076, 4
  %1089 = vrot.lane.b32.xlu0 %v1088, 64
  %v1090 = vpop.permute.xlu0 %1089
  %v1092 = vmul.f32 %v1077, %v1090
  %v1093 = vmul.f32 %v1084, %v965
  %v1094 = vadd.f32 %v1092, %v1093
  %1095 = vst.msk [vmem:[#allocation2 + $0xa] sm:$0x3] %vm411, %v1094
  %1096 = vst.msk [vmem:[#allocation2 + $0x4] sm:$0x3] %vm413, %v1094
  %v1098 = vsel %vm187, %v1094, 0
  %1100 = vmatprep.subr.mxu0 0.0
  %1101 = vmatpush1.msra.mxu0 0.0
  %1102 = vmatprep.subr.mxu0 0.0
  %1103 = vmatpush1.msra.mxu0 0.0
  %1104 = vmatprep.subr.mxu0 0.0
  %1105 = vmatpush1.msra.mxu0 0.0
  %1106 = vmatprep.subr.mxu0 0.0
  %1107 = vmatpush1.msra.mxu0 0.0
  %1108 = vmatprep.subr.mxu0 0.0
  %1109 = vmatpush1.msra.mxu0 0.0
  %1110 = vmatprep.subr.mxu0 0.0
  %1111 = vmatpush1.msra.mxu0 0.0
  %1112 = vmatprep.subr.mxu0 0.0
  %1113 = vmatpush1.msra.mxu0 0.0
  %1114 = vmatprep.subr.mxu0 0.0
  %1115 = vmatpush1.msra.mxu0 0.0
  %1116 = vmatprep.subr.mxu0 0.0
  %1117 = vmatpush1.msra.mxu0 0.0
  %1118 = vmatprep.subr.mxu0 0.0
  %1119 = vmatpush1.msra.mxu0 0.0
  %1120 = vmatprep.subr.mxu0 0.0
  %1121 = vmatpush1.msra.mxu0 0.0
  %1122 = vmatprep.subr.mxu0 0.0
  %1123 = vmatpush1.msra.mxu0 0.0
  %1124 = vmatprep.subr.mxu0 0.0
  %1125 = vmatpush1.msra.mxu0 %v272
  %1126 = vmatprep.subr.mxu0 0.0
  %1127 = vmatpush1.msra.mxu0 %v271
  %1128 = vmatprep.subr.mxu0 0.0
  %1129 = vmatpush1.msra.mxu0 %v270
  %1130 = vmatprep.subr.mxu0 0.0
  %1131 = vmatpush1.msra.mxu0 %v269
  %1132 = vmatprep.subr.mxu0 0.0
  %1133 = vmatpush2.msra.mxu0 0.0
  %1134 = vmatprep.subr.mxu0 0.0
  %1135 = vmatpush2.msra.mxu0 0.0
  %1136 = vmatprep.subr.mxu0 0.0
  %1137 = vmatpush2.msra.mxu0 0.0
  %1138 = vmatprep.subr.mxu0 0.0
  %1139 = vmatpush2.msra.mxu0 0.0
  %1140 = vmatprep.subr.mxu0 0.0
  %1141 = vmatpush2.msra.mxu0 0.0
  %1142 = vmatprep.subr.mxu0 0.0
  %1143 = vmatpush2.msra.mxu0 0.0
  %1144 = vmatprep.subr.mxu0 0.0
  %1145 = vmatpush2.msra.mxu0 0.0
  %1146 = vmatprep.subr.mxu0 0.0
  %1147 = vmatpush2.msra.mxu0 0.0
  %1148 = vmatprep.subr.mxu0 0.0
  %1149 = vmatpush2.msra.mxu0 0.0
  %1150 = vmatprep.subr.mxu0 0.0
  %1151 = vmatpush2.msra.mxu0 0.0
  %1152 = vmatprep.subr.mxu0 0.0
  %1153 = vmatpush2.msra.mxu0 0.0
  %1154 = vmatprep.subr.mxu0 0.0
  %1155 = vmatpush2.msra.mxu0 0.0
  %1156 = vmatprep.subr.mxu0 0.0
  %1157 = vmatpush2.msra.mxu0 0.0
  %1158 = vmatprep.subr.mxu0 0.0
  %1159 = vmatpush2.msra.mxu0 0.0
  %1160 = vmatprep.subr.mxu0 0.0
  %1161 = vmatpush2.msra.mxu0 0.0
  %1162 = vmatprep.subr.mxu0 0.0
  %1163 = vmatpush2.msra.mxu0 0.0
  %1164 = vmatprep.mubr.f32.mxu0 0.0
  %1165 = vmatmul.mubr.f32.gmra.mxu0 %v1098
  %v1166 = vpop.f32.mrf.mxu0
  %v1167 = vadd.f32 0.0, %v1166
  %v1168 = vpop.f32.mrf.mxu0
  %1169 = vdwg.mxu0
  %v1171 = vrot.slane %v1167, 6
  %v1173 = vadd.f32 %v841, %v1171
  %v1174 = vxor.u32 %v1173, 2147483648
  %v1175 = vmul.f32 %v1174, 1.442695
  %v1176 = vpow.pop %v1175
  %v1177 = vadd.f32 %v1176, 1.0
  %v1178 = vrcp.pop %v1177
  %v1179 = vmul.f32 1.0, %v1178
  %v1180 = vtanh.pop %v1173
  %v1182 = vrot.slane %v1086, 6
  %1183 = vrot.lane.b32.xlu0 %v1182, 32
  %v1184 = vpop.permute.xlu0 %1183
  %v1186 = vmul.f32 %v1179, %v1184
  %1188 = vrot.lane.b32.xlu0 %v1180, 32
  %v1189 = vpop.permute.xlu0 %1188
  %v1191 = vmul.f32 %v1179, %v1189
  %1193 = vrot.lane.b32.xlu0 %v1191, 32
  %v1194 = vpop.permute.xlu0 %1193
  %v1196 = vadd.f32 %v1186, %v1194
  %v1197 = vtanh.pop %v1196
  %1199 = vrot.lane.b32.xlu0 %v1197, 32
  %v1200 = vpop.permute.xlu0 %1199
  %v1202 = vmul.f32 %v1179, %v1200
  %v1203 = vsel %vm175, %v538, %v533
  %v1205 = vrot.slane %v1196, 2
  %1206 = vrot.lane.b32.xlu0 %v1205, 96
  %v1207 = vpop.permute.xlu0 %1206
  %v1209 = vmul.f32 %v1203, %v1207
  %v1210 = vsub.f32 1.0, %v1203
  %v1211 = vmul.f32 %v1210, %v1086
  %v1212 = vadd.f32 %v1209, %v1211
  %v1214 = vrot.slane %v1202, 2
  %1215 = vrot.lane.b32.xlu0 %v1214, 64
  %v1216 = vpop.permute.xlu0 %1215
  %v1218 = vmul.f32 %v1203, %v1216
  %v1219 = vmul.f32 %v1210, %v1094
  %v1220 = vadd.f32 %v1218, %v1219
  %1221 = vst.msk [vmem:[#allocation2 + $0xc] sm:$0x3] %vm411, %v1220
  %1222 = vst.msk [vmem:[#allocation2 + $0x2] sm:$0x3] %vm413, %v1220
  %v1224 = vsel %vm187, %v1220, 0
  %1226 = vmatprep.subr.mxu0 0.0
  %1227 = vmatpush1.msra.mxu0 0.0
  %1228 = vmatprep.subr.mxu0 0.0
  %1229 = vmatpush1.msra.mxu0 0.0
  %1230 = vmatprep.subr.mxu0 0.0
  %1231 = vmatpush1.msra.mxu0 0.0
  %1232 = vmatprep.subr.mxu0 0.0
  %1233 = vmatpush1.msra.mxu0 0.0
  %1234 = vmatprep.subr.mxu0 0.0
  %1235 = vmatpush1.msra.mxu0 0.0
  %1236 = vmatprep.subr.mxu0 0.0
  %1237 = vmatpush1.msra.mxu0 0.0
  %1238 = vmatprep.subr.mxu0 0.0
  %1239 = vmatpush1.msra.mxu0 0.0
  %1240 = vmatprep.subr.mxu0 0.0
  %1241 = vmatpush1.msra.mxu0 0.0
  %1242 = vmatprep.subr.mxu0 0.0
  %1243 = vmatpush1.msra.mxu0 0.0
  %1244 = vmatprep.subr.mxu0 0.0
  %1245 = vmatpush1.msra.mxu0 0.0
  %1246 = vmatprep.subr.mxu0 0.0
  %1247 = vmatpush1.msra.mxu0 0.0
  %1248 = vmatprep.subr.mxu0 0.0
  %1249 = vmatpush1.msra.mxu0 0.0
  %1250 = vmatprep.subr.mxu0 0.0
  %1251 = vmatpush1.msra.mxu0 %v272
  %1252 = vmatprep.subr.mxu0 0.0
  %1253 = vmatpush1.msra.mxu0 %v271
  %1254 = vmatprep.subr.mxu0 0.0
  %1255 = vmatpush1.msra.mxu0 %v270
  %1256 = vmatprep.subr.mxu0 0.0
  %1257 = vmatpush1.msra.mxu0 %v269
  %1258 = vmatprep.subr.mxu0 0.0
  %1259 = vmatpush2.msra.mxu0 0.0
  %1260 = vmatprep.subr.mxu0 0.0
  %1261 = vmatpush2.msra.mxu0 0.0
  %1262 = vmatprep.subr.mxu0 0.0
  %1263 = vmatpush2.msra.mxu0 0.0
  %1264 = vmatprep.subr.mxu0 0.0
  %1265 = vmatpush2.msra.mxu0 0.0
  %1266 = vmatprep.subr.mxu0 0.0
  %1267 = vmatpush2.msra.mxu0 0.0
  %1268 = vmatprep.subr.mxu0 0.0
  %1269 = vmatpush2.msra.mxu0 0.0
  %1270 = vmatprep.subr.mxu0 0.0
  %1271 = vmatpush2.msra.mxu0 0.0
  %1272 = vmatprep.subr.mxu0 0.0
  %1273 = vmatpush2.msra.mxu0 0.0
  %1274 = vmatprep.subr.mxu0 0.0
  %1275 = vmatpush2.msra.mxu0 0.0
  %1276 = vmatprep.subr.mxu0 0.0
  %1277 = vmatpush2.msra.mxu0 0.0
  %1278 = vmatprep.subr.mxu0 0.0
  %1279 = vmatpush2.msra.mxu0 0.0
  %1280 = vmatprep.subr.mxu0 0.0
  %1281 = vmatpush2.msra.mxu0 0.0
  %1282 = vmatprep.subr.mxu0 0.0
  %1283 = vmatpush2.msra.mxu0 0.0
  %1284 = vmatprep.subr.mxu0 0.0
  %1285 = vmatpush2.msra.mxu0 0.0
  %1286 = vmatprep.subr.mxu0 0.0
  %1287 = vmatpush2.msra.mxu0 0.0
  %1288 = vmatprep.subr.mxu0 0.0
  %1289 = vmatpush2.msra.mxu0 0.0
  %1290 = vmatprep.mubr.f32.mxu0 0.0
  %1291 = vmatmul.mubr.f32.gmra.mxu0 %v1224
  %v1292 = vpop.f32.mrf.mxu0
  %v1293 = vadd.f32 0.0, %v1292
  %v1294 = vpop.f32.mrf.mxu0
  %1295 = vdwg.mxu0
  %v1296 = vadd.f32 %v970, %v1293
  %v1297 = vxor.u32 %v1296, 2147483648
  %v1298 = vmul.f32 %v1297, 1.442695
  %v1299 = vpow.pop %v1298
  %v1300 = vadd.f32 %v1299, 1.0
  %v1301 = vrcp.pop %v1300
  %v1302 = vmul.f32 1.0, %v1301
  %v1303 = vtanh.pop %v1296
  %1305 = vrot.lane.b32.xlu0 %v1212, 32
  %v1306 = vpop.permute.xlu0 %1305
  %v1308 = vmul.f32 %v1302, %v1306
  %1310 = vrot.lane.b32.xlu0 %v1303, 32
  %v1311 = vpop.permute.xlu0 %1310
  %v1313 = vmul.f32 %v1302, %v1311
  %1315 = vrot.lane.b32.xlu0 %v1313, 32
  %v1316 = vpop.permute.xlu0 %1315
  %v1318 = vadd.f32 %v1308, %v1316
  %v1319 = vtanh.pop %v1318
  %1321 = vrot.lane.b32.xlu0 %v1319, 32
  %v1322 = vpop.permute.xlu0 %1321
  %v1324 = vmul.f32 %v1302, %v1322
  %v1325 = vsel %vm175, %v392, %v387
  %1327 = vrot.lane.b32.xlu0 %v1324, 64
  %v1328 = vpop.permute.xlu0 %1327
  %v1330 = vmul.f32 %v1325, %v1328
  %v1331 = vsub.f32 1.0, %v1325
  %v1332 = vmul.f32 %v1331, %v1220
  %v1333 = vadd.f32 %v1330, %v1332
  %1334 = vst.msk [vmem:[#allocation2 + $0xe] sm:$0x3] %vm411, %v1333
  %1335 = vst.msk [vmem:[#allocation2] sm:$0x3] %vm413, %v1333
  %v1336 = vld [vmem:[#allocation2] sm:$0xff]
  %v1337 = vld [vmem:[#allocation2 + $0x8] sm:$0xff]
  %s1338 = scalar_lea.vmem %s3, 32
  %v1339 = vld [vmem:[%s1338] sm:$0xff]
  %v1340 = vld [vmem:[%s1338 + $0x8] sm:$0xff]
  %v1341 = vld [vmem:[%s1338 + $0x10] sm:$0xff]
  %v1342 = vld [vmem:[%s1338 + $0x18] sm:$0xff]
  %s1343 = scalar_lea.vmem %s5, 1
  %v1344 = vld [vmem:[%s1343] sm:$0x1]
  %v1346 = vlaneseq
  %v1347 = vshrl.u32 %v1346, 7
  %v1348 = vsub.s32 0, %v1347
  %v1349 = vrot.slane %v1344, %v1348
  %v1352 = vsel %vm187, %v1336, 0
  %v1355 = vsel %vm187, %v1337, 0
  %1357 = vmatprep.subr.mxu0 0.0
  %1358 = vmatpush1.msra.mxu0 0.0
  %1359 = vmatprep.subr.mxu0 0.0
  %1360 = vmatpush1.msra.mxu0 0.0
  %1361 = vmatprep.subr.mxu0 0.0
  %1362 = vmatpush1.msra.mxu0 0.0
  %1363 = vmatprep.subr.mxu0 0.0
  %1364 = vmatpush1.msra.mxu0 0.0
  %1365 = vmatprep.subr.mxu0 0.0
  %1366 = vmatpush1.msra.mxu0 0.0
  %1367 = vmatprep.subr.mxu0 0.0
  %1368 = vmatpush1.msra.mxu0 0.0
  %1369 = vmatprep.subr.mxu0 0.0
  %1370 = vmatpush1.msra.mxu0 0.0
  %1371 = vmatprep.subr.mxu0 0.0
  %1372 = vmatpush1.msra.mxu0 0.0
  %1373 = vmatprep.subr.mxu0 0.0
  %1374 = vmatpush1.msra.mxu0 0.0
  %1375 = vmatprep.subr.mxu0 0.0
  %1376 = vmatpush1.msra.mxu0 0.0
  %1377 = vmatprep.subr.mxu0 0.0
  %1378 = vmatpush1.msra.mxu0 0.0
  %1379 = vmatprep.subr.mxu0 0.0
  %1380 = vmatpush1.msra.mxu0 0.0
  %1381 = vmatprep.subr.mxu0 0.0
  %1382 = vmatpush1.msra.mxu0 %v1342
  %1383 = vmatprep.subr.mxu0 0.0
  %1384 = vmatpush1.msra.mxu0 %v1341
  %1385 = vmatprep.subr.mxu0 0.0
  %1386 = vmatpush1.msra.mxu0 %v1340
  %1387 = vmatprep.subr.mxu0 0.0
  %1388 = vmatpush1.msra.mxu0 %v1339
  %1389 = vmatprep.subr.mxu0 0.0
  %1390 = vmatpush2.msra.mxu0 0.0
  %1391 = vmatprep.subr.mxu0 0.0
  %1392 = vmatpush2.msra.mxu0 0.0
  %1393 = vmatprep.subr.mxu0 0.0
  %1394 = vmatpush2.msra.mxu0 0.0
  %1395 = vmatprep.subr.mxu0 0.0
  %1396 = vmatpush2.msra.mxu0 0.0
  %1397 = vmatprep.subr.mxu0 0.0
  %1398 = vmatpush2.msra.mxu0 0.0
  %1399 = vmatprep.subr.mxu0 0.0
  %1400 = vmatpush2.msra.mxu0 0.0
  %1401 = vmatprep.subr.mxu0 0.0
  %1402 = vmatpush2.msra.mxu0 0.0
  %1403 = vmatprep.subr.mxu0 0.0
  %1404 = vmatpush2.msra.mxu0 0.0
  %1405 = vmatprep.subr.mxu0 0.0
  %1406 = vmatpush2.msra.mxu0 0.0
  %1407 = vmatprep.subr.mxu0 0.0
  %1408 = vmatpush2.msra.mxu0 0.0
  %1409 = vmatprep.subr.mxu0 0.0
  %1410 = vmatpush2.msra.mxu0 0.0
  %1411 = vmatprep.subr.mxu0 0.0
  %1412 = vmatpush2.msra.mxu0 0.0
  %1413 = vmatprep.subr.mxu0 0.0
  %1414 = vmatpush2.msra.mxu0 0.0
  %1415 = vmatprep.subr.mxu0 0.0
  %1416 = vmatpush2.msra.mxu0 0.0
  %1417 = vmatprep.subr.mxu0 0.0
  %1418 = vmatpush2.msra.mxu0 0.0
  %1419 = vmatprep.subr.mxu0 0.0
  %1420 = vmatpush2.msra.mxu0 0.0
  %1421 = vmatprep.mubr.f32.mxu0 0.0
  %1422 = vmatmul.mubr.f32.gmra.mxu0 %v1352
  %v1423 = vpop.f32.mrf.mxu0
  %v1424 = vadd.f32 %v1349, %v1423
  %v1425 = vpop.f32.mrf.mxu0
  %1426 = vmatprep.mubr.f32.mxu0 0.0
  %1427 = vmatmul.mubr.f32.gmra.mxu0 %v1355
  %v1428 = vpop.f32.mrf.mxu0
  %v1429 = vadd.f32 %v1349, %v1428
  %v1430 = vpop.f32.mrf.mxu0
  %1431 = vdwg.mxu0
  %s1432 = scalar_lea.vmem %s4, 32
  %v1433 = vld [vmem:[%s1432] sm:$0xff]
  %v1434 = vld [vmem:[%s1432 + $0x8] sm:$0xff]
  %v1435 = vld [vmem:[%s1432 + $0x10] sm:$0xff]
  %v1436 = vld [vmem:[%s1432 + $0x18] sm:$0xff]
  %v1438 = vrot.slane %v1424, 2
  %v1440 = vsel %vm174, %v1429, %v1438
  %1441 = vmatprep.subr.mxu0 0.0
  %1442 = vmatpush1.msra.mxu0 0.0
  %1443 = vmatprep.subr.mxu0 0.0
  %1444 = vmatpush1.msra.mxu0 0.0
  %1445 = vmatprep.subr.mxu0 0.0
  %1446 = vmatpush1.msra.mxu0 0.0
  %1447 = vmatprep.subr.mxu0 0.0
  %1448 = vmatpush1.msra.mxu0 0.0
  %1449 = vmatprep.subr.mxu0 0.0
  %1450 = vmatpush1.msra.mxu0 0.0
  %1451 = vmatprep.subr.mxu0 0.0
  %1452 = vmatpush1.msra.mxu0 0.0
  %1453 = vmatprep.subr.mxu0 0.0
  %1454 = vmatpush1.msra.mxu0 0.0
  %1455 = vmatprep.subr.mxu0 0.0
  %1456 = vmatpush1.msra.mxu0 0.0
  %1457 = vmatprep.subr.mxu0 0.0
  %1458 = vmatpush1.msra.mxu0 0.0
  %1459 = vmatprep.subr.mxu0 0.0
  %1460 = vmatpush1.msra.mxu0 0.0
  %1461 = vmatprep.subr.mxu0 0.0
  %1462 = vmatpush1.msra.mxu0 0.0
  %1463 = vmatprep.subr.mxu0 0.0
  %1464 = vmatpush1.msra.mxu0 0.0
  %1465 = vmatprep.subr.mxu0 0.0
  %1466 = vmatpush1.msra.mxu0 %v1436
  %1467 = vmatprep.subr.mxu0 0.0
  %1468 = vmatpush1.msra.mxu0 %v1435
  %1469 = vmatprep.subr.mxu0 0.0
  %1470 = vmatpush1.msra.mxu0 %v1434
  %1471 = vmatprep.subr.mxu0 0.0
  %1472 = vmatpush1.msra.mxu0 %v1433
  %1473 = vmatprep.subr.mxu0 0.0
  %1474 = vmatpush2.msra.mxu0 0.0
  %1475 = vmatprep.subr.mxu0 0.0
  %1476 = vmatpush2.msra.mxu0 0.0
  %1477 = vmatprep.subr.mxu0 0.0
  %1478 = vmatpush2.msra.mxu0 0.0
  %1479 = vmatprep.subr.mxu0 0.0
  %1480 = vmatpush2.msra.mxu0 0.0
  %1481 = vmatprep.subr.mxu0 0.0
  %1482 = vmatpush2.msra.mxu0 0.0
  %1483 = vmatprep.subr.mxu0 0.0
  %1484 = vmatpush2.msra.mxu0 0.0
  %1485 = vmatprep.subr.mxu0 0.0
  %1486 = vmatpush2.msra.mxu0 0.0
  %1487 = vmatprep.subr.mxu0 0.0
  %1488 = vmatpush2.msra.mxu0 0.0
  %1489 = vmatprep.subr.mxu0 0.0
  %1490 = vmatpush2.msra.mxu0 0.0
  %1491 = vmatprep.subr.mxu0 0.0
  %1492 = vmatpush2.msra.mxu0 0.0
  %1493 = vmatprep.subr.mxu0 0.0
  %1494 = vmatpush2.msra.mxu0 0.0
  %1495 = vmatprep.subr.mxu0 0.0
  %1496 = vmatpush2.msra.mxu0 0.0
  %1497 = vmatprep.subr.mxu0 0.0
  %1498 = vmatpush2.msra.mxu0 0.0
  %1499 = vmatprep.subr.mxu0 0.0
  %1500 = vmatpush2.msra.mxu0 0.0
  %1501 = vmatprep.subr.mxu0 0.0
  %1502 = vmatpush2.msra.mxu0 0.0
  %1503 = vmatprep.subr.mxu0 0.0
  %1504 = vmatpush2.msra.mxu0 0.0
  %1505 = vmatprep.mubr.f32.mxu0 0.0
  %1506 = vmatmul.mubr.f32.gmra.mxu0 %v278
  %v1507 = vpop.f32.mrf.mxu0
  %v1508 = vadd.f32 0.0, %v1507
  %v1509 = vpop.f32.mrf.mxu0
  %1510 = vdwg.mxu0
  %v1512 = vrot.slane %v1508, 2
  %v1514 = vadd.f32 %v1440, %v1512
  %v1515 = vxor.u32 %v1514, 2147483648
  %v1516 = vmul.f32 %v1515, 1.442695
  %v1517 = vpow.pop %v1516
  %v1518 = vadd.f32 %v1517, 1.0
  %v1519 = vrcp.pop %v1518
  %v1520 = vmul.f32 1.0, %v1519
  %v1521 = vtanh.pop %v1514
  %v1522 = vmul.f32 %v1520, 0.0
  %1524 = vrot.lane.b32.xlu0 %v1521, 32
  %v1525 = vpop.permute.xlu0 %1524
  %v1527 = vmul.f32 %v1520, %v1525
  %1529 = vrot.lane.b32.xlu0 %v1527, 32
  %v1530 = vpop.permute.xlu0 %1529
  %v1532 = vadd.f32 %v1522, %v1530
  %v1533 = vtanh.pop %v1532
  %1535 = vrot.lane.b32.xlu0 %v1533, 32
  %v1536 = vpop.permute.xlu0 %1535
  %v1538 = vmul.f32 %v1520, %v1536
  %v1540 = vrot.slane %v1532, 6
  %1541 = vrot.lane.b32.xlu0 %v1540, 96
  %v1542 = vpop.permute.xlu0 %1541
  %v1544 = vmul.f32 %v394, %v1542
  %v1545 = vadd.f32 %v1544, %v402
  %v1547 = vrot.slane %v1538, 6
  %1548 = vrot.lane.b32.xlu0 %v1547, 64
  %v1549 = vpop.permute.xlu0 %1548
  %v1551 = vmul.f32 %v394, %v1549
  %v1552 = vadd.f32 %v1551, %v402
  %1553 = vst.msk [vmem:[%s6] sm:$0x3] %vm411, %v1552
  %v1556 = vunpack.c.l.s4 1983009808
  %v1557 = vunpack.c.0.s8 %v1556
  %v1558 = vlaneseq
  %v1559 = vshrl.u32 %v1558, 7
  %v1560 = vsub.s32 %v1557, %v1559
  %v1561 = vrot.slane %v1552, %v1560
  %1562 = vrot.lane.b32.xlu0 %v1561, 96
  %v1563 = vpop.permute.xlu0 %1562
  %vm1565 = vcmask 1042304
  %1566 = vst.msk [vmem:[%s6 + $0x2] sm:$0x3] %vm1565, %v1563
  %v1567 = vrot.slane %v1424, 6
  %v1569 = vsel %vm174, %v1429, %v1567
  %v1570 = vsel %vm187, %v1552, 0
  %1572 = vmatprep.subr.mxu0 0.0
  %1573 = vmatpush1.msra.mxu0 0.0
  %1574 = vmatprep.subr.mxu0 0.0
  %1575 = vmatpush1.msra.mxu0 0.0
  %1576 = vmatprep.subr.mxu0 0.0
  %1577 = vmatpush1.msra.mxu0 0.0
  %1578 = vmatprep.subr.mxu0 0.0
  %1579 = vmatpush1.msra.mxu0 0.0
  %1580 = vmatprep.subr.mxu0 0.0
  %1581 = vmatpush1.msra.mxu0 0.0
  %1582 = vmatprep.subr.mxu0 0.0
  %1583 = vmatpush1.msra.mxu0 0.0
  %1584 = vmatprep.subr.mxu0 0.0
  %1585 = vmatpush1.msra.mxu0 0.0
  %1586 = vmatprep.subr.mxu0 0.0
  %1587 = vmatpush1.msra.mxu0 0.0
  %1588 = vmatprep.subr.mxu0 0.0
  %1589 = vmatpush1.msra.mxu0 0.0
  %1590 = vmatprep.subr.mxu0 0.0
  %1591 = vmatpush1.msra.mxu0 0.0
  %1592 = vmatprep.subr.mxu0 0.0
  %1593 = vmatpush1.msra.mxu0 0.0
  %1594 = vmatprep.subr.mxu0 0.0
  %1595 = vmatpush1.msra.mxu0 0.0
  %1596 = vmatprep.subr.mxu0 0.0
  %1597 = vmatpush1.msra.mxu0 %v1436
  %1598 = vmatprep.subr.mxu0 0.0
  %1599 = vmatpush1.msra.mxu0 %v1435
  %1600 = vmatprep.subr.mxu0 0.0
  %1601 = vmatpush1.msra.mxu0 %v1434
  %1602 = vmatprep.subr.mxu0 0.0
  %1603 = vmatpush1.msra.mxu0 %v1433
  %1604 = vmatprep.subr.mxu0 0.0
  %1605 = vmatpush2.msra.mxu0 0.0
  %1606 = vmatprep.subr.mxu0 0.0
  %1607 = vmatpush2.msra.mxu0 0.0
  %1608 = vmatprep.subr.mxu0 0.0
  %1609 = vmatpush2.msra.mxu0 0.0
  %1610 = vmatprep.subr.mxu0 0.0
  %1611 = vmatpush2.msra.mxu0 0.0
  %1612 = vmatprep.subr.mxu0 0.0
  %1613 = vmatpush2.msra.mxu0 0.0
  %1614 = vmatprep.subr.mxu0 0.0
  %1615 = vmatpush2.msra.mxu0 0.0
  %1616 = vmatprep.subr.mxu0 0.0
  %1617 = vmatpush2.msra.mxu0 0.0
  %1618 = vmatprep.subr.mxu0 0.0
  %1619 = vmatpush2.msra.mxu0 0.0
  %1620 = vmatprep.subr.mxu0 0.0
  %1621 = vmatpush2.msra.mxu0 0.0
  %1622 = vmatprep.subr.mxu0 0.0
  %1623 = vmatpush2.msra.mxu0 0.0
  %1624 = vmatprep.subr.mxu0 0.0
  %1625 = vmatpush2.msra.mxu0 0.0
  %1626 = vmatprep.subr.mxu0 0.0
  %1627 = vmatpush2.msra.mxu0 0.0
  %1628 = vmatprep.subr.mxu0 0.0
  %1629 = vmatpush2.msra.mxu0 0.0
  %1630 = vmatprep.subr.mxu0 0.0
  %1631 = vmatpush2.msra.mxu0 0.0
  %1632 = vmatprep.subr.mxu0 0.0
  %1633 = vmatpush2.msra.mxu0 0.0
  %1634 = vmatprep.subr.mxu0 0.0
  %1635 = vmatpush2.msra.mxu0 0.0
  %1636 = vmatprep.mubr.f32.mxu0 0.0
  %1637 = vmatmul.mubr.f32.gmra.mxu0 %v1570
  %v1638 = vpop.f32.mrf.mxu0
  %v1639 = vadd.f32 0.0, %v1638
  %v1640 = vpop.f32.mrf.mxu0
  %1641 = vdwg.mxu0
  %v1643 = vrot.slane %v1639, 4
  %v1645 = vadd.f32 %v1569, %v1643
  %v1646 = vxor.u32 %v1645, 2147483648
  %v1647 = vmul.f32 %v1646, 1.442695
  %v1648 = vpow.pop %v1647
  %v1649 = vadd.f32 %v1648, 1.0
  %v1650 = vrcp.pop %v1649
  %v1651 = vmul.f32 1.0, %v1650
  %v1652 = vtanh.pop %v1645
  %v1654 = vrot.slane %v1545, 4
  %1655 = vrot.lane.b32.xlu0 %v1654, 32
  %v1656 = vpop.permute.xlu0 %1655
  %v1658 = vmul.f32 %v1651, %v1656
  %1660 = vrot.lane.b32.xlu0 %v1652, 32
  %v1661 = vpop.permute.xlu0 %1660
  %v1663 = vmul.f32 %v1651, %v1661
  %1665 = vrot.lane.b32.xlu0 %v1663, 32
  %v1666 = vpop.permute.xlu0 %1665
  %v1668 = vadd.f32 %v1658, %v1666
  %v1669 = vtanh.pop %v1668
  %1671 = vrot.lane.b32.xlu0 %v1669, 32
  %v1672 = vpop.permute.xlu0 %1671
  %v1674 = vmul.f32 %v1651, %v1672
  %v1676 = vrot.slane %v1668, 4
  %1677 = vrot.lane.b32.xlu0 %v1676, 96
  %v1678 = vpop.permute.xlu0 %1677
  %v1680 = vmul.f32 %v540, %v1678
  %v1681 = vmul.f32 %v547, %v1545
  %v1682 = vadd.f32 %v1680, %v1681
  %v1684 = vrot.slane %v1674, 4
  %1685 = vrot.lane.b32.xlu0 %v1684, 64
  %v1686 = vpop.permute.xlu0 %1685
  %v1688 = vmul.f32 %v540, %v1686
  %v1689 = vmul.f32 %v547, %v1552
  %v1690 = vadd.f32 %v1688, %v1689
  %v1693 = vunpack.c.l.s4 1983009808
  %v1694 = vunpack.c.0.s8 %v1693
  %v1695 = vlaneseq
  %v1696 = vshrl.u32 %v1695, 7
  %v1697 = vsub.s32 %v1694, %v1696
  %v1698 = vrot.slane %v1690, %v1697
  %1699 = vrot.lane.b32.xlu0 %v1698, 32
  %v1700 = vpop.permute.xlu0 %1699
  %vm1702 = vcmask 386304
  %1703 = vst.msk [vmem:[%s6] sm:$0x3] %vm1702, %v1700
  %1704 = vrot.lane.b32.xlu0 %v1698, 64
  %v1705 = vpop.permute.xlu0 %1704
  %vm1707 = vcmask 779904
  %1708 = vst.msk [vmem:[%s6 + $0x2] sm:$0x3] %vm1707, %v1705
  %v1709 = vsel %vm187, %v1690, 0
  %1711 = vmatprep.subr.mxu0 0.0
  %1712 = vmatpush1.msra.mxu0 0.0
  %1713 = vmatprep.subr.mxu0 0.0
  %1714 = vmatpush1.msra.mxu0 0.0
  %1715 = vmatprep.subr.mxu0 0.0
  %1716 = vmatpush1.msra.mxu0 0.0
  %1717 = vmatprep.subr.mxu0 0.0
  %1718 = vmatpush1.msra.mxu0 0.0
  %1719 = vmatprep.subr.mxu0 0.0
  %1720 = vmatpush1.msra.mxu0 0.0
  %1721 = vmatprep.subr.mxu0 0.0
  %1722 = vmatpush1.msra.mxu0 0.0
  %1723 = vmatprep.subr.mxu0 0.0
  %1724 = vmatpush1.msra.mxu0 0.0
  %1725 = vmatprep.subr.mxu0 0.0
  %1726 = vmatpush1.msra.mxu0 0.0
  %1727 = vmatprep.subr.mxu0 0.0
  %1728 = vmatpush1.msra.mxu0 0.0
  %1729 = vmatprep.subr.mxu0 0.0
  %1730 = vmatpush1.msra.mxu0 0.0
  %1731 = vmatprep.subr.mxu0 0.0
  %1732 = vmatpush1.msra.mxu0 0.0
  %1733 = vmatprep.subr.mxu0 0.0
  %1734 = vmatpush1.msra.mxu0 0.0
  %1735 = vmatprep.subr.mxu0 0.0
  %1736 = vmatpush1.msra.mxu0 %v1436
  %1737 = vmatprep.subr.mxu0 0.0
  %1738 = vmatpush1.msra.mxu0 %v1435
  %1739 = vmatprep.subr.mxu0 0.0
  %1740 = vmatpush1.msra.mxu0 %v1434
  %1741 = vmatprep.subr.mxu0 0.0
  %1742 = vmatpush1.msra.mxu0 %v1433
  %1743 = vmatprep.subr.mxu0 0.0
  %1744 = vmatpush2.msra.mxu0 0.0
  %1745 = vmatprep.subr.mxu0 0.0
  %1746 = vmatpush2.msra.mxu0 0.0
  %1747 = vmatprep.subr.mxu0 0.0
  %1748 = vmatpush2.msra.mxu0 0.0
  %1749 = vmatprep.subr.mxu0 0.0
  %1750 = vmatpush2.msra.mxu0 0.0
  %1751 = vmatprep.subr.mxu0 0.0
  %1752 = vmatpush2.msra.mxu0 0.0
  %1753 = vmatprep.subr.mxu0 0.0
  %1754 = vmatpush2.msra.mxu0 0.0
  %1755 = vmatprep.subr.mxu0 0.0
  %1756 = vmatpush2.msra.mxu0 0.0
  %1757 = vmatprep.subr.mxu0 0.0
  %1758 = vmatpush2.msra.mxu0 0.0
  %1759 = vmatprep.subr.mxu0 0.0
  %1760 = vmatpush2.msra.mxu0 0.0
  %1761 = vmatprep.subr.mxu0 0.0
  %1762 = vmatpush2.msra.mxu0 0.0
  %1763 = vmatprep.subr.mxu0 0.0
  %1764 = vmatpush2.msra.mxu0 0.0
  %1765 = vmatprep.subr.mxu0 0.0
  %1766 = vmatpush2.msra.mxu0 0.0
  %1767 = vmatprep.subr.mxu0 0.0
  %1768 = vmatpush2.msra.mxu0 0.0
  %1769 = vmatprep.subr.mxu0 0.0
  %1770 = vmatpush2.msra.mxu0 0.0
  %1771 = vmatprep.subr.mxu0 0.0
  %1772 = vmatpush2.msra.mxu0 0.0
  %1773 = vmatprep.subr.mxu0 0.0
  %1774 = vmatpush2.msra.mxu0 0.0
  %1775 = vmatprep.mubr.f32.mxu0 0.0
  %1776 = vmatmul.mubr.f32.gmra.mxu0 %v1709
  %v1777 = vpop.f32.mrf.mxu0
  %v1778 = vadd.f32 0.0, %v1777
  %v1779 = vpop.f32.mrf.mxu0
  %1780 = vdwg.mxu0
  %v1782 = vrot.slane %v1778, 6
  %v1784 = vadd.f32 %v1440, %v1782
  %v1785 = vxor.u32 %v1784, 2147483648
  %v1786 = vmul.f32 %v1785, 1.442695
  %v1787 = vpow.pop %v1786
  %v1788 = vadd.f32 %v1787, 1.0
  %v1789 = vrcp.pop %v1788
  %v1790 = vmul.f32 1.0, %v1789
  %v1791 = vtanh.pop %v1784
  %v1793 = vrot.slane %v1682, 6
  %1794 = vrot.lane.b32.xlu0 %v1793, 32
  %v1795 = vpop.permute.xlu0 %1794
  %v1797 = vmul.f32 %v1790, %v1795
  %1799 = vrot.lane.b32.xlu0 %v1791, 32
  %v1800 = vpop.permute.xlu0 %1799
  %v1802 = vmul.f32 %v1790, %v1800
  %1804 = vrot.lane.b32.xlu0 %v1802, 32
  %v1805 = vpop.permute.xlu0 %1804
  %v1807 = vadd.f32 %v1797, %v1805
  %v1808 = vtanh.pop %v1807
  %1810 = vrot.lane.b32.xlu0 %v1808, 32
  %v1811 = vpop.permute.xlu0 %1810
  %v1813 = vmul.f32 %v1790, %v1811
  %v1815 = vrot.slane %v1807, 2
  %1816 = vrot.lane.b32.xlu0 %v1815, 96
  %v1817 = vpop.permute.xlu0 %1816
  %v1819 = vmul.f32 %v682, %v1817
  %v1820 = vmul.f32 %v689, %v1682
  %v1821 = vadd.f32 %v1819, %v1820
  %v1823 = vrot.slane %v1813, 2
  %1824 = vrot.lane.b32.xlu0 %v1823, 64
  %v1825 = vpop.permute.xlu0 %1824
  %v1827 = vmul.f32 %v682, %v1825
  %v1828 = vmul.f32 %v689, %v1690
  %v1829 = vadd.f32 %v1827, %v1828
  %v1832 = vunpack.c.l.s4 1983009808
  %v1833 = vunpack.c.0.s8 %v1832
  %v1834 = vlaneseq
  %v1835 = vshrl.u32 %v1834, 7
  %v1836 = vsub.s32 %v1833, %v1835
  %v1837 = vrot.slane %v1829, %v1836
  %1838 = vrot.lane.b32.xlu0 %v1837, 64
  %v1839 = vpop.permute.xlu0 %1838
  %vm1841 = vcmask 648704
  %1842 = vst.msk [vmem:[%s6] sm:$0x3] %vm1841, %v1839
  %1843 = vrot.lane.b32.xlu0 %v1837, 32
  %v1844 = vpop.permute.xlu0 %1843
  %vm1846 = vcmask 517504
  %1847 = vst.msk [vmem:[%s6 + $0x2] sm:$0x3] %vm1846, %v1844
  %v1848 = vsel %vm187, %v1829, 0
  %1850 = vmatprep.subr.mxu0 0.0
  %1851 = vmatpush1.msra.mxu0 0.0
  %1852 = vmatprep.subr.mxu0 0.0
  %1853 = vmatpush1.msra.mxu0 0.0
  %1854 = vmatprep.subr.mxu0 0.0
  %1855 = vmatpush1.msra.mxu0 0.0
  %1856 = vmatprep.subr.mxu0 0.0
  %1857 = vmatpush1.msra.mxu0 0.0
  %1858 = vmatprep.subr.mxu0 0.0
  %1859 = vmatpush1.msra.mxu0 0.0
  %1860 = vmatprep.subr.mxu0 0.0
  %1861 = vmatpush1.msra.mxu0 0.0
  %1862 = vmatprep.subr.mxu0 0.0
  %1863 = vmatpush1.msra.mxu0 0.0
  %1864 = vmatprep.subr.mxu0 0.0
  %1865 = vmatpush1.msra.mxu0 0.0
  %1866 = vmatprep.subr.mxu0 0.0
  %1867 = vmatpush1.msra.mxu0 0.0
  %1868 = vmatprep.subr.mxu0 0.0
  %1869 = vmatpush1.msra.mxu0 0.0
  %1870 = vmatprep.subr.mxu0 0.0
  %1871 = vmatpush1.msra.mxu0 0.0
  %1872 = vmatprep.subr.mxu0 0.0
  %1873 = vmatpush1.msra.mxu0 0.0
  %1874 = vmatprep.subr.mxu0 0.0
  %1875 = vmatpush1.msra.mxu0 %v1436
  %1876 = vmatprep.subr.mxu0 0.0
  %1877 = vmatpush1.msra.mxu0 %v1435
  %1878 = vmatprep.subr.mxu0 0.0
  %1879 = vmatpush1.msra.mxu0 %v1434
  %1880 = vmatprep.subr.mxu0 0.0
  %1881 = vmatpush1.msra.mxu0 %v1433
  %1882 = vmatprep.subr.mxu0 0.0
  %1883 = vmatpush2.msra.mxu0 0.0
  %1884 = vmatprep.subr.mxu0 0.0
  %1885 = vmatpush2.msra.mxu0 0.0
  %1886 = vmatprep.subr.mxu0 0.0
  %1887 = vmatpush2.msra.mxu0 0.0
  %1888 = vmatprep.subr.mxu0 0.0
  %1889 = vmatpush2.msra.mxu0 0.0
  %1890 = vmatprep.subr.mxu0 0.0
  %1891 = vmatpush2.msra.mxu0 0.0
  %1892 = vmatprep.subr.mxu0 0.0
  %1893 = vmatpush2.msra.mxu0 0.0
  %1894 = vmatprep.subr.mxu0 0.0
  %1895 = vmatpush2.msra.mxu0 0.0
  %1896 = vmatprep.subr.mxu0 0.0
  %1897 = vmatpush2.msra.mxu0 0.0
  %1898 = vmatprep.subr.mxu0 0.0
  %1899 = vmatpush2.msra.mxu0 0.0
  %1900 = vmatprep.subr.mxu0 0.0
  %1901 = vmatpush2.msra.mxu0 0.0
  %1902 = vmatprep.subr.mxu0 0.0
  %1903 = vmatpush2.msra.mxu0 0.0
  %1904 = vmatprep.subr.mxu0 0.0
  %1905 = vmatpush2.msra.mxu0 0.0
  %1906 = vmatprep.subr.mxu0 0.0
  %1907 = vmatpush2.msra.mxu0 0.0
  %1908 = vmatprep.subr.mxu0 0.0
  %1909 = vmatpush2.msra.mxu0 0.0
  %1910 = vmatprep.subr.mxu0 0.0
  %1911 = vmatpush2.msra.mxu0 0.0
  %1912 = vmatprep.subr.mxu0 0.0
  %1913 = vmatpush2.msra.mxu0 0.0
  %1914 = vmatprep.mubr.f32.mxu0 0.0
  %1915 = vmatmul.mubr.f32.gmra.mxu0 %v1848
  %v1916 = vpop.f32.mrf.mxu0
  %v1917 = vadd.f32 0.0, %v1916
  %v1918 = vpop.f32.mrf.mxu0
  %1919 = vdwg.mxu0
  %v1920 = vadd.f32 %v1569, %v1917
  %v1921 = vxor.u32 %v1920, 2147483648
  %v1922 = vmul.f32 %v1921, 1.442695
  %v1923 = vpow.pop %v1922
  %v1924 = vadd.f32 %v1923, 1.0
  %v1925 = vrcp.pop %v1924
  %v1926 = vmul.f32 1.0, %v1925
  %v1927 = vtanh.pop %v1920
  %1929 = vrot.lane.b32.xlu0 %v1821, 32
  %v1930 = vpop.permute.xlu0 %1929
  %v1932 = vmul.f32 %v1926, %v1930
  %1934 = vrot.lane.b32.xlu0 %v1927, 32
  %v1935 = vpop.permute.xlu0 %1934
  %v1937 = vmul.f32 %v1926, %v1935
  %1939 = vrot.lane.b32.xlu0 %v1937, 32
  %v1940 = vpop.permute.xlu0 %1939
  %v1942 = vadd.f32 %v1932, %v1940
  %v1943 = vtanh.pop %v1942
  %1945 = vrot.lane.b32.xlu0 %v1943, 32
  %v1946 = vpop.permute.xlu0 %1945
  %v1948 = vmul.f32 %v1926, %v1946
  %1950 = vrot.lane.b32.xlu0 %v1942, 96
  %v1951 = vpop.permute.xlu0 %1950
  %v1953 = vmul.f32 %v820, %v1951
  %v1954 = vmul.f32 %v826, %v1821
  %v1955 = vadd.f32 %v1953, %v1954
  %1957 = vrot.lane.b32.xlu0 %v1948, 64
  %v1958 = vpop.permute.xlu0 %1957
  %v1960 = vmul.f32 %v820, %v1958
  %v1961 = vmul.f32 %v826, %v1829
  %v1962 = vadd.f32 %v1960, %v1961
  %v1965 = vunpack.c.l.s4 1983009808
  %v1966 = vunpack.c.0.s8 %v1965
  %v1967 = vlaneseq
  %v1968 = vshrl.u32 %v1967, 7
  %v1969 = vsub.s32 %v1966, %v1968
  %v1970 = vrot.slane %v1962, %v1969
  %1971 = vrot.lane.b32.xlu0 %v1970, 96
  %v1972 = vpop.permute.xlu0 %1971
  %vm1974 = vcmask 911104
  %1975 = vst.msk [vmem:[%s6] sm:$0x3] %vm1974, %v1972
  %1976 = vst.msk [vmem:[%s6 + $0x2] sm:$0x3] %vm413, %v1962
  %v1978 = vrot.slane %v1429, 2
  %v1980 = vsel %vm174, %v1424, %v1978
  %v1981 = vsel %vm187, %v1962, 0
  %1983 = vmatprep.subr.mxu0 0.0
  %1984 = vmatpush1.msra.mxu0 0.0
  %1985 = vmatprep.subr.mxu0 0.0
  %1986 = vmatpush1.msra.mxu0 0.0
  %1987 = vmatprep.subr.mxu0 0.0
  %1988 = vmatpush1.msra.mxu0 0.0
  %1989 = vmatprep.subr.mxu0 0.0
  %1990 = vmatpush1.msra.mxu0 0.0
  %1991 = vmatprep.subr.mxu0 0.0
  %1992 = vmatpush1.msra.mxu0 0.0
  %1993 = vmatprep.subr.mxu0 0.0
  %1994 = vmatpush1.msra.mxu0 0.0
  %1995 = vmatprep.subr.mxu0 0.0
  %1996 = vmatpush1.msra.mxu0 0.0
  %1997 = vmatprep.subr.mxu0 0.0
  %1998 = vmatpush1.msra.mxu0 0.0
  %1999 = vmatprep.subr.mxu0 0.0
  %2000 = vmatpush1.msra.mxu0 0.0
  %2001 = vmatprep.subr.mxu0 0.0
  %2002 = vmatpush1.msra.mxu0 0.0
  %2003 = vmatprep.subr.mxu0 0.0
  %2004 = vmatpush1.msra.mxu0 0.0
  %2005 = vmatprep.subr.mxu0 0.0
  %2006 = vmatpush1.msra.mxu0 0.0
  %2007 = vmatprep.subr.mxu0 0.0
  %2008 = vmatpush1.msra.mxu0 %v1436
  %2009 = vmatprep.subr.mxu0 0.0
  %2010 = vmatpush1.msra.mxu0 %v1435
  %2011 = vmatprep.subr.mxu0 0.0
  %2012 = vmatpush1.msra.mxu0 %v1434
  %2013 = vmatprep.subr.mxu0 0.0
  %2014 = vmatpush1.msra.mxu0 %v1433
  %2015 = vmatprep.subr.mxu0 0.0
  %2016 = vmatpush2.msra.mxu0 0.0
  %2017 = vmatprep.subr.mxu0 0.0
  %2018 = vmatpush2.msra.mxu0 0.0
  %2019 = vmatprep.subr.mxu0 0.0
  %2020 = vmatpush2.msra.mxu0 0.0
  %2021 = vmatprep.subr.mxu0 0.0
  %2022 = vmatpush2.msra.mxu0 0.0
  %2023 = vmatprep.subr.mxu0 0.0
  %2024 = vmatpush2.msra.mxu0 0.0
  %2025 = vmatprep.subr.mxu0 0.0
  %2026 = vmatpush2.msra.mxu0 0.0
  %2027 = vmatprep.subr.mxu0 0.0
  %2028 = vmatpush2.msra.mxu0 0.0
  %2029 = vmatprep.subr.mxu0 0.0
  %2030 = vmatpush2.msra.mxu0 0.0
  %2031 = vmatprep.subr.mxu0 0.0
  %2032 = vmatpush2.msra.mxu0 0.0
  %2033 = vmatprep.subr.mxu0 0.0
  %2034 = vmatpush2.msra.mxu0 0.0
  %2035 = vmatprep.subr.mxu0 0.0
  %2036 = vmatpush2.msra.mxu0 0.0
  %2037 = vmatprep.subr.mxu0 0.0
  %2038 = vmatpush2.msra.mxu0 0.0
  %2039 = vmatprep.subr.mxu0 0.0
  %2040 = vmatpush2.msra.mxu0 0.0
  %2041 = vmatprep.subr.mxu0 0.0
  %2042 = vmatpush2.msra.mxu0 0.0
  %2043 = vmatprep.subr.mxu0 0.0
  %2044 = vmatpush2.msra.mxu0 0.0
  %2045 = vmatprep.subr.mxu0 0.0
  %2046 = vmatpush2.msra.mxu0 0.0
  %2047 = vmatprep.mubr.f32.mxu0 0.0
  %2048 = vmatmul.mubr.f32.gmra.mxu0 %v1981
  %v2049 = vpop.f32.mrf.mxu0
  %v2050 = vadd.f32 0.0, %v2049
  %v2051 = vpop.f32.mrf.mxu0
  %2052 = vdwg.mxu0
  %v2054 = vrot.slane %v2050, 2
  %v2056 = vadd.f32 %v1980, %v2054
  %v2057 = vxor.u32 %v2056, 2147483648
  %v2058 = vmul.f32 %v2057, 1.442695
  %v2059 = vpow.pop %v2058
  %v2060 = vadd.f32 %v2059, 1.0
  %v2061 = vrcp.pop %v2060
  %v2062 = vmul.f32 1.0, %v2061
  %v2063 = vtanh.pop %v2056
  %v2065 = vrot.slane %v1955, 2
  %2066 = vrot.lane.b32.xlu0 %v2065, 32
  %v2067 = vpop.permute.xlu0 %2066
  %v2069 = vmul.f32 %v2062, %v2067
  %2071 = vrot.lane.b32.xlu0 %v2063, 32
  %v2072 = vpop.permute.xlu0 %2071
  %v2074 = vmul.f32 %v2062, %v2072
  %2076 = vrot.lane.b32.xlu0 %v2074, 32
  %v2077 = vpop.permute.xlu0 %2076
  %v2079 = vadd.f32 %v2069, %v2077
  %v2080 = vtanh.pop %v2079
  %2082 = vrot.lane.b32.xlu0 %v2080, 32
  %v2083 = vpop.permute.xlu0 %2082
  %v2085 = vmul.f32 %v2062, %v2083
  %v2087 = vrot.slane %v2079, 6
  %2088 = vrot.lane.b32.xlu0 %v2087, 96
  %v2089 = vpop.permute.xlu0 %2088
  %v2091 = vmul.f32 %v948, %v2089
  %v2092 = vmul.f32 %v955, %v1955
  %v2093 = vadd.f32 %v2091, %v2092
  %v2095 = vrot.slane %v2085, 6
  %2096 = vrot.lane.b32.xlu0 %v2095, 64
  %v2097 = vpop.permute.xlu0 %2096
  %v2099 = vmul.f32 %v948, %v2097
  %v2100 = vmul.f32 %v955, %v1962
  %v2101 = vadd.f32 %v2099, %v2100
  %2102 = vst.msk [vmem:[%s6 + $0x2] sm:$0x3] %vm411, %v2101
  %v2105 = vunpack.c.l.s4 1983009808
  %v2106 = vunpack.c.0.s8 %v2105
  %v2107 = vlaneseq
  %v2108 = vshrl.u32 %v2107, 7
  %v2109 = vsub.s32 %v2106, %v2108
  %v2110 = vrot.slane %v2101, %v2109
  %2111 = vrot.lane.b32.xlu0 %v2110, 96
  %v2112 = vpop.permute.xlu0 %2111
  %2114 = vst.msk [vmem:[%s6] sm:$0x3] %vm1565, %v2112
  %v2115 = vrot.slane %v1429, 6
  %v2117 = vsel %vm174, %v1424, %v2115
  %v2118 = vsel %vm187, %v2101, 0
  %2120 = vmatprep.subr.mxu0 0.0
  %2121 = vmatpush1.msra.mxu0 0.0
  %2122 = vmatprep.subr.mxu0 0.0
  %2123 = vmatpush1.msra.mxu0 0.0
  %2124 = vmatprep.subr.mxu0 0.0
  %2125 = vmatpush1.msra.mxu0 0.0
  %2126 = vmatprep.subr.mxu0 0.0
  %2127 = vmatpush1.msra.mxu0 0.0
  %2128 = vmatprep.subr.mxu0 0.0
  %2129 = vmatpush1.msra.mxu0 0.0
  %2130 = vmatprep.subr.mxu0 0.0
  %2131 = vmatpush1.msra.mxu0 0.0
  %2132 = vmatprep.subr.mxu0 0.0
  %2133 = vmatpush1.msra.mxu0 0.0
  %2134 = vmatprep.subr.mxu0 0.0
  %2135 = vmatpush1.msra.mxu0 0.0
  %2136 = vmatprep.subr.mxu0 0.0
  %2137 = vmatpush1.msra.mxu0 0.0
  %2138 = vmatprep.subr.mxu0 0.0
  %2139 = vmatpush1.msra.mxu0 0.0
  %2140 = vmatprep.subr.mxu0 0.0
  %2141 = vmatpush1.msra.mxu0 0.0
  %2142 = vmatprep.subr.mxu0 0.0
  %2143 = vmatpush1.msra.mxu0 0.0
  %2144 = vmatprep.subr.mxu0 0.0
  %2145 = vmatpush1.msra.mxu0 %v1436
  %2146 = vmatprep.subr.mxu0 0.0
  %2147 = vmatpush1.msra.mxu0 %v1435
  %2148 = vmatprep.subr.mxu0 0.0
  %2149 = vmatpush1.msra.mxu0 %v1434
  %2150 = vmatprep.subr.mxu0 0.0
  %2151 = vmatpush1.msra.mxu0 %v1433
  %2152 = vmatprep.subr.mxu0 0.0
  %2153 = vmatpush2.msra.mxu0 0.0
  %2154 = vmatprep.subr.mxu0 0.0
  %2155 = vmatpush2.msra.mxu0 0.0
  %2156 = vmatprep.subr.mxu0 0.0
  %2157 = vmatpush2.msra.mxu0 0.0
  %2158 = vmatprep.subr.mxu0 0.0
  %2159 = vmatpush2.msra.mxu0 0.0
  %2160 = vmatprep.subr.mxu0 0.0
  %2161 = vmatpush2.msra.mxu0 0.0
  %2162 = vmatprep.subr.mxu0 0.0
  %2163 = vmatpush2.msra.mxu0 0.0
  %2164 = vmatprep.subr.mxu0 0.0
  %2165 = vmatpush2.msra.mxu0 0.0
  %2166 = vmatprep.subr.mxu0 0.0
  %2167 = vmatpush2.msra.mxu0 0.0
  %2168 = vmatprep.subr.mxu0 0.0
  %2169 = vmatpush2.msra.mxu0 0.0
  %2170 = vmatprep.subr.mxu0 0.0
  %2171 = vmatpush2.msra.mxu0 0.0
  %2172 = vmatprep.subr.mxu0 0.0
  %2173 = vmatpush2.msra.mxu0 0.0
  %2174 = vmatprep.subr.mxu0 0.0
  %2175 = vmatpush2.msra.mxu0 0.0
  %2176 = vmatprep.subr.mxu0 0.0
  %2177 = vmatpush2.msra.mxu0 0.0
  %2178 = vmatprep.subr.mxu0 0.0
  %2179 = vmatpush2.msra.mxu0 0.0
  %2180 = vmatprep.subr.mxu0 0.0
  %2181 = vmatpush2.msra.mxu0 0.0
  %2182 = vmatprep.subr.mxu0 0.0
  %2183 = vmatpush2.msra.mxu0 0.0
  %2184 = vmatprep.mubr.f32.mxu0 0.0
  %2185 = vmatmul.mubr.f32.gmra.mxu0 %v2118
  %v2186 = vpop.f32.mrf.mxu0
  %v2187 = vadd.f32 0.0, %v2186
  %v2188 = vpop.f32.mrf.mxu0
  %2189 = vdwg.mxu0
  %v2191 = vrot.slane %v2187, 4
  %v2193 = vadd.f32 %v2117, %v2191
  %v2194 = vxor.u32 %v2193, 2147483648
  %v2195 = vmul.f32 %v2194, 1.442695
  %v2196 = vpow.pop %v2195
  %v2197 = vadd.f32 %v2196, 1.0
  %v2198 = vrcp.pop %v2197
  %v2199 = vmul.f32 1.0, %v2198
  %v2200 = vtanh.pop %v2193
  %v2202 = vrot.slane %v2093, 4
  %2203 = vrot.lane.b32.xlu0 %v2202, 32
  %v2204 = vpop.permute.xlu0 %2203
  %v2206 = vmul.f32 %v2199, %v2204
  %2208 = vrot.lane.b32.xlu0 %v2200, 32
  %v2209 = vpop.permute.xlu0 %2208
  %v2211 = vmul.f32 %v2199, %v2209
  %2213 = vrot.lane.b32.xlu0 %v2211, 32
  %v2214 = vpop.permute.xlu0 %2213
  %v2216 = vadd.f32 %v2206, %v2214
  %v2217 = vtanh.pop %v2216
  %2219 = vrot.lane.b32.xlu0 %v2217, 32
  %v2220 = vpop.permute.xlu0 %2219
  %v2222 = vmul.f32 %v2199, %v2220
  %v2224 = vrot.slane %v2216, 4
  %2225 = vrot.lane.b32.xlu0 %v2224, 96
  %v2226 = vpop.permute.xlu0 %2225
  %v2228 = vmul.f32 %v1077, %v2226
  %v2229 = vmul.f32 %v1084, %v2093
  %v2230 = vadd.f32 %v2228, %v2229
  %v2232 = vrot.slane %v2222, 4
  %2233 = vrot.lane.b32.xlu0 %v2232, 64
  %v2234 = vpop.permute.xlu0 %2233
  %v2236 = vmul.f32 %v1077, %v2234
  %v2237 = vmul.f32 %v1084, %v2101
  %v2238 = vadd.f32 %v2236, %v2237
  %v2241 = vunpack.c.l.s4 1983009808
  %v2242 = vunpack.c.0.s8 %v2241
  %v2243 = vlaneseq
  %v2244 = vshrl.u32 %v2243, 7
  %v2245 = vsub.s32 %v2242, %v2244
  %v2246 = vrot.slane %v2238, %v2245
  %2247 = vrot.lane.b32.xlu0 %v2246, 32
  %v2248 = vpop.permute.xlu0 %2247
  %2250 = vst.msk [vmem:[%s6 + $0x2] sm:$0x3] %vm1702, %v2248
  %2251 = vrot.lane.b32.xlu0 %v2246, 64
  %v2252 = vpop.permute.xlu0 %2251
  %2254 = vst.msk [vmem:[%s6] sm:$0x3] %vm1707, %v2252
  %v2255 = vsel %vm187, %v2238, 0
  %2257 = vmatprep.subr.mxu0 0.0
  %2258 = vmatpush1.msra.mxu0 0.0
  %2259 = vmatprep.subr.mxu0 0.0
  %2260 = vmatpush1.msra.mxu0 0.0
  %2261 = vmatprep.subr.mxu0 0.0
  %2262 = vmatpush1.msra.mxu0 0.0
  %2263 = vmatprep.subr.mxu0 0.0
  %2264 = vmatpush1.msra.mxu0 0.0
  %2265 = vmatprep.subr.mxu0 0.0
  %2266 = vmatpush1.msra.mxu0 0.0
  %2267 = vmatprep.subr.mxu0 0.0
  %2268 = vmatpush1.msra.mxu0 0.0
  %2269 = vmatprep.subr.mxu0 0.0
  %2270 = vmatpush1.msra.mxu0 0.0
  %2271 = vmatprep.subr.mxu0 0.0
  %2272 = vmatpush1.msra.mxu0 0.0
  %2273 = vmatprep.subr.mxu0 0.0
  %2274 = vmatpush1.msra.mxu0 0.0
  %2275 = vmatprep.subr.mxu0 0.0
  %2276 = vmatpush1.msra.mxu0 0.0
  %2277 = vmatprep.subr.mxu0 0.0
  %2278 = vmatpush1.msra.mxu0 0.0
  %2279 = vmatprep.subr.mxu0 0.0
  %2280 = vmatpush1.msra.mxu0 0.0
  %2281 = vmatprep.subr.mxu0 0.0
  %2282 = vmatpush1.msra.mxu0 %v1436
  %2283 = vmatprep.subr.mxu0 0.0
  %2284 = vmatpush1.msra.mxu0 %v1435
  %2285 = vmatprep.subr.mxu0 0.0
  %2286 = vmatpush1.msra.mxu0 %v1434
  %2287 = vmatprep.subr.mxu0 0.0
  %2288 = vmatpush1.msra.mxu0 %v1433
  %2289 = vmatprep.subr.mxu0 0.0
  %2290 = vmatpush2.msra.mxu0 0.0
  %2291 = vmatprep.subr.mxu0 0.0
  %2292 = vmatpush2.msra.mxu0 0.0
  %2293 = vmatprep.subr.mxu0 0.0
  %2294 = vmatpush2.msra.mxu0 0.0
  %2295 = vmatprep.subr.mxu0 0.0
  %2296 = vmatpush2.msra.mxu0 0.0
  %2297 = vmatprep.subr.mxu0 0.0
  %2298 = vmatpush2.msra.mxu0 0.0
  %2299 = vmatprep.subr.mxu0 0.0
  %2300 = vmatpush2.msra.mxu0 0.0
  %2301 = vmatprep.subr.mxu0 0.0
  %2302 = vmatpush2.msra.mxu0 0.0
  %2303 = vmatprep.subr.mxu0 0.0
  %2304 = vmatpush2.msra.mxu0 0.0
  %2305 = vmatprep.subr.mxu0 0.0
  %2306 = vmatpush2.msra.mxu0 0.0
  %2307 = vmatprep.subr.mxu0 0.0
  %2308 = vmatpush2.msra.mxu0 0.0
  %2309 = vmatprep.subr.mxu0 0.0
  %2310 = vmatpush2.msra.mxu0 0.0
  %2311 = vmatprep.subr.mxu0 0.0
  %2312 = vmatpush2.msra.mxu0 0.0
  %2313 = vmatprep.subr.mxu0 0.0
  %2314 = vmatpush2.msra.mxu0 0.0
  %2315 = vmatprep.subr.mxu0 0.0
  %2316 = vmatpush2.msra.mxu0 0.0
  %2317 = vmatprep.subr.mxu0 0.0
  %2318 = vmatpush2.msra.mxu0 0.0
  %2319 = vmatprep.subr.mxu0 0.0
  %2320 = vmatpush2.msra.mxu0 0.0
  %2321 = vmatprep.mubr.f32.mxu0 0.0
  %2322 = vmatmul.mubr.f32.gmra.mxu0 %v2255
  %v2323 = vpop.f32.mrf.mxu0
  %v2324 = vadd.f32 0.0, %v2323
  %v2325 = vpop.f32.mrf.mxu0
  %2326 = vdwg.mxu0
  %v2328 = vrot.slane %v2324, 6
  %v2330 = vadd.f32 %v1980, %v2328
  %v2331 = vxor.u32 %v2330, 2147483648
  %v2332 = vmul.f32 %v2331, 1.442695
  %v2333 = vpow.pop %v2332
  %v2334 = vadd.f32 %v2333, 1.0
  %v2335 = vrcp.pop %v2334
  %v2336 = vmul.f32 1.0, %v2335
  %v2337 = vtanh.pop %v2330
  %v2339 = vrot.slane %v2230, 6
  %2340 = vrot.lane.b32.xlu0 %v2339, 32
  %v2341 = vpop.permute.xlu0 %2340
  %v2343 = vmul.f32 %v2336, %v2341
  %2345 = vrot.lane.b32.xlu0 %v2337, 32
  %v2346 = vpop.permute.xlu0 %2345
  %v2348 = vmul.f32 %v2336, %v2346
  %2350 = vrot.lane.b32.xlu0 %v2348, 32
  %v2351 = vpop.permute.xlu0 %2350
  %v2353 = vadd.f32 %v2343, %v2351
  %v2354 = vtanh.pop %v2353
  %2356 = vrot.lane.b32.xlu0 %v2354, 32
  %v2357 = vpop.permute.xlu0 %2356
  %v2359 = vmul.f32 %v2336, %v2357
  %v2361 = vrot.slane %v2353, 2
  %2362 = vrot.lane.b32.xlu0 %v2361, 96
  %v2363 = vpop.permute.xlu0 %2362
  %v2365 = vmul.f32 %v1203, %v2363
  %v2366 = vmul.f32 %v1210, %v2230
  %v2367 = vadd.f32 %v2365, %v2366
  %v2369 = vrot.slane %v2359, 2
  %2370 = vrot.lane.b32.xlu0 %v2369, 64
  %v2371 = vpop.permute.xlu0 %2370
  %v2373 = vmul.f32 %v1203, %v2371
  %v2374 = vmul.f32 %v1210, %v2238
  %v2375 = vadd.f32 %v2373, %v2374
  %v2378 = vunpack.c.l.s4 1983009808
  %v2379 = vunpack.c.0.s8 %v2378
  %v2380 = vlaneseq
  %v2381 = vshrl.u32 %v2380, 7
  %v2382 = vsub.s32 %v2379, %v2381
  %v2383 = vrot.slane %v2375, %v2382
  %2384 = vrot.lane.b32.xlu0 %v2383, 64
  %v2385 = vpop.permute.xlu0 %2384
  %2387 = vst.msk [vmem:[%s6 + $0x2] sm:$0x3] %vm1841, %v2385
  %2388 = vrot.lane.b32.xlu0 %v2383, 32
  %v2389 = vpop.permute.xlu0 %2388
  %2391 = vst.msk [vmem:[%s6] sm:$0x3] %vm1846, %v2389
  %v2392 = vsel %vm187, %v2375, 0
  %2394 = vmatprep.subr.mxu0 0.0
  %2395 = vmatpush1.msra.mxu0 0.0
  %2396 = vmatprep.subr.mxu0 0.0
  %2397 = vmatpush1.msra.mxu0 0.0
  %2398 = vmatprep.subr.mxu0 0.0
  %2399 = vmatpush1.msra.mxu0 0.0
  %2400 = vmatprep.subr.mxu0 0.0
  %2401 = vmatpush1.msra.mxu0 0.0
  %2402 = vmatprep.subr.mxu0 0.0
  %2403 = vmatpush1.msra.mxu0 0.0
  %2404 = vmatprep.subr.mxu0 0.0
  %2405 = vmatpush1.msra.mxu0 0.0
  %2406 = vmatprep.subr.mxu0 0.0
  %2407 = vmatpush1.msra.mxu0 0.0
  %2408 = vmatprep.subr.mxu0 0.0
  %2409 = vmatpush1.msra.mxu0 0.0
  %2410 = vmatprep.subr.mxu0 0.0
  %2411 = vmatpush1.msra.mxu0 0.0
  %2412 = vmatprep.subr.mxu0 0.0
  %2413 = vmatpush1.msra.mxu0 0.0
  %2414 = vmatprep.subr.mxu0 0.0
  %2415 = vmatpush1.msra.mxu0 0.0
  %2416 = vmatprep.subr.mxu0 0.0
  %2417 = vmatpush1.msra.mxu0 0.0
  %2418 = vmatprep.subr.mxu0 0.0
  %2419 = vmatpush1.msra.mxu0 %v1436
  %2420 = vmatprep.subr.mxu0 0.0
  %2421 = vmatpush1.msra.mxu0 %v1435
  %2422 = vmatprep.subr.mxu0 0.0
  %2423 = vmatpush1.msra.mxu0 %v1434
  %2424 = vmatprep.subr.mxu0 0.0
  %2425 = vmatpush1.msra.mxu0 %v1433
  %2426 = vmatprep.subr.mxu0 0.0
  %2427 = vmatpush2.msra.mxu0 0.0
  %2428 = vmatprep.subr.mxu0 0.0
  %2429 = vmatpush2.msra.mxu0 0.0
  %2430 = vmatprep.subr.mxu0 0.0
  %2431 = vmatpush2.msra.mxu0 0.0
  %2432 = vmatprep.subr.mxu0 0.0
  %2433 = vmatpush2.msra.mxu0 0.0
  %2434 = vmatprep.subr.mxu0 0.0
  %2435 = vmatpush2.msra.mxu0 0.0
  %2436 = vmatprep.subr.mxu0 0.0
  %2437 = vmatpush2.msra.mxu0 0.0
  %2438 = vmatprep.subr.mxu0 0.0
  %2439 = vmatpush2.msra.mxu0 0.0
  %2440 = vmatprep.subr.mxu0 0.0
  %2441 = vmatpush2.msra.mxu0 0.0
  %2442 = vmatprep.subr.mxu0 0.0
  %2443 = vmatpush2.msra.mxu0 0.0
  %2444 = vmatprep.subr.mxu0 0.0
  %2445 = vmatpush2.msra.mxu0 0.0
  %2446 = vmatprep.subr.mxu0 0.0
  %2447 = vmatpush2.msra.mxu0 0.0
  %2448 = vmatprep.subr.mxu0 0.0
  %2449 = vmatpush2.msra.mxu0 0.0
  %2450 = vmatprep.subr.mxu0 0.0
  %2451 = vmatpush2.msra.mxu0 0.0
  %2452 = vmatprep.subr.mxu0 0.0
  %2453 = vmatpush2.msra.mxu0 0.0
  %2454 = vmatprep.subr.mxu0 0.0
  %2455 = vmatpush2.msra.mxu0 0.0
  %2456 = vmatprep.subr.mxu0 0.0
  %2457 = vmatpush2.msra.mxu0 0.0
  %2458 = vmatprep.mubr.f32.mxu0 0.0
  %2459 = vmatmul.mubr.f32.gmra.mxu0 %v2392
  %v2460 = vpop.f32.mrf.mxu0
  %v2461 = vadd.f32 0.0, %v2460
  %v2462 = vpop.f32.mrf.mxu0
  %2463 = vdwg.mxu0
  %v2464 = vadd.f32 %v2117, %v2461
  %v2465 = vxor.u32 %v2464, 2147483648
  %v2466 = vmul.f32 %v2465, 1.442695
  %v2467 = vpow.pop %v2466
  %v2468 = vadd.f32 %v2467, 1.0
  %v2469 = vrcp.pop %v2468
  %v2470 = vmul.f32 1.0, %v2469
  %v2471 = vtanh.pop %v2464
  %2473 = vrot.lane.b32.xlu0 %v2367, 32
  %v2474 = vpop.permute.xlu0 %2473
  %v2476 = vmul.f32 %v2470, %v2474
  %2478 = vrot.lane.b32.xlu0 %v2471, 32
  %v2479 = vpop.permute.xlu0 %2478
  %v2481 = vmul.f32 %v2470, %v2479
  %2483 = vrot.lane.b32.xlu0 %v2481, 32
  %v2484 = vpop.permute.xlu0 %2483
  %v2486 = vadd.f32 %v2476, %v2484
  %v2487 = vtanh.pop %v2486
  %2489 = vrot.lane.b32.xlu0 %v2487, 32
  %v2490 = vpop.permute.xlu0 %2489
  %v2492 = vmul.f32 %v2470, %v2490
  %2494 = vrot.lane.b32.xlu0 %v2492, 64
  %v2495 = vpop.permute.xlu0 %2494
  %v2497 = vmul.f32 %v1325, %v2495
  %v2498 = vmul.f32 %v1331, %v2375
  %v2499 = vadd.f32 %v2497, %v2498
  %v2502 = vunpack.c.l.s4 1983009808
  %v2503 = vunpack.c.0.s8 %v2502
  %v2504 = vlaneseq
  %v2505 = vshrl.u32 %v2504, 7
  %v2506 = vsub.s32 %v2503, %v2505
  %v2507 = vrot.slane %v2499, %v2506
  %2508 = vrot.lane.b32.xlu0 %v2507, 96
  %v2509 = vpop.permute.xlu0 %2508
  %2511 = vst.msk [vmem:[%s6 + $0x2] sm:$0x3] %vm1974, %v2509
  %2512 = vst.msk [vmem:[%s6] sm:$0x3] %vm413, %v2499
  %v2513 = vadd.s32 %v26, 128
  %v2514 = vmul.u32 %v172, 32
  %2515 = vset.pattern.permute.xlu0 0
  %2516 = vperm.xlu0 %2515, %v2514
  %v2517 = vpop.permute.xlu0 %2516
  %vm2518 = vcmp.lt.s32.totalorder %v26, %v2517
  %vm2519 = vcmp.lt.s32.totalorder %v2513, %v2517
  %v2520 = vld [vmem:[%s6] sm:$0xf]
  %v2523 = vunpack.c.l.s4 1983009808
  %v2524 = vunpack.c.0.s8 %v2523
  %v2525 = vlaneseq
  %v2526 = vshrl.u32 %v2525, 7
  %v2527 = vsub.s32 %v2524, %v2526
  %v2528 = vrot.slane %v2520, %v2527
  %v2529 = vcombine.high %v2528, %v2528
  %v2532 = vsel %vm2518, %v2528, 0.0
  %v2533 = vsel %vm2519, %v2529, 0.0
  %v2536 = vcombine.low %v2532, %v2533
  %v2538 = vunpack.c.l.s4 1983009808
  %v2539 = vunpack.c.0.s8 %v2538
  %v2540 = vlaneseq
  %v2541 = vshrl.u32 %v2540, 7
  %v2542 = vsub.s32 %v2539, %v2541
  %v2543 = vrot.slane %v2536, %v2542
  %2545 = vst [vmem:[%s6] sm:$0xf] %v2543
  // Predicated region
  $region26: #{root_sentence_encoder.1} parent=0 // pred_check
    _
  $region27: #{root_sentence_encoder.1} parent=0 // pred_check_branch
    %2547 = sbr.rel (0) target = $region29
  $region28: #{root_sentence_encoder.1} parent=0 // pred_region
    _
  $region29: #{root_sentence_encoder.1} parent=0 // pred_fallthru
    _
  // Predicated region
  $region30: #{root_sentence_encoder.1} parent=0 // pred_check
    _
  $region31: #{root_sentence_encoder.1} parent=0 // pred_check_branch
    %2549 = sbr.rel (0) target = $region33
  $region32: #{root_sentence_encoder.1} parent=0 // pred_region
    _
  $region33: #{root_sentence_encoder.1} parent=0 // pred_fallthru
    _

</llo_original>
